<compile_context>
chip_gen: v7x
topology: tpu7x:2x2x1
jax: 0.10.0
libtpu: 0.0.40
codegen_flags: <defaults>
</compile_context>

<pallas_src>
import functools

import jax
import jax.numpy as jnp
import numpy as np
from jax.experimental import pallas as pl
from jax.experimental.pallas import tpu as pltpu

# Keep the pure-JAX reference (and the one-time G = phi.T @ W precompute) at full f32
# accuracy; the in-kernel dots explicitly request single-pass bf16/DEFAULT precision.
jax.config.update("jax_default_matmul_precision", "highest")


def _softplus(x):
    # numerically stable log(1 + exp(x))
    return jnp.maximum(x, 0.0) + jnp.log1p(jnp.exp(-jnp.abs(x)))


def na_alista_kernel(y_ref, g_ref, w_ref, mat_ref, vec_ref,
                     xT_ref, gam_ref, the_ref):
    f32 = jnp.float32
    bf16 = jnp.bfloat16
    y = y_ref[...]                         # (B, m) f32
    B = y.shape[0]
    n = g_ref.shape[0]
    d = mat_ref.shape[0]
    k = gam_ref.shape[1]

    # ---- loop-invariant weight views (sliced/broadcast once, stay resident) ----
    w_hh = mat_ref[:, 0:4 * d]             # (d, 4d) bf16, gate rows [i,f,g,o], g block *2
    w_lll = mat_ref[:, 4 * d:5 * d]        # (d, d)  bf16
    w_lin = mat_ref[:, 5 * d:5 * d + 2]    # (d, 2)  bf16
    w_ih = vec_ref[0:1, :]                 # (1, 4d) f32 (g block pre-scaled by 2)
    b_g = vec_ref[1:2, :]                  # (1, 4d) f32 (b_ih + b_hh, g block * 2)
    b_lll = vec_ref[2:3, 0:d]              # (1, d)
    b_lin = vec_ref[3:4, 0:2]              # (1, 2)
    h = jnp.broadcast_to(vec_ref[4:5, 0:d], (B, d))     # get_initial(): hidden
    cs = jnp.broadcast_to(vec_ref[5:6, 0:d], (B, d))    # get_initial(): cellstate

    # yW = y @ W, computed ONCE (off the per-iteration chain) at full f32 accuracy so
    # the iteration-0 c (and the frozen normalizers derived from it) are exact.
    yW = jnp.dot(y, w_ref[...], preferred_element_type=f32,
                 precision=jax.lax.Precision.HIGHEST)               # (B, n)

    xT = jnp.zeros((B, n), f32)            # x.T, batch-major
    mean = None
    inv_std = None
    gammas = []
    thetas = []

    # k is small & static -> fully unrolled in-kernel loop; state (xT, h, cs) lives in
    # vregs, all weights stay resident in VMEM for the whole call.
    for i in range(k):
        if i == 0:
            cT = -yW                                                 # x == 0 on iter 0
        else:
            # Fused ALISTA operator: c.T = x.T @ (phi.T @ W) - y @ W  -> one MXU dot.
            cT = jnp.dot(xT.astype(bf16), g_ref[...],
                         preferred_element_type=f32,
                         precision=jax.lax.Precision.DEFAULT) - yW   # (B, n)

        cl1 = jnp.sum(jnp.abs(cT), axis=1, keepdims=True)            # (B, 1)

        if i == 0:
            # Normalizer frozen from the first iteration (the .item() caching path),
            # unbiased std (divisor B-1) like torch.std.  NOTE: B == 1 -> inf/NaN,
            # exactly as in torch.
            mean = jnp.sum(cl1, axis=0, keepdims=True) * (1.0 / B)   # (1, 1)
            var = jnp.sum((cl1 - mean) ** 2, axis=0,
                          keepdims=True) * (1.0 / (B - 1))
            inv_std = 1.0 / jnp.sqrt(var)                            # (1, 1)

        x_in = (cl1 - mean) * inv_std                                # (B, 1)

        # LSTMCell(1, d): fused gates in torch order [i, f, g, o]; g block was
        # pre-scaled by 2 so a single full-vreg sigmoid covers all 4d = 128 lanes and
        # tanh(a_g) = 2*sigmoid(2*a_g) - 1 is recovered on the VPU.
        gates = (x_in * w_ih
                 + jnp.dot(h.astype(bf16), w_hh, preferred_element_type=f32,
                           precision=jax.lax.Precision.DEFAULT)
                 + b_g)                                              # (B, 4d)
        s = jax.nn.sigmoid(gates)                                    # one EUP pass
        i_g = s[:, 0:d]
        f_g = s[:, d:2 * d]
        g_g = 2.0 * s[:, 2 * d:3 * d] - 1.0                          # == tanh(a_g)
        o_g = s[:, 3 * d:4 * d]
        cs = f_g * cs + i_g * g_g
        h = o_g * jnp.tanh(cs)

        # head: softplus(Linear(d,2)(relu(Linear(d,d)(cellstate))))
        t = jnp.maximum(
            jnp.dot(cs.astype(bf16), w_lll, preferred_element_type=f32,
                    precision=jax.lax.Precision.DEFAULT) + b_lll, 0.0)
        z = (jnp.dot(t.astype(bf16), w_lin, preferred_element_type=f32,
                     precision=jax.lax.Precision.DEFAULT) + b_lin)
        pred = _softplus(z)                                          # (B, 2)

        gamma = pred[:, 0:1]
        theta = pred[:, 1:2]
        gammas.append(gamma)
        thetas.append(theta)

        d_mat = xT - gamma * cT
        # soft_threshold_vector, p == 0 path:
        #   sign(d) * relu(|d| - theta) == relu(d - theta) - relu(-d - theta)
        # TODO(synk): p > 0 needs a per-column top-k over n; only the p == 0 path is
        # implemented in-kernel.
        xT = (jnp.maximum(d_mat - theta, 0.0)
              - jnp.maximum(-d_mat - theta, 0.0))

    # Single writeback of everything after the recurrence (no per-step masked stores).
    xT_ref[...] = xT
    gam_ref[...] = jnp.concatenate(gammas, axis=1)                   # (B, k)
    the_ref[...] = jnp.concatenate(thetas, axis=1)                   # (B, k)


def prepare_params(phi, W, params):
    """One-time layout prep (hoisted out of the per-call path).

    - G = phi.T @ W precomputed at f32 HIGHEST, stored bf16 (single-pass MXU operand).
    - LSTM gate weights kept in torch row order [i, f, g, o], with the g block
      pre-scaled by 2 so the kernel uses one sigmoid over all 4d lanes.
    - MXU-side matrices (w_hh, w_lll, w_lin) packed into one bf16 buffer, contraction
      dim d on the sublanes; VPU-side vectors packed into one f32 buffer.
    """
    f32, bf16 = jnp.float32, jnp.bfloat16
    phi = jnp.asarray(phi, f32)                       # (m, n)
    W_j = jnp.asarray(W, f32)                         # (m, n)
    d = int(params["w_hh"].shape[1])

    # Fused dictionary operator.
    G = jnp.dot(phi.T, W_j, precision=jax.lax.Precision.HIGHEST).astype(bf16)  # (n, n)

    scale = np.ones((4 * d, 1), np.float32)
    scale[2 * d:3 * d] = 2.0                          # g-gate block * 2 (tanh trick)
    w_ih = np.asarray(params["w_ih"], np.float32) * scale               # (4d, 1)
    w_hh = np.asarray(params["w_hh"], np.float32) * scale               # (4d, d)
    b_g = (np.asarray(params["b_ih"], np.float32)
           + np.asarray(params["b_hh"], np.float32)) * scale[:, 0]      # (4d,)

    w_lll = np.asarray(params["w_lll"], np.float32).T                   # (d, d)
    w_lin = np.asarray(params["w_lin"], np.float32).T                   # (d, 2)
    mat = jnp.asarray(np.concatenate([w_hh.T, w_lll, w_lin], axis=1), bf16)  # (d, 5d+2)

    def _row(v):
        r = np.zeros((1, 4 * d), np.float32)
        r[0, :v.shape[0]] = v
        return r

    vec = jnp.asarray(np.concatenate([
        _row(w_ih[:, 0]),                                  # row 0: w_ih (as (1, 4d))
        _row(b_g),                                         # row 1: fused gate bias
        _row(np.asarray(params["b_lll"], np.float32)),     # row 2: b_lll
        _row(np.asarray(params["b_lin"], np.float32)),     # row 3: b_lin
        _row(np.asarray(params["hidden"], np.float32)),    # row 4: initial hidden
        _row(np.asarray(params["cellstate"], np.float32)), # row 5: initial cellstate
    ], axis=0), f32)                                       # (6, 4d)

    return {"G": G, "W": W_j, "mat": mat, "vec": vec}


@functools.partial(jax.jit, static_argnames=("k",))
def na_alista_forward(y, prep, *, k):
    """y: (B, m). Returns (x.T (B, n), gammas (B, k), thetas (B, k))."""
    B, m = y.shape
    n = prep["G"].shape[0]
    d = prep["mat"].shape[0]

    vmem = pl.BlockSpec(memory_space=pltpu.MemorySpace.VMEM)

    flops = 2 * B * m * n + 2 * k * B * (n * n + 4 * d * d + d * d + 2 * d)
    transcendentals = k * B * (4 * d + d + 4)
    bytes_accessed = (4 * B * m + 2 * n * n + 4 * m * n + 2 * d * (5 * d + 2)
                      + 4 * 6 * 4 * d + 4 * B * n + 2 * 4 * B * k)

    out_shapes = (jax.ShapeDtypeStruct((B, n), jnp.float32),   # x.T, lane-dense (8,128)
                  jax.ShapeDtypeStruct((B, k), jnp.float32),   # gammas
                  jax.ShapeDtypeStruct((B, k), jnp.float32))   # thetas

    xT, gammas, thetas = pl.pallas_call(
        na_alista_kernel,
        out_shape=out_shapes,
        in_specs=[vmem] * 5,
        out_specs=(vmem, vmem, vmem),
        cost_estimate=pl.CostEstimate(flops=flops,
                                      transcendentals=transcendentals,
                                      bytes_accessed=bytes_accessed),
    )(y, prep["G"], prep["W"], prep["mat"], prep["vec"])
    return xT, gammas, thetas


def reference_forward(y, phi, W, params, k):
    """Pure-JAX mirror of NA_ALISTA.forward (NormLSTMC regressor, p == 0, first call)."""
    B = y.shape[0]
    n = phi.shape[1]
    d = params["w_hh"].shape[1]
    x = jnp.zeros((n, B), jnp.float32)
    hidden = jnp.broadcast_to(params["hidden"][None, :], (B, d))
    cellstate = jnp.broadcast_to(params["cellstate"][None, :], (B, d))
    cl1_mean = cl1_std = None
    gammas, thetas = [], []
    for _ in range(k):
        b = phi @ x - y.T                              # (m, B)
        c = W.T @ b                                    # (n, B)
        cl1 = jnp.sum(jnp.abs(c), axis=0)              # (B,)
        if cl1_mean is None:
            cl1_mean = jnp.mean(cl1)
            cl1_std = jnp.std(cl1, ddof=1)
        stack = ((cl1 - cl1_mean) / cl1_std)[:, None]  # (B, 1)
        gates = (stack @ params["w_ih"].T + params["b_ih"]
                 + hidden @ params["w_hh"].T + params["b_hh"])
        i_g = jax.nn.sigmoid(gates[:, 0:d])
        f_g = jax.nn.sigmoid(gates[:, d:2 * d])
        g_g = jnp.tanh(gates[:, 2 * d:3 * d])
        o_g = jax.nn.sigmoid(gates[:, 3 * d:4 * d])
        cellstate = f_g * cellstate + i_g * g_g
        hidden = o_g * jnp.tanh(cellstate)
        t = jnp.maximum(cellstate @ params["w_lll"].T + params["b_lll"], 0.0)
        pred = jax.nn.softplus(t @ params["w_lin"].T + params["b_lin"])
        gamma, theta = pred[:, :1], pred[:, 1:]
        gammas.append(gamma)
        thetas.append(theta)
        dd = x - (gamma * c.T).T
        x = jnp.sign(dd) * jnp.maximum((jnp.abs(dd).T - theta).T, 0.0)
    return x.T, jnp.concatenate(gammas, axis=1), jnp.concatenate(thetas, axis=1)


if __name__ == "__main__":
    # Small shapes consistent with the module: measurements m=64, signal dim n=128,
    # k=8 ALISTA iterations, batch B=8, LSTM hidden dim=32.
    m, n, k, B, dim = 64, 128, 8, 8, 32

    key = jax.random.PRNGKey(0)
    ks = jax.random.split(key, 14)

    # phi with orthonormal rows (keeps the untrained ALISTA iteration well-behaved),
    # W = phi + small perturbation (so a phi/W swap in the kernel would be caught).
    g = jax.random.normal(ks[0], (n, m), jnp.float32)
    q, _ = np.linalg.qr(np.asarray(g))                 # (n, m), orthonormal columns
    phi = jnp.asarray(q.T, jnp.float32)                # (m, n), orthonormal rows
    W = phi + 0.01 * jax.random.normal(ks[1], (m, n), jnp.float32)

    params = {
        "w_ih":  0.1 * jax.random.normal(ks[2], (4 * dim, 1), jnp.float32),    # LSTMCell weight_ih
        "w_hh":  0.1 * jax.random.normal(ks[3], (4 * dim, dim), jnp.float32),  # LSTMCell weight_hh
        "b_ih":  0.1 * jax.random.normal(ks[4], (4 * dim,), jnp.float32),
        "b_hh":  0.1 * jax.random.normal(ks[5], (4 * dim,), jnp.float32),
        "w_lll": 0.1 * jax.random.normal(ks[6], (dim, dim), jnp.float32),      # lll
        "b_lll": 0.1 * jax.random.normal(ks[7], (dim,), jnp.float32),
        "w_lin": 0.1 * jax.random.normal(ks[8], (2, dim), jnp.float32),        # linear
        "b_lin": 0.1 * jax.random.normal(ks[9], (2,), jnp.float32),
        "hidden":    jax.random.normal(ks[10], (dim,), jnp.float32),           # self.hidden
        "cellstate": jax.random.normal(ks[11], (dim,), jnp.float32),           # self.cellstate
    }
    y = jax.random.normal(ks[12], (B, m), jnp.float32)

    # One-time layout prep (no per-call transposes / gate reordering).
    prep = prepare_params(phi, W, params)

    xT, gammas, thetas = na_alista_forward(y, prep, k=k)
    jax.block_until_ready((xT, gammas, thetas))

    xT_r, g_r, t_r = reference_forward(y, phi, W, params, k)
    # In-kernel matmuls run single-pass bf16 (f32 accumulate); tolerances account for
    # that while the reference stays at f32 'highest'.
    np.testing.assert_allclose(np.asarray(xT), np.asarray(xT_r), rtol=3e-2, atol=1e-2)
    np.testing.assert_allclose(np.asarray(gammas), np.asarray(g_r), rtol=3e-2, atol=1e-2)
    np.testing.assert_allclose(np.asarray(thetas), np.asarray(t_r), rtol=3e-2, atol=1e-2)

    print("KERNEL_OK")
</pallas_src>

<mosaic_0001>
module attributes {stable_mosaic.version = 11 : i64} {
  func.func @na_alista_kernel(%arg0: memref<8x64xf32, #tpu.memory_space<vmem>>, %arg1: memref<128x128xbf16, #tpu.memory_space<vmem>>, %arg2: memref<64x128xf32, #tpu.memory_space<vmem>>, %arg3: memref<32x162xbf16, #tpu.memory_space<vmem>>, %arg4: memref<6x128xf32, #tpu.memory_space<vmem>>, %arg5: memref<8x128xf32, #tpu.memory_space<vmem>>, %arg6: memref<8x8xf32, #tpu.memory_space<vmem>>, %arg7: memref<8x8xf32, #tpu.memory_space<vmem>>) attributes {dimension_semantics = [], scalar_prefetch = 0 : i64, scratch_operands = 0 : i64, tpu.core_type = #tpu.core_type<tc>} {
    %c0 = arith.constant 0 : index
    %c0_0 = arith.constant 0 : index
    %0 = vector.load %arg0[%c0, %c0_0] : memref<8x64xf32, #tpu.memory_space<vmem>>, vector<8x64xf32>
    %c0_1 = arith.constant 0 : index
    %c0_2 = arith.constant 0 : index
    %1 = vector.load %arg3[%c0_1, %c0_2] : memref<32x162xbf16, #tpu.memory_space<vmem>>, vector<32x128xbf16>
    %c0_3 = arith.constant 0 : index
    %c128 = arith.constant 128 : index
    %2 = vector.load %arg3[%c0_3, %c128] : memref<32x162xbf16, #tpu.memory_space<vmem>>, vector<32x32xbf16>
    %c0_4 = arith.constant 0 : index
    %c160 = arith.constant 160 : index
    %3 = vector.load %arg3[%c0_4, %c160] : memref<32x162xbf16, #tpu.memory_space<vmem>>, vector<32x2xbf16>
    %c0_5 = arith.constant 0 : index
    %c0_6 = arith.constant 0 : index
    %4 = vector.load %arg4[%c0_5, %c0_6] : memref<6x128xf32, #tpu.memory_space<vmem>>, vector<1x128xf32>
    %c1 = arith.constant 1 : index
    %c0_7 = arith.constant 0 : index
    %5 = vector.load %arg4[%c1, %c0_7] : memref<6x128xf32, #tpu.memory_space<vmem>>, vector<1x128xf32>
    %c2 = arith.constant 2 : index
    %c0_8 = arith.constant 0 : index
    %6 = vector.load %arg4[%c2, %c0_8] : memref<6x128xf32, #tpu.memory_space<vmem>>, vector<1x32xf32>
    %c3 = arith.constant 3 : index
    %c0_9 = arith.constant 0 : index
    %7 = vector.load %arg4[%c3, %c0_9] : memref<6x128xf32, #tpu.memory_space<vmem>>, vector<1x2xf32>
    %c4 = arith.constant 4 : index
    %c0_10 = arith.constant 0 : index
    %8 = vector.load %arg4[%c4, %c0_10] : memref<6x128xf32, #tpu.memory_space<vmem>>, vector<1x32xf32>
    %9 = vector.shape_cast %8 : vector<1x32xf32> to vector<1x32xf32>
    %10 = vector.broadcast %9 : vector<1x32xf32> to vector<8x32xf32>
    %c5 = arith.constant 5 : index
    %c0_11 = arith.constant 0 : index
    %11 = vector.load %arg4[%c5, %c0_11] : memref<6x128xf32, #tpu.memory_space<vmem>>, vector<1x32xf32>
    %12 = vector.shape_cast %11 : vector<1x32xf32> to vector<1x32xf32>
    %13 = vector.broadcast %12 : vector<1x32xf32> to vector<8x32xf32>
    %c0_12 = arith.constant 0 : index
    %c0_13 = arith.constant 0 : index
    %14 = vector.load %arg2[%c0_12, %c0_13] : memref<64x128xf32, #tpu.memory_space<vmem>>, vector<64x128xf32>
    %cst = arith.constant dense<0.000000e+00> : vector<8x128xf32>
    %15 = tpu.matmul %0, %14, %cst {dimension_numbers = #tpu.dot_dimension_numbers<[1], [0], [0], [1], [0, 0, 1, 1], [], []>, precision = #tpu.contract_precision<fp32>} : vector<8x64xf32>, vector<64x128xf32>, vector<8x128xf32> -> vector<8x128xf32>
    %cst_14 = arith.constant 0.000000e+00 : f32
    %16 = vector.broadcast %cst_14 : f32 to vector<8x128xf32>
    %cst_15 = arith.constant 0.000000e+00 : f32
    %17 = vector.broadcast %cst_15 : f32 to vector<8x128xf32>
    %18 = arith.subf %17, %15 : vector<8x128xf32>
    %19 = math.absf %18 : vector<8x128xf32>
    %cst_16 = arith.constant dense<0.000000e+00> : vector<8xf32>
    %20 = vector.multi_reduction <add>, %19, %cst_16 [1] : vector<8x128xf32> to vector<8xf32>
    %21 = vector.shape_cast %20 : vector<8xf32> to vector<8x1xf32>
    %cst_17 = arith.constant dense<0.000000e+00> : vector<1xf32>
    %22 = vector.multi_reduction <add>, %21, %cst_17 [0] : vector<8x1xf32> to vector<1xf32>
    %23 = vector.shape_cast %22 : vector<1xf32> to vector<1x1xf32>
    %cst_18 = arith.constant 1.250000e-01 : f32
    %24 = vector.broadcast %cst_18 : f32 to vector<1x1xf32>
    %25 = arith.mulf %23, %24 : vector<1x1xf32>
    %26 = vector.broadcast %25 : vector<1x1xf32> to vector<8x1xf32>
    %27 = arith.subf %21, %26 : vector<8x1xf32>
    %28 = arith.mulf %27, %27 : vector<8x1xf32>
    %cst_19 = arith.constant dense<0.000000e+00> : vector<1xf32>
    %29 = vector.multi_reduction <add>, %28, %cst_19 [0] : vector<8x1xf32> to vector<1xf32>
    %30 = vector.shape_cast %29 : vector<1xf32> to vector<1x1xf32>
    %cst_20 = arith.constant 0.142857149 : f32
    %31 = vector.broadcast %cst_20 : f32 to vector<1x1xf32>
    %32 = arith.mulf %30, %31 : vector<1x1xf32>
    %33 = math.sqrt %32 : vector<1x1xf32>
    %cst_21 = arith.constant 1.000000e+00 : f32
    %34 = vector.broadcast %cst_21 : f32 to vector<1x1xf32>
    %35 = arith.divf %34, %33 : vector<1x1xf32>
    %36 = vector.broadcast %25 : vector<1x1xf32> to vector<8x1xf32>
    %37 = arith.subf %21, %36 : vector<8x1xf32>
    %38 = vector.broadcast %35 : vector<1x1xf32> to vector<8x1xf32>
    %39 = arith.mulf %37, %38 : vector<8x1xf32>
    %40 = vector.broadcast %39 : vector<8x1xf32> to vector<8x128xf32>
    %41 = vector.broadcast %4 : vector<1x128xf32> to vector<8x128xf32>
    %42 = arith.mulf %40, %41 : vector<8x128xf32>
    %43 = arith.truncf %10 : vector<8x32xf32> to vector<8x32xbf16>
    %cst_22 = arith.constant dense<0.000000e+00> : vector<8x128xf32>
    %44 = tpu.matmul %43, %1, %cst_22 {dimension_numbers = #tpu.dot_dimension_numbers<[1], [0], [0], [1], [0, 0, 1, 1], [], []>} : vector<8x32xbf16>, vector<32x128xbf16>, vector<8x128xf32> -> vector<8x128xf32>
    %45 = arith.addf %42, %44 : vector<8x128xf32>
    %46 = vector.broadcast %5 : vector<1x128xf32> to vector<8x128xf32>
    %47 = arith.addf %45, %46 : vector<8x128xf32>
    %48 = arith.negf %47 : vector<8x128xf32>
    %49 = math.exp %48 : vector<8x128xf32>
    %cst_23 = arith.constant 1.000000e+00 : f32
    %50 = vector.broadcast %cst_23 : f32 to vector<8x128xf32>
    %51 = arith.addf %50, %49 : vector<8x128xf32>
    %52 = arith.divf %50, %51 : vector<8x128xf32>
    %53 = vector.extract_strided_slice %52 {offsets = [0, 0], sizes = [8, 32], strides = [1, 1]} : vector<8x128xf32> to vector<8x32xf32>
    %54 = vector.extract_strided_slice %52 {offsets = [0, 32], sizes = [8, 32], strides = [1, 1]} : vector<8x128xf32> to vector<8x32xf32>
    %55 = vector.extract_strided_slice %52 {offsets = [0, 64], sizes = [8, 32], strides = [1, 1]} : vector<8x128xf32> to vector<8x32xf32>
    %cst_24 = arith.constant 2.000000e+00 : f32
    %56 = vector.broadcast %cst_24 : f32 to vector<8x32xf32>
    %57 = arith.mulf %56, %55 : vector<8x32xf32>
    %cst_25 = arith.constant 1.000000e+00 : f32
    %58 = vector.broadcast %cst_25 : f32 to vector<8x32xf32>
    %59 = arith.subf %57, %58 : vector<8x32xf32>
    %60 = vector.extract_strided_slice %52 {offsets = [0, 96], sizes = [8, 32], strides = [1, 1]} : vector<8x128xf32> to vector<8x32xf32>
    %61 = arith.mulf %54, %13 : vector<8x32xf32>
    %62 = arith.mulf %53, %59 : vector<8x32xf32>
    %63 = arith.addf %61, %62 : vector<8x32xf32>
    %64 = math.tanh %63 : vector<8x32xf32>
    %65 = arith.mulf %60, %64 : vector<8x32xf32>
    %66 = arith.truncf %63 : vector<8x32xf32> to vector<8x32xbf16>
    %cst_26 = arith.constant dense<0.000000e+00> : vector<8x32xf32>
    %67 = tpu.matmul %66, %2, %cst_26 {dimension_numbers = #tpu.dot_dimension_numbers<[1], [0], [0], [1], [0, 0, 1, 1], [], []>} : vector<8x32xbf16>, vector<32x32xbf16>, vector<8x32xf32> -> vector<8x32xf32>
    %68 = vector.broadcast %6 : vector<1x32xf32> to vector<8x32xf32>
    %69 = arith.addf %67, %68 : vector<8x32xf32>
    %cst_27 = arith.constant 0.000000e+00 : f32
    %70 = vector.broadcast %cst_27 : f32 to vector<8x32xf32>
    %71 = arith.maximumf %69, %70 : vector<8x32xf32>
    %72 = arith.truncf %71 : vector<8x32xf32> to vector<8x32xbf16>
    %cst_28 = arith.constant dense<0.000000e+00> : vector<8x2xf32>
    %73 = tpu.matmul %72, %3, %cst_28 {dimension_numbers = #tpu.dot_dimension_numbers<[1], [0], [0], [1], [0, 0, 1, 1], [], []>} : vector<8x32xbf16>, vector<32x2xbf16>, vector<8x2xf32> -> vector<8x2xf32>
    %74 = vector.broadcast %7 : vector<1x2xf32> to vector<8x2xf32>
    %75 = arith.addf %73, %74 : vector<8x2xf32>
    %cst_29 = arith.constant 0.000000e+00 : f32
    %76 = vector.broadcast %cst_29 : f32 to vector<8x2xf32>
    %77 = arith.maximumf %75, %76 : vector<8x2xf32>
    %78 = math.absf %75 : vector<8x2xf32>
    %cst_30 = arith.constant 0.000000e+00 : f32
    %79 = vector.broadcast %cst_30 : f32 to vector<8x2xf32>
    %80 = arith.subf %79, %78 : vector<8x2xf32>
    %81 = math.exp %80 : vector<8x2xf32>
    %82 = math.log1p %81 : vector<8x2xf32>
    %83 = arith.addf %77, %82 : vector<8x2xf32>
    %84 = vector.extract_strided_slice %83 {offsets = [0, 0], sizes = [8, 1], strides = [1, 1]} : vector<8x2xf32> to vector<8x1xf32>
    %85 = vector.extract_strided_slice %83 {offsets = [0, 1], sizes = [8, 1], strides = [1, 1]} : vector<8x2xf32> to vector<8x1xf32>
    %86 = vector.broadcast %84 : vector<8x1xf32> to vector<8x128xf32>
    %87 = arith.mulf %86, %18 : vector<8x128xf32>
    %88 = arith.subf %16, %87 : vector<8x128xf32>
    %89 = vector.broadcast %85 : vector<8x1xf32> to vector<8x128xf32>
    %90 = arith.subf %88, %89 : vector<8x128xf32>
    %cst_31 = arith.constant 0.000000e+00 : f32
    %91 = vector.broadcast %cst_31 : f32 to vector<8x128xf32>
    %92 = arith.maximumf %90, %91 : vector<8x128xf32>
    %cst_32 = arith.constant 0.000000e+00 : f32
    %93 = vector.broadcast %cst_32 : f32 to vector<8x128xf32>
    %94 = arith.subf %93, %88 : vector<8x128xf32>
    %95 = vector.broadcast %85 : vector<8x1xf32> to vector<8x128xf32>
    %96 = arith.subf %94, %95 : vector<8x128xf32>
    %cst_33 = arith.constant 0.000000e+00 : f32
    %97 = vector.broadcast %cst_33 : f32 to vector<8x128xf32>
    %98 = arith.maximumf %96, %97 : vector<8x128xf32>
    %99 = arith.subf %92, %98 : vector<8x128xf32>
    %100 = arith.truncf %99 : vector<8x128xf32> to vector<8x128xbf16>
    %c0_34 = arith.constant 0 : index
    %c0_35 = arith.constant 0 : index
    %101 = vector.load %arg1[%c0_34, %c0_35] : memref<128x128xbf16, #tpu.memory_space<vmem>>, vector<128x128xbf16>
    %cst_36 = arith.constant dense<0.000000e+00> : vector<8x128xf32>
    %102 = tpu.matmul %100, %101, %cst_36 {dimension_numbers = #tpu.dot_dimension_numbers<[1], [0], [0], [1], [0, 0, 1, 1], [], []>} : vector<8x128xbf16>, vector<128x128xbf16>, vector<8x128xf32> -> vector<8x128xf32>
    %103 = arith.subf %102, %15 : vector<8x128xf32>
    %104 = math.absf %103 : vector<8x128xf32>
    %cst_37 = arith.constant dense<0.000000e+00> : vector<8xf32>
    %105 = vector.multi_reduction <add>, %104, %cst_37 [1] : vector<8x128xf32> to vector<8xf32>
    %106 = vector.shape_cast %105 : vector<8xf32> to vector<8x1xf32>
    %107 = vector.broadcast %25 : vector<1x1xf32> to vector<8x1xf32>
    %108 = arith.subf %106, %107 : vector<8x1xf32>
    %109 = vector.broadcast %35 : vector<1x1xf32> to vector<8x1xf32>
    %110 = arith.mulf %108, %109 : vector<8x1xf32>
    %111 = vector.broadcast %110 : vector<8x1xf32> to vector<8x128xf32>
    %112 = vector.broadcast %4 : vector<1x128xf32> to vector<8x128xf32>
    %113 = arith.mulf %111, %112 : vector<8x128xf32>
    %114 = arith.truncf %65 : vector<8x32xf32> to vector<8x32xbf16>
    %cst_38 = arith.constant dense<0.000000e+00> : vector<8x128xf32>
    %115 = tpu.matmul %114, %1, %cst_38 {dimension_numbers = #tpu.dot_dimension_numbers<[1], [0], [0], [1], [0, 0, 1, 1], [], []>} : vector<8x32xbf16>, vector<32x128xbf16>, vector<8x128xf32> -> vector<8x128xf32>
    %116 = arith.addf %113, %115 : vector<8x128xf32>
    %117 = vector.broadcast %5 : vector<1x128xf32> to vector<8x128xf32>
    %118 = arith.addf %116, %117 : vector<8x128xf32>
    %119 = arith.negf %118 : vector<8x128xf32>
    %120 = math.exp %119 : vector<8x128xf32>
    %cst_39 = arith.constant 1.000000e+00 : f32
    %121 = vector.broadcast %cst_39 : f32 to vector<8x128xf32>
    %122 = arith.addf %121, %120 : vector<8x128xf32>
    %123 = arith.divf %121, %122 : vector<8x128xf32>
    %124 = vector.extract_strided_slice %123 {offsets = [0, 0], sizes = [8, 32], strides = [1, 1]} : vector<8x128xf32> to vector<8x32xf32>
    %125 = vector.extract_strided_slice %123 {offsets = [0, 32], sizes = [8, 32], strides = [1, 1]} : vector<8x128xf32> to vector<8x32xf32>
    %126 = vector.extract_strided_slice %123 {offsets = [0, 64], sizes = [8, 32], strides = [1, 1]} : vector<8x128xf32> to vector<8x32xf32>
    %cst_40 = arith.constant 2.000000e+00 : f32
    %127 = vector.broadcast %cst_40 : f32 to vector<8x32xf32>
    %128 = arith.mulf %127, %126 : vector<8x32xf32>
    %cst_41 = arith.constant 1.000000e+00 : f32
    %129 = vector.broadcast %cst_41 : f32 to vector<8x32xf32>
    %130 = arith.subf %128, %129 : vector<8x32xf32>
    %131 = vector.extract_strided_slice %123 {offsets = [0, 96], sizes = [8, 32], strides = [1, 1]} : vector<8x128xf32> to vector<8x32xf32>
    %132 = arith.mulf %125, %63 : vector<8x32xf32>
    %133 = arith.mulf %124, %130 : vector<8x32xf32>
    %134 = arith.addf %132, %133 : vector<8x32xf32>
    %135 = math.tanh %134 : vector<8x32xf32>
    %136 = arith.mulf %131, %135 : vector<8x32xf32>
    %137 = arith.truncf %134 : vector<8x32xf32> to vector<8x32xbf16>
    %cst_42 = arith.constant dense<0.000000e+00> : vector<8x32xf32>
    %138 = tpu.matmul %137, %2, %cst_42 {dimension_numbers = #tpu.dot_dimension_numbers<[1], [0], [0], [1], [0, 0, 1, 1], [], []>} : vector<8x32xbf16>, vector<32x32xbf16>, vector<8x32xf32> -> vector<8x32xf32>
    %139 = vector.broadcast %6 : vector<1x32xf32> to vector<8x32xf32>
    %140 = arith.addf %138, %139 : vector<8x32xf32>
    %cst_43 = arith.constant 0.000000e+00 : f32
    %141 = vector.broadcast %cst_43 : f32 to vector<8x32xf32>
    %142 = arith.maximumf %140, %141 : vector<8x32xf32>
    %143 = arith.truncf %142 : vector<8x32xf32> to vector<8x32xbf16>
    %cst_44 = arith.constant dense<0.000000e+00> : vector<8x2xf32>
    %144 = tpu.matmul %143, %3, %cst_44 {dimension_numbers = #tpu.dot_dimension_numbers<[1], [0], [0], [1], [0, 0, 1, 1], [], []>} : vector<8x32xbf16>, vector<32x2xbf16>, vector<8x2xf32> -> vector<8x2xf32>
    %145 = vector.broadcast %7 : vector<1x2xf32> to vector<8x2xf32>
    %146 = arith.addf %144, %145 : vector<8x2xf32>
    %cst_45 = arith.constant 0.000000e+00 : f32
    %147 = vector.broadcast %cst_45 : f32 to vector<8x2xf32>
    %148 = arith.maximumf %146, %147 : vector<8x2xf32>
    %149 = math.absf %146 : vector<8x2xf32>
    %cst_46 = arith.constant 0.000000e+00 : f32
    %150 = vector.broadcast %cst_46 : f32 to vector<8x2xf32>
    %151 = arith.subf %150, %149 : vector<8x2xf32>
    %152 = math.exp %151 : vector<8x2xf32>
    %153 = math.log1p %152 : vector<8x2xf32>
    %154 = arith.addf %148, %153 : vector<8x2xf32>
    %155 = vector.extract_strided_slice %154 {offsets = [0, 0], sizes = [8, 1], strides = [1, 1]} : vector<8x2xf32> to vector<8x1xf32>
    %156 = vector.extract_strided_slice %154 {offsets = [0, 1], sizes = [8, 1], strides = [1, 1]} : vector<8x2xf32> to vector<8x1xf32>
    %157 = vector.broadcast %155 : vector<8x1xf32> to vector<8x128xf32>
    %158 = arith.mulf %157, %103 : vector<8x128xf32>
    %159 = arith.subf %99, %158 : vector<8x128xf32>
    %160 = vector.broadcast %156 : vector<8x1xf32> to vector<8x128xf32>
    %161 = arith.subf %159, %160 : vector<8x128xf32>
    %cst_47 = arith.constant 0.000000e+00 : f32
    %162 = vector.broadcast %cst_47 : f32 to vector<8x128xf32>
    %163 = arith.maximumf %161, %162 : vector<8x128xf32>
    %cst_48 = arith.constant 0.000000e+00 : f32
    %164 = vector.broadcast %cst_48 : f32 to vector<8x128xf32>
    %165 = arith.subf %164, %159 : vector<8x128xf32>
    %166 = vector.broadcast %156 : vector<8x1xf32> to vector<8x128xf32>
    %167 = arith.subf %165, %166 : vector<8x128xf32>
    %cst_49 = arith.constant 0.000000e+00 : f32
    %168 = vector.broadcast %cst_49 : f32 to vector<8x128xf32>
    %169 = arith.maximumf %167, %168 : vector<8x128xf32>
    %170 = arith.subf %163, %169 : vector<8x128xf32>
    %171 = arith.truncf %170 : vector<8x128xf32> to vector<8x128xbf16>
    %c0_50 = arith.constant 0 : index
    %c0_51 = arith.constant 0 : index
    %172 = vector.load %arg1[%c0_50, %c0_51] : memref<128x128xbf16, #tpu.memory_space<vmem>>, vector<128x128xbf16>
    %cst_52 = arith.constant dense<0.000000e+00> : vector<8x128xf32>
    %173 = tpu.matmul %171, %172, %cst_52 {dimension_numbers = #tpu.dot_dimension_numbers<[1], [0], [0], [1], [0, 0, 1, 1], [], []>} : vector<8x128xbf16>, vector<128x128xbf16>, vector<8x128xf32> -> vector<8x128xf32>
    %174 = arith.subf %173, %15 : vector<8x128xf32>
    %175 = math.absf %174 : vector<8x128xf32>
    %cst_53 = arith.constant dense<0.000000e+00> : vector<8xf32>
    %176 = vector.multi_reduction <add>, %175, %cst_53 [1] : vector<8x128xf32> to vector<8xf32>
    %177 = vector.shape_cast %176 : vector<8xf32> to vector<8x1xf32>
    %178 = vector.broadcast %25 : vector<1x1xf32> to vector<8x1xf32>
    %179 = arith.subf %177, %178 : vector<8x1xf32>
    %180 = vector.broadcast %35 : vector<1x1xf32> to vector<8x1xf32>
    %181 = arith.mulf %179, %180 : vector<8x1xf32>
    %182 = vector.broadcast %181 : vector<8x1xf32> to vector<8x128xf32>
    %183 = vector.broadcast %4 : vector<1x128xf32> to vector<8x128xf32>
    %184 = arith.mulf %182, %183 : vector<8x128xf32>
    %185 = arith.truncf %136 : vector<8x32xf32> to vector<8x32xbf16>
    %cst_54 = arith.constant dense<0.000000e+00> : vector<8x128xf32>
    %186 = tpu.matmul %185, %1, %cst_54 {dimension_numbers = #tpu.dot_dimension_numbers<[1], [0], [0], [1], [0, 0, 1, 1], [], []>} : vector<8x32xbf16>, vector<32x128xbf16>, vector<8x128xf32> -> vector<8x128xf32>
    %187 = arith.addf %184, %186 : vector<8x128xf32>
    %188 = vector.broadcast %5 : vector<1x128xf32> to vector<8x128xf32>
    %189 = arith.addf %187, %188 : vector<8x128xf32>
    %190 = arith.negf %189 : vector<8x128xf32>
    %191 = math.exp %190 : vector<8x128xf32>
    %cst_55 = arith.constant 1.000000e+00 : f32
    %192 = vector.broadcast %cst_55 : f32 to vector<8x128xf32>
    %193 = arith.addf %192, %191 : vector<8x128xf32>
    %194 = arith.divf %192, %193 : vector<8x128xf32>
    %195 = vector.extract_strided_slice %194 {offsets = [0, 0], sizes = [8, 32], strides = [1, 1]} : vector<8x128xf32> to vector<8x32xf32>
    %196 = vector.extract_strided_slice %194 {offsets = [0, 32], sizes = [8, 32], strides = [1, 1]} : vector<8x128xf32> to vector<8x32xf32>
    %197 = vector.extract_strided_slice %194 {offsets = [0, 64], sizes = [8, 32], strides = [1, 1]} : vector<8x128xf32> to vector<8x32xf32>
    %cst_56 = arith.constant 2.000000e+00 : f32
    %198 = vector.broadcast %cst_56 : f32 to vector<8x32xf32>
    %199 = arith.mulf %198, %197 : vector<8x32xf32>
    %cst_57 = arith.constant 1.000000e+00 : f32
    %200 = vector.broadcast %cst_57 : f32 to vector<8x32xf32>
    %201 = arith.subf %199, %200 : vector<8x32xf32>
    %202 = vector.extract_strided_slice %194 {offsets = [0, 96], sizes = [8, 32], strides = [1, 1]} : vector<8x128xf32> to vector<8x32xf32>
    %203 = arith.mulf %196, %134 : vector<8x32xf32>
    %204 = arith.mulf %195, %201 : vector<8x32xf32>
    %205 = arith.addf %203, %204 : vector<8x32xf32>
    %206 = math.tanh %205 : vector<8x32xf32>
    %207 = arith.mulf %202, %206 : vector<8x32xf32>
    %208 = arith.truncf %205 : vector<8x32xf32> to vector<8x32xbf16>
    %cst_58 = arith.constant dense<0.000000e+00> : vector<8x32xf32>
    %209 = tpu.matmul %208, %2, %cst_58 {dimension_numbers = #tpu.dot_dimension_numbers<[1], [0], [0], [1], [0, 0, 1, 1], [], []>} : vector<8x32xbf16>, vector<32x32xbf16>, vector<8x32xf32> -> vector<8x32xf32>
    %210 = vector.broadcast %6 : vector<1x32xf32> to vector<8x32xf32>
    %211 = arith.addf %209, %210 : vector<8x32xf32>
    %cst_59 = arith.constant 0.000000e+00 : f32
    %212 = vector.broadcast %cst_59 : f32 to vector<8x32xf32>
    %213 = arith.maximumf %211, %212 : vector<8x32xf32>
    %214 = arith.truncf %213 : vector<8x32xf32> to vector<8x32xbf16>
    %cst_60 = arith.constant dense<0.000000e+00> : vector<8x2xf32>
    %215 = tpu.matmul %214, %3, %cst_60 {dimension_numbers = #tpu.dot_dimension_numbers<[1], [0], [0], [1], [0, 0, 1, 1], [], []>} : vector<8x32xbf16>, vector<32x2xbf16>, vector<8x2xf32> -> vector<8x2xf32>
    %216 = vector.broadcast %7 : vector<1x2xf32> to vector<8x2xf32>
    %217 = arith.addf %215, %216 : vector<8x2xf32>
    %cst_61 = arith.constant 0.000000e+00 : f32
    %218 = vector.broadcast %cst_61 : f32 to vector<8x2xf32>
    %219 = arith.maximumf %217, %218 : vector<8x2xf32>
    %220 = math.absf %217 : vector<8x2xf32>
    %cst_62 = arith.constant 0.000000e+00 : f32
    %221 = vector.broadcast %cst_62 : f32 to vector<8x2xf32>
    %222 = arith.subf %221, %220 : vector<8x2xf32>
    %223 = math.exp %222 : vector<8x2xf32>
    %224 = math.log1p %223 : vector<8x2xf32>
    %225 = arith.addf %219, %224 : vector<8x2xf32>
    %226 = vector.extract_strided_slice %225 {offsets = [0, 0], sizes = [8, 1], strides = [1, 1]} : vector<8x2xf32> to vector<8x1xf32>
    %227 = vector.extract_strided_slice %225 {offsets = [0, 1], sizes = [8, 1], strides = [1, 1]} : vector<8x2xf32> to vector<8x1xf32>
    %228 = vector.broadcast %226 : vector<8x1xf32> to vector<8x128xf32>
    %229 = arith.mulf %228, %174 : vector<8x128xf32>
    %230 = arith.subf %170, %229 : vector<8x128xf32>
    %231 = vector.broadcast %227 : vector<8x1xf32> to vector<8x128xf32>
    %232 = arith.subf %230, %231 : vector<8x128xf32>
    %cst_63 = arith.constant 0.000000e+00 : f32
    %233 = vector.broadcast %cst_63 : f32 to vector<8x128xf32>
    %234 = arith.maximumf %232, %233 : vector<8x128xf32>
    %cst_64 = arith.constant 0.000000e+00 : f32
    %235 = vector.broadcast %cst_64 : f32 to vector<8x128xf32>
    %236 = arith.subf %235, %230 : vector<8x128xf32>
    %237 = vector.broadcast %227 : vector<8x1xf32> to vector<8x128xf32>
    %238 = arith.subf %236, %237 : vector<8x128xf32>
    %cst_65 = arith.constant 0.000000e+00 : f32
    %239 = vector.broadcast %cst_65 : f32 to vector<8x128xf32>
    %240 = arith.maximumf %238, %239 : vector<8x128xf32>
    %241 = arith.subf %234, %240 : vector<8x128xf32>
    %242 = arith.truncf %241 : vector<8x128xf32> to vector<8x128xbf16>
    %c0_66 = arith.constant 0 : index
    %c0_67 = arith.constant 0 : index
    %243 = vector.load %arg1[%c0_66, %c0_67] : memref<128x128xbf16, #tpu.memory_space<vmem>>, vector<128x128xbf16>
    %cst_68 = arith.constant dense<0.000000e+00> : vector<8x128xf32>
    %244 = tpu.matmul %242, %243, %cst_68 {dimension_numbers = #tpu.dot_dimension_numbers<[1], [0], [0], [1], [0, 0, 1, 1], [], []>} : vector<8x128xbf16>, vector<128x128xbf16>, vector<8x128xf32> -> vector<8x128xf32>
    %245 = arith.subf %244, %15 : vector<8x128xf32>
    %246 = math.absf %245 : vector<8x128xf32>
    %cst_69 = arith.constant dense<0.000000e+00> : vector<8xf32>
    %247 = vector.multi_reduction <add>, %246, %cst_69 [1] : vector<8x128xf32> to vector<8xf32>
    %248 = vector.shape_cast %247 : vector<8xf32> to vector<8x1xf32>
    %249 = vector.broadcast %25 : vector<1x1xf32> to vector<8x1xf32>
    %250 = arith.subf %248, %249 : vector<8x1xf32>
    %251 = vector.broadcast %35 : vector<1x1xf32> to vector<8x1xf32>
    %252 = arith.mulf %250, %251 : vector<8x1xf32>
    %253 = vector.broadcast %252 : vector<8x1xf32> to vector<8x128xf32>
    %254 = vector.broadcast %4 : vector<1x128xf32> to vector<8x128xf32>
    %255 = arith.mulf %253, %254 : vector<8x128xf32>
    %256 = arith.truncf %207 : vector<8x32xf32> to vector<8x32xbf16>
    %cst_70 = arith.constant dense<0.000000e+00> : vector<8x128xf32>
    %257 = tpu.matmul %256, %1, %cst_70 {dimension_numbers = #tpu.dot_dimension_numbers<[1], [0], [0], [1], [0, 0, 1, 1], [], []>} : vector<8x32xbf16>, vector<32x128xbf16>, vector<8x128xf32> -> vector<8x128xf32>
    %258 = arith.addf %255, %257 : vector<8x128xf32>
    %259 = vector.broadcast %5 : vector<1x128xf32> to vector<8x128xf32>
    %260 = arith.addf %258, %259 : vector<8x128xf32>
    %261 = arith.negf %260 : vector<8x128xf32>
    %262 = math.exp %261 : vector<8x128xf32>
    %cst_71 = arith.constant 1.000000e+00 : f32
    %263 = vector.broadcast %cst_71 : f32 to vector<8x128xf32>
    %264 = arith.addf %263, %262 : vector<8x128xf32>
    %265 = arith.divf %263, %264 : vector<8x128xf32>
    %266 = vector.extract_strided_slice %265 {offsets = [0, 0], sizes = [8, 32], strides = [1, 1]} : vector<8x128xf32> to vector<8x32xf32>
    %267 = vector.extract_strided_slice %265 {offsets = [0, 32], sizes = [8, 32], strides = [1, 1]} : vector<8x128xf32> to vector<8x32xf32>
    %268 = vector.extract_strided_slice %265 {offsets = [0, 64], sizes = [8, 32], strides = [1, 1]} : vector<8x128xf32> to vector<8x32xf32>
    %cst_72 = arith.constant 2.000000e+00 : f32
    %269 = vector.broadcast %cst_72 : f32 to vector<8x32xf32>
    %270 = arith.mulf %269, %268 : vector<8x32xf32>
    %cst_73 = arith.constant 1.000000e+00 : f32
    %271 = vector.broadcast %cst_73 : f32 to vector<8x32xf32>
    %272 = arith.subf %270, %271 : vector<8x32xf32>
    %273 = vector.extract_strided_slice %265 {offsets = [0, 96], sizes = [8, 32], strides = [1, 1]} : vector<8x128xf32> to vector<8x32xf32>
    %274 = arith.mulf %267, %205 : vector<8x32xf32>
    %275 = arith.mulf %266, %272 : vector<8x32xf32>
    %276 = arith.addf %274, %275 : vector<8x32xf32>
    %277 = math.tanh %276 : vector<8x32xf32>
    %278 = arith.mulf %273, %277 : vector<8x32xf32>
    %279 = arith.truncf %276 : vector<8x32xf32> to vector<8x32xbf16>
    %cst_74 = arith.constant dense<0.000000e+00> : vector<8x32xf32>
    %280 = tpu.matmul %279, %2, %cst_74 {dimension_numbers = #tpu.dot_dimension_numbers<[1], [0], [0], [1], [0, 0, 1, 1], [], []>} : vector<8x32xbf16>, vector<32x32xbf16>, vector<8x32xf32> -> vector<8x32xf32>
    %281 = vector.broadcast %6 : vector<1x32xf32> to vector<8x32xf32>
    %282 = arith.addf %280, %281 : vector<8x32xf32>
    %cst_75 = arith.constant 0.000000e+00 : f32
    %283 = vector.broadcast %cst_75 : f32 to vector<8x32xf32>
    %284 = arith.maximumf %282, %283 : vector<8x32xf32>
    %285 = arith.truncf %284 : vector<8x32xf32> to vector<8x32xbf16>
    %cst_76 = arith.constant dense<0.000000e+00> : vector<8x2xf32>
    %286 = tpu.matmul %285, %3, %cst_76 {dimension_numbers = #tpu.dot_dimension_numbers<[1], [0], [0], [1], [0, 0, 1, 1], [], []>} : vector<8x32xbf16>, vector<32x2xbf16>, vector<8x2xf32> -> vector<8x2xf32>
    %287 = vector.broadcast %7 : vector<1x2xf32> to vector<8x2xf32>
    %288 = arith.addf %286, %287 : vector<8x2xf32>
    %cst_77 = arith.constant 0.000000e+00 : f32
    %289 = vector.broadcast %cst_77 : f32 to vector<8x2xf32>
    %290 = arith.maximumf %288, %289 : vector<8x2xf32>
    %291 = math.absf %288 : vector<8x2xf32>
    %cst_78 = arith.constant 0.000000e+00 : f32
    %292 = vector.broadcast %cst_78 : f32 to vector<8x2xf32>
    %293 = arith.subf %292, %291 : vector<8x2xf32>
    %294 = math.exp %293 : vector<8x2xf32>
    %295 = math.log1p %294 : vector<8x2xf32>
    %296 = arith.addf %290, %295 : vector<8x2xf32>
    %297 = vector.extract_strided_slice %296 {offsets = [0, 0], sizes = [8, 1], strides = [1, 1]} : vector<8x2xf32> to vector<8x1xf32>
    %298 = vector.extract_strided_slice %296 {offsets = [0, 1], sizes = [8, 1], strides = [1, 1]} : vector<8x2xf32> to vector<8x1xf32>
    %299 = vector.broadcast %297 : vector<8x1xf32> to vector<8x128xf32>
    %300 = arith.mulf %299, %245 : vector<8x128xf32>
    %301 = arith.subf %241, %300 : vector<8x128xf32>
    %302 = vector.broadcast %298 : vector<8x1xf32> to vector<8x128xf32>
    %303 = arith.subf %301, %302 : vector<8x128xf32>
    %cst_79 = arith.constant 0.000000e+00 : f32
    %304 = vector.broadcast %cst_79 : f32 to vector<8x128xf32>
    %305 = arith.maximumf %303, %304 : vector<8x128xf32>
    %cst_80 = arith.constant 0.000000e+00 : f32
    %306 = vector.broadcast %cst_80 : f32 to vector<8x128xf32>
    %307 = arith.subf %306, %301 : vector<8x128xf32>
    %308 = vector.broadcast %298 : vector<8x1xf32> to vector<8x128xf32>
    %309 = arith.subf %307, %308 : vector<8x128xf32>
    %cst_81 = arith.constant 0.000000e+00 : f32
    %310 = vector.broadcast %cst_81 : f32 to vector<8x128xf32>
    %311 = arith.maximumf %309, %310 : vector<8x128xf32>
    %312 = arith.subf %305, %311 : vector<8x128xf32>
    %313 = arith.truncf %312 : vector<8x128xf32> to vector<8x128xbf16>
    %c0_82 = arith.constant 0 : index
    %c0_83 = arith.constant 0 : index
    %314 = vector.load %arg1[%c0_82, %c0_83] : memref<128x128xbf16, #tpu.memory_space<vmem>>, vector<128x128xbf16>
    %cst_84 = arith.constant dense<0.000000e+00> : vector<8x128xf32>
    %315 = tpu.matmul %313, %314, %cst_84 {dimension_numbers = #tpu.dot_dimension_numbers<[1], [0], [0], [1], [0, 0, 1, 1], [], []>} : vector<8x128xbf16>, vector<128x128xbf16>, vector<8x128xf32> -> vector<8x128xf32>
    %316 = arith.subf %315, %15 : vector<8x128xf32>
    %317 = math.absf %316 : vector<8x128xf32>
    %cst_85 = arith.constant dense<0.000000e+00> : vector<8xf32>
    %318 = vector.multi_reduction <add>, %317, %cst_85 [1] : vector<8x128xf32> to vector<8xf32>
    %319 = vector.shape_cast %318 : vector<8xf32> to vector<8x1xf32>
    %320 = vector.broadcast %25 : vector<1x1xf32> to vector<8x1xf32>
    %321 = arith.subf %319, %320 : vector<8x1xf32>
    %322 = vector.broadcast %35 : vector<1x1xf32> to vector<8x1xf32>
    %323 = arith.mulf %321, %322 : vector<8x1xf32>
    %324 = vector.broadcast %323 : vector<8x1xf32> to vector<8x128xf32>
    %325 = vector.broadcast %4 : vector<1x128xf32> to vector<8x128xf32>
    %326 = arith.mulf %324, %325 : vector<8x128xf32>
    %327 = arith.truncf %278 : vector<8x32xf32> to vector<8x32xbf16>
    %cst_86 = arith.constant dense<0.000000e+00> : vector<8x128xf32>
    %328 = tpu.matmul %327, %1, %cst_86 {dimension_numbers = #tpu.dot_dimension_numbers<[1], [0], [0], [1], [0, 0, 1, 1], [], []>} : vector<8x32xbf16>, vector<32x128xbf16>, vector<8x128xf32> -> vector<8x128xf32>
    %329 = arith.addf %326, %328 : vector<8x128xf32>
    %330 = vector.broadcast %5 : vector<1x128xf32> to vector<8x128xf32>
    %331 = arith.addf %329, %330 : vector<8x128xf32>
    %332 = arith.negf %331 : vector<8x128xf32>
    %333 = math.exp %332 : vector<8x128xf32>
    %cst_87 = arith.constant 1.000000e+00 : f32
    %334 = vector.broadcast %cst_87 : f32 to vector<8x128xf32>
    %335 = arith.addf %334, %333 : vector<8x128xf32>
    %336 = arith.divf %334, %335 : vector<8x128xf32>
    %337 = vector.extract_strided_slice %336 {offsets = [0, 0], sizes = [8, 32], strides = [1, 1]} : vector<8x128xf32> to vector<8x32xf32>
    %338 = vector.extract_strided_slice %336 {offsets = [0, 32], sizes = [8, 32], strides = [1, 1]} : vector<8x128xf32> to vector<8x32xf32>
    %339 = vector.extract_strided_slice %336 {offsets = [0, 64], sizes = [8, 32], strides = [1, 1]} : vector<8x128xf32> to vector<8x32xf32>
    %cst_88 = arith.constant 2.000000e+00 : f32
    %340 = vector.broadcast %cst_88 : f32 to vector<8x32xf32>
    %341 = arith.mulf %340, %339 : vector<8x32xf32>
    %cst_89 = arith.constant 1.000000e+00 : f32
    %342 = vector.broadcast %cst_89 : f32 to vector<8x32xf32>
    %343 = arith.subf %341, %342 : vector<8x32xf32>
    %344 = vector.extract_strided_slice %336 {offsets = [0, 96], sizes = [8, 32], strides = [1, 1]} : vector<8x128xf32> to vector<8x32xf32>
    %345 = arith.mulf %338, %276 : vector<8x32xf32>
    %346 = arith.mulf %337, %343 : vector<8x32xf32>
    %347 = arith.addf %345, %346 : vector<8x32xf32>
    %348 = math.tanh %347 : vector<8x32xf32>
    %349 = arith.mulf %344, %348 : vector<8x32xf32>
    %350 = arith.truncf %347 : vector<8x32xf32> to vector<8x32xbf16>
    %cst_90 = arith.constant dense<0.000000e+00> : vector<8x32xf32>
    %351 = tpu.matmul %350, %2, %cst_90 {dimension_numbers = #tpu.dot_dimension_numbers<[1], [0], [0], [1], [0, 0, 1, 1], [], []>} : vector<8x32xbf16>, vector<32x32xbf16>, vector<8x32xf32> -> vector<8x32xf32>
    %352 = vector.broadcast %6 : vector<1x32xf32> to vector<8x32xf32>
    %353 = arith.addf %351, %352 : vector<8x32xf32>
    %cst_91 = arith.constant 0.000000e+00 : f32
    %354 = vector.broadcast %cst_91 : f32 to vector<8x32xf32>
    %355 = arith.maximumf %353, %354 : vector<8x32xf32>
    %356 = arith.truncf %355 : vector<8x32xf32> to vector<8x32xbf16>
    %cst_92 = arith.constant dense<0.000000e+00> : vector<8x2xf32>
    %357 = tpu.matmul %356, %3, %cst_92 {dimension_numbers = #tpu.dot_dimension_numbers<[1], [0], [0], [1], [0, 0, 1, 1], [], []>} : vector<8x32xbf16>, vector<32x2xbf16>, vector<8x2xf32> -> vector<8x2xf32>
    %358 = vector.broadcast %7 : vector<1x2xf32> to vector<8x2xf32>
    %359 = arith.addf %357, %358 : vector<8x2xf32>
    %cst_93 = arith.constant 0.000000e+00 : f32
    %360 = vector.broadcast %cst_93 : f32 to vector<8x2xf32>
    %361 = arith.maximumf %359, %360 : vector<8x2xf32>
    %362 = math.absf %359 : vector<8x2xf32>
    %cst_94 = arith.constant 0.000000e+00 : f32
    %363 = vector.broadcast %cst_94 : f32 to vector<8x2xf32>
    %364 = arith.subf %363, %362 : vector<8x2xf32>
    %365 = math.exp %364 : vector<8x2xf32>
    %366 = math.log1p %365 : vector<8x2xf32>
    %367 = arith.addf %361, %366 : vector<8x2xf32>
    %368 = vector.extract_strided_slice %367 {offsets = [0, 0], sizes = [8, 1], strides = [1, 1]} : vector<8x2xf32> to vector<8x1xf32>
    %369 = vector.extract_strided_slice %367 {offsets = [0, 1], sizes = [8, 1], strides = [1, 1]} : vector<8x2xf32> to vector<8x1xf32>
    %370 = vector.broadcast %368 : vector<8x1xf32> to vector<8x128xf32>
    %371 = arith.mulf %370, %316 : vector<8x128xf32>
    %372 = arith.subf %312, %371 : vector<8x128xf32>
    %373 = vector.broadcast %369 : vector<8x1xf32> to vector<8x128xf32>
    %374 = arith.subf %372, %373 : vector<8x128xf32>
    %cst_95 = arith.constant 0.000000e+00 : f32
    %375 = vector.broadcast %cst_95 : f32 to vector<8x128xf32>
    %376 = arith.maximumf %374, %375 : vector<8x128xf32>
    %cst_96 = arith.constant 0.000000e+00 : f32
    %377 = vector.broadcast %cst_96 : f32 to vector<8x128xf32>
    %378 = arith.subf %377, %372 : vector<8x128xf32>
    %379 = vector.broadcast %369 : vector<8x1xf32> to vector<8x128xf32>
    %380 = arith.subf %378, %379 : vector<8x128xf32>
    %cst_97 = arith.constant 0.000000e+00 : f32
    %381 = vector.broadcast %cst_97 : f32 to vector<8x128xf32>
    %382 = arith.maximumf %380, %381 : vector<8x128xf32>
    %383 = arith.subf %376, %382 : vector<8x128xf32>
    %384 = arith.truncf %383 : vector<8x128xf32> to vector<8x128xbf16>
    %c0_98 = arith.constant 0 : index
    %c0_99 = arith.constant 0 : index
    %385 = vector.load %arg1[%c0_98, %c0_99] : memref<128x128xbf16, #tpu.memory_space<vmem>>, vector<128x128xbf16>
    %cst_100 = arith.constant dense<0.000000e+00> : vector<8x128xf32>
    %386 = tpu.matmul %384, %385, %cst_100 {dimension_numbers = #tpu.dot_dimension_numbers<[1], [0], [0], [1], [0, 0, 1, 1], [], []>} : vector<8x128xbf16>, vector<128x128xbf16>, vector<8x128xf32> -> vector<8x128xf32>
    %387 = arith.subf %386, %15 : vector<8x128xf32>
    %388 = math.absf %387 : vector<8x128xf32>
    %cst_101 = arith.constant dense<0.000000e+00> : vector<8xf32>
    %389 = vector.multi_reduction <add>, %388, %cst_101 [1] : vector<8x128xf32> to vector<8xf32>
    %390 = vector.shape_cast %389 : vector<8xf32> to vector<8x1xf32>
    %391 = vector.broadcast %25 : vector<1x1xf32> to vector<8x1xf32>
    %392 = arith.subf %390, %391 : vector<8x1xf32>
    %393 = vector.broadcast %35 : vector<1x1xf32> to vector<8x1xf32>
    %394 = arith.mulf %392, %393 : vector<8x1xf32>
    %395 = vector.broadcast %394 : vector<8x1xf32> to vector<8x128xf32>
    %396 = vector.broadcast %4 : vector<1x128xf32> to vector<8x128xf32>
    %397 = arith.mulf %395, %396 : vector<8x128xf32>
    %398 = arith.truncf %349 : vector<8x32xf32> to vector<8x32xbf16>
    %cst_102 = arith.constant dense<0.000000e+00> : vector<8x128xf32>
    %399 = tpu.matmul %398, %1, %cst_102 {dimension_numbers = #tpu.dot_dimension_numbers<[1], [0], [0], [1], [0, 0, 1, 1], [], []>} : vector<8x32xbf16>, vector<32x128xbf16>, vector<8x128xf32> -> vector<8x128xf32>
    %400 = arith.addf %397, %399 : vector<8x128xf32>
    %401 = vector.broadcast %5 : vector<1x128xf32> to vector<8x128xf32>
    %402 = arith.addf %400, %401 : vector<8x128xf32>
    %403 = arith.negf %402 : vector<8x128xf32>
    %404 = math.exp %403 : vector<8x128xf32>
    %cst_103 = arith.constant 1.000000e+00 : f32
    %405 = vector.broadcast %cst_103 : f32 to vector<8x128xf32>
    %406 = arith.addf %405, %404 : vector<8x128xf32>
    %407 = arith.divf %405, %406 : vector<8x128xf32>
    %408 = vector.extract_strided_slice %407 {offsets = [0, 0], sizes = [8, 32], strides = [1, 1]} : vector<8x128xf32> to vector<8x32xf32>
    %409 = vector.extract_strided_slice %407 {offsets = [0, 32], sizes = [8, 32], strides = [1, 1]} : vector<8x128xf32> to vector<8x32xf32>
    %410 = vector.extract_strided_slice %407 {offsets = [0, 64], sizes = [8, 32], strides = [1, 1]} : vector<8x128xf32> to vector<8x32xf32>
    %cst_104 = arith.constant 2.000000e+00 : f32
    %411 = vector.broadcast %cst_104 : f32 to vector<8x32xf32>
    %412 = arith.mulf %411, %410 : vector<8x32xf32>
    %cst_105 = arith.constant 1.000000e+00 : f32
    %413 = vector.broadcast %cst_105 : f32 to vector<8x32xf32>
    %414 = arith.subf %412, %413 : vector<8x32xf32>
    %415 = vector.extract_strided_slice %407 {offsets = [0, 96], sizes = [8, 32], strides = [1, 1]} : vector<8x128xf32> to vector<8x32xf32>
    %416 = arith.mulf %409, %347 : vector<8x32xf32>
    %417 = arith.mulf %408, %414 : vector<8x32xf32>
    %418 = arith.addf %416, %417 : vector<8x32xf32>
    %419 = math.tanh %418 : vector<8x32xf32>
    %420 = arith.mulf %415, %419 : vector<8x32xf32>
    %421 = arith.truncf %418 : vector<8x32xf32> to vector<8x32xbf16>
    %cst_106 = arith.constant dense<0.000000e+00> : vector<8x32xf32>
    %422 = tpu.matmul %421, %2, %cst_106 {dimension_numbers = #tpu.dot_dimension_numbers<[1], [0], [0], [1], [0, 0, 1, 1], [], []>} : vector<8x32xbf16>, vector<32x32xbf16>, vector<8x32xf32> -> vector<8x32xf32>
    %423 = vector.broadcast %6 : vector<1x32xf32> to vector<8x32xf32>
    %424 = arith.addf %422, %423 : vector<8x32xf32>
    %cst_107 = arith.constant 0.000000e+00 : f32
    %425 = vector.broadcast %cst_107 : f32 to vector<8x32xf32>
    %426 = arith.maximumf %424, %425 : vector<8x32xf32>
    %427 = arith.truncf %426 : vector<8x32xf32> to vector<8x32xbf16>
    %cst_108 = arith.constant dense<0.000000e+00> : vector<8x2xf32>
    %428 = tpu.matmul %427, %3, %cst_108 {dimension_numbers = #tpu.dot_dimension_numbers<[1], [0], [0], [1], [0, 0, 1, 1], [], []>} : vector<8x32xbf16>, vector<32x2xbf16>, vector<8x2xf32> -> vector<8x2xf32>
    %429 = vector.broadcast %7 : vector<1x2xf32> to vector<8x2xf32>
    %430 = arith.addf %428, %429 : vector<8x2xf32>
    %cst_109 = arith.constant 0.000000e+00 : f32
    %431 = vector.broadcast %cst_109 : f32 to vector<8x2xf32>
    %432 = arith.maximumf %430, %431 : vector<8x2xf32>
    %433 = math.absf %430 : vector<8x2xf32>
    %cst_110 = arith.constant 0.000000e+00 : f32
    %434 = vector.broadcast %cst_110 : f32 to vector<8x2xf32>
    %435 = arith.subf %434, %433 : vector<8x2xf32>
    %436 = math.exp %435 : vector<8x2xf32>
    %437 = math.log1p %436 : vector<8x2xf32>
    %438 = arith.addf %432, %437 : vector<8x2xf32>
    %439 = vector.extract_strided_slice %438 {offsets = [0, 0], sizes = [8, 1], strides = [1, 1]} : vector<8x2xf32> to vector<8x1xf32>
    %440 = vector.extract_strided_slice %438 {offsets = [0, 1], sizes = [8, 1], strides = [1, 1]} : vector<8x2xf32> to vector<8x1xf32>
    %441 = vector.broadcast %439 : vector<8x1xf32> to vector<8x128xf32>
    %442 = arith.mulf %441, %387 : vector<8x128xf32>
    %443 = arith.subf %383, %442 : vector<8x128xf32>
    %444 = vector.broadcast %440 : vector<8x1xf32> to vector<8x128xf32>
    %445 = arith.subf %443, %444 : vector<8x128xf32>
    %cst_111 = arith.constant 0.000000e+00 : f32
    %446 = vector.broadcast %cst_111 : f32 to vector<8x128xf32>
    %447 = arith.maximumf %445, %446 : vector<8x128xf32>
    %cst_112 = arith.constant 0.000000e+00 : f32
    %448 = vector.broadcast %cst_112 : f32 to vector<8x128xf32>
    %449 = arith.subf %448, %443 : vector<8x128xf32>
    %450 = vector.broadcast %440 : vector<8x1xf32> to vector<8x128xf32>
    %451 = arith.subf %449, %450 : vector<8x128xf32>
    %cst_113 = arith.constant 0.000000e+00 : f32
    %452 = vector.broadcast %cst_113 : f32 to vector<8x128xf32>
    %453 = arith.maximumf %451, %452 : vector<8x128xf32>
    %454 = arith.subf %447, %453 : vector<8x128xf32>
    %455 = arith.truncf %454 : vector<8x128xf32> to vector<8x128xbf16>
    %c0_114 = arith.constant 0 : index
    %c0_115 = arith.constant 0 : index
    %456 = vector.load %arg1[%c0_114, %c0_115] : memref<128x128xbf16, #tpu.memory_space<vmem>>, vector<128x128xbf16>
    %cst_116 = arith.constant dense<0.000000e+00> : vector<8x128xf32>
    %457 = tpu.matmul %455, %456, %cst_116 {dimension_numbers = #tpu.dot_dimension_numbers<[1], [0], [0], [1], [0, 0, 1, 1], [], []>} : vector<8x128xbf16>, vector<128x128xbf16>, vector<8x128xf32> -> vector<8x128xf32>
    %458 = arith.subf %457, %15 : vector<8x128xf32>
    %459 = math.absf %458 : vector<8x128xf32>
    %cst_117 = arith.constant dense<0.000000e+00> : vector<8xf32>
    %460 = vector.multi_reduction <add>, %459, %cst_117 [1] : vector<8x128xf32> to vector<8xf32>
    %461 = vector.shape_cast %460 : vector<8xf32> to vector<8x1xf32>
    %462 = vector.broadcast %25 : vector<1x1xf32> to vector<8x1xf32>
    %463 = arith.subf %461, %462 : vector<8x1xf32>
    %464 = vector.broadcast %35 : vector<1x1xf32> to vector<8x1xf32>
    %465 = arith.mulf %463, %464 : vector<8x1xf32>
    %466 = vector.broadcast %465 : vector<8x1xf32> to vector<8x128xf32>
    %467 = vector.broadcast %4 : vector<1x128xf32> to vector<8x128xf32>
    %468 = arith.mulf %466, %467 : vector<8x128xf32>
    %469 = arith.truncf %420 : vector<8x32xf32> to vector<8x32xbf16>
    %cst_118 = arith.constant dense<0.000000e+00> : vector<8x128xf32>
    %470 = tpu.matmul %469, %1, %cst_118 {dimension_numbers = #tpu.dot_dimension_numbers<[1], [0], [0], [1], [0, 0, 1, 1], [], []>} : vector<8x32xbf16>, vector<32x128xbf16>, vector<8x128xf32> -> vector<8x128xf32>
    %471 = arith.addf %468, %470 : vector<8x128xf32>
    %472 = vector.broadcast %5 : vector<1x128xf32> to vector<8x128xf32>
    %473 = arith.addf %471, %472 : vector<8x128xf32>
    %474 = arith.negf %473 : vector<8x128xf32>
    %475 = math.exp %474 : vector<8x128xf32>
    %cst_119 = arith.constant 1.000000e+00 : f32
    %476 = vector.broadcast %cst_119 : f32 to vector<8x128xf32>
    %477 = arith.addf %476, %475 : vector<8x128xf32>
    %478 = arith.divf %476, %477 : vector<8x128xf32>
    %479 = vector.extract_strided_slice %478 {offsets = [0, 0], sizes = [8, 32], strides = [1, 1]} : vector<8x128xf32> to vector<8x32xf32>
    %480 = vector.extract_strided_slice %478 {offsets = [0, 32], sizes = [8, 32], strides = [1, 1]} : vector<8x128xf32> to vector<8x32xf32>
    %481 = vector.extract_strided_slice %478 {offsets = [0, 64], sizes = [8, 32], strides = [1, 1]} : vector<8x128xf32> to vector<8x32xf32>
    %cst_120 = arith.constant 2.000000e+00 : f32
    %482 = vector.broadcast %cst_120 : f32 to vector<8x32xf32>
    %483 = arith.mulf %482, %481 : vector<8x32xf32>
    %cst_121 = arith.constant 1.000000e+00 : f32
    %484 = vector.broadcast %cst_121 : f32 to vector<8x32xf32>
    %485 = arith.subf %483, %484 : vector<8x32xf32>
    %486 = vector.extract_strided_slice %478 {offsets = [0, 96], sizes = [8, 32], strides = [1, 1]} : vector<8x128xf32> to vector<8x32xf32>
    %487 = arith.mulf %480, %418 : vector<8x32xf32>
    %488 = arith.mulf %479, %485 : vector<8x32xf32>
    %489 = arith.addf %487, %488 : vector<8x32xf32>
    %490 = math.tanh %489 : vector<8x32xf32>
    %491 = arith.mulf %486, %490 : vector<8x32xf32>
    %492 = arith.truncf %489 : vector<8x32xf32> to vector<8x32xbf16>
    %cst_122 = arith.constant dense<0.000000e+00> : vector<8x32xf32>
    %493 = tpu.matmul %492, %2, %cst_122 {dimension_numbers = #tpu.dot_dimension_numbers<[1], [0], [0], [1], [0, 0, 1, 1], [], []>} : vector<8x32xbf16>, vector<32x32xbf16>, vector<8x32xf32> -> vector<8x32xf32>
    %494 = vector.broadcast %6 : vector<1x32xf32> to vector<8x32xf32>
    %495 = arith.addf %493, %494 : vector<8x32xf32>
    %cst_123 = arith.constant 0.000000e+00 : f32
    %496 = vector.broadcast %cst_123 : f32 to vector<8x32xf32>
    %497 = arith.maximumf %495, %496 : vector<8x32xf32>
    %498 = arith.truncf %497 : vector<8x32xf32> to vector<8x32xbf16>
    %cst_124 = arith.constant dense<0.000000e+00> : vector<8x2xf32>
    %499 = tpu.matmul %498, %3, %cst_124 {dimension_numbers = #tpu.dot_dimension_numbers<[1], [0], [0], [1], [0, 0, 1, 1], [], []>} : vector<8x32xbf16>, vector<32x2xbf16>, vector<8x2xf32> -> vector<8x2xf32>
    %500 = vector.broadcast %7 : vector<1x2xf32> to vector<8x2xf32>
    %501 = arith.addf %499, %500 : vector<8x2xf32>
    %cst_125 = arith.constant 0.000000e+00 : f32
    %502 = vector.broadcast %cst_125 : f32 to vector<8x2xf32>
    %503 = arith.maximumf %501, %502 : vector<8x2xf32>
    %504 = math.absf %501 : vector<8x2xf32>
    %cst_126 = arith.constant 0.000000e+00 : f32
    %505 = vector.broadcast %cst_126 : f32 to vector<8x2xf32>
    %506 = arith.subf %505, %504 : vector<8x2xf32>
    %507 = math.exp %506 : vector<8x2xf32>
    %508 = math.log1p %507 : vector<8x2xf32>
    %509 = arith.addf %503, %508 : vector<8x2xf32>
    %510 = vector.extract_strided_slice %509 {offsets = [0, 0], sizes = [8, 1], strides = [1, 1]} : vector<8x2xf32> to vector<8x1xf32>
    %511 = vector.extract_strided_slice %509 {offsets = [0, 1], sizes = [8, 1], strides = [1, 1]} : vector<8x2xf32> to vector<8x1xf32>
    %512 = vector.broadcast %510 : vector<8x1xf32> to vector<8x128xf32>
    %513 = arith.mulf %512, %458 : vector<8x128xf32>
    %514 = arith.subf %454, %513 : vector<8x128xf32>
    %515 = vector.broadcast %511 : vector<8x1xf32> to vector<8x128xf32>
    %516 = arith.subf %514, %515 : vector<8x128xf32>
    %cst_127 = arith.constant 0.000000e+00 : f32
    %517 = vector.broadcast %cst_127 : f32 to vector<8x128xf32>
    %518 = arith.maximumf %516, %517 : vector<8x128xf32>
    %cst_128 = arith.constant 0.000000e+00 : f32
    %519 = vector.broadcast %cst_128 : f32 to vector<8x128xf32>
    %520 = arith.subf %519, %514 : vector<8x128xf32>
    %521 = vector.broadcast %511 : vector<8x1xf32> to vector<8x128xf32>
    %522 = arith.subf %520, %521 : vector<8x128xf32>
    %cst_129 = arith.constant 0.000000e+00 : f32
    %523 = vector.broadcast %cst_129 : f32 to vector<8x128xf32>
    %524 = arith.maximumf %522, %523 : vector<8x128xf32>
    %525 = arith.subf %518, %524 : vector<8x128xf32>
    %526 = arith.truncf %525 : vector<8x128xf32> to vector<8x128xbf16>
    %c0_130 = arith.constant 0 : index
    %c0_131 = arith.constant 0 : index
    %527 = vector.load %arg1[%c0_130, %c0_131] : memref<128x128xbf16, #tpu.memory_space<vmem>>, vector<128x128xbf16>
    %cst_132 = arith.constant dense<0.000000e+00> : vector<8x128xf32>
    %528 = tpu.matmul %526, %527, %cst_132 {dimension_numbers = #tpu.dot_dimension_numbers<[1], [0], [0], [1], [0, 0, 1, 1], [], []>} : vector<8x128xbf16>, vector<128x128xbf16>, vector<8x128xf32> -> vector<8x128xf32>
    %529 = arith.subf %528, %15 : vector<8x128xf32>
    %530 = math.absf %529 : vector<8x128xf32>
    %cst_133 = arith.constant dense<0.000000e+00> : vector<8xf32>
    %531 = vector.multi_reduction <add>, %530, %cst_133 [1] : vector<8x128xf32> to vector<8xf32>
    %532 = vector.shape_cast %531 : vector<8xf32> to vector<8x1xf32>
    %533 = vector.broadcast %25 : vector<1x1xf32> to vector<8x1xf32>
    %534 = arith.subf %532, %533 : vector<8x1xf32>
    %535 = vector.broadcast %35 : vector<1x1xf32> to vector<8x1xf32>
    %536 = arith.mulf %534, %535 : vector<8x1xf32>
    %537 = vector.broadcast %536 : vector<8x1xf32> to vector<8x128xf32>
    %538 = vector.broadcast %4 : vector<1x128xf32> to vector<8x128xf32>
    %539 = arith.mulf %537, %538 : vector<8x128xf32>
    %540 = arith.truncf %491 : vector<8x32xf32> to vector<8x32xbf16>
    %cst_134 = arith.constant dense<0.000000e+00> : vector<8x128xf32>
    %541 = tpu.matmul %540, %1, %cst_134 {dimension_numbers = #tpu.dot_dimension_numbers<[1], [0], [0], [1], [0, 0, 1, 1], [], []>} : vector<8x32xbf16>, vector<32x128xbf16>, vector<8x128xf32> -> vector<8x128xf32>
    %542 = arith.addf %539, %541 : vector<8x128xf32>
    %543 = vector.broadcast %5 : vector<1x128xf32> to vector<8x128xf32>
    %544 = arith.addf %542, %543 : vector<8x128xf32>
    %545 = arith.negf %544 : vector<8x128xf32>
    %546 = math.exp %545 : vector<8x128xf32>
    %cst_135 = arith.constant 1.000000e+00 : f32
    %547 = vector.broadcast %cst_135 : f32 to vector<8x128xf32>
    %548 = arith.addf %547, %546 : vector<8x128xf32>
    %549 = arith.divf %547, %548 : vector<8x128xf32>
    %550 = vector.extract_strided_slice %549 {offsets = [0, 0], sizes = [8, 32], strides = [1, 1]} : vector<8x128xf32> to vector<8x32xf32>
    %551 = vector.extract_strided_slice %549 {offsets = [0, 32], sizes = [8, 32], strides = [1, 1]} : vector<8x128xf32> to vector<8x32xf32>
    %552 = vector.extract_strided_slice %549 {offsets = [0, 64], sizes = [8, 32], strides = [1, 1]} : vector<8x128xf32> to vector<8x32xf32>
    %cst_136 = arith.constant 2.000000e+00 : f32
    %553 = vector.broadcast %cst_136 : f32 to vector<8x32xf32>
    %554 = arith.mulf %553, %552 : vector<8x32xf32>
    %cst_137 = arith.constant 1.000000e+00 : f32
    %555 = vector.broadcast %cst_137 : f32 to vector<8x32xf32>
    %556 = arith.subf %554, %555 : vector<8x32xf32>
    %557 = arith.mulf %551, %489 : vector<8x32xf32>
    %558 = arith.mulf %550, %556 : vector<8x32xf32>
    %559 = arith.addf %557, %558 : vector<8x32xf32>
    %560 = arith.truncf %559 : vector<8x32xf32> to vector<8x32xbf16>
    %cst_138 = arith.constant dense<0.000000e+00> : vector<8x32xf32>
    %561 = tpu.matmul %560, %2, %cst_138 {dimension_numbers = #tpu.dot_dimension_numbers<[1], [0], [0], [1], [0, 0, 1, 1], [], []>} : vector<8x32xbf16>, vector<32x32xbf16>, vector<8x32xf32> -> vector<8x32xf32>
    %562 = vector.broadcast %6 : vector<1x32xf32> to vector<8x32xf32>
    %563 = arith.addf %561, %562 : vector<8x32xf32>
    %cst_139 = arith.constant 0.000000e+00 : f32
    %564 = vector.broadcast %cst_139 : f32 to vector<8x32xf32>
    %565 = arith.maximumf %563, %564 : vector<8x32xf32>
    %566 = arith.truncf %565 : vector<8x32xf32> to vector<8x32xbf16>
    %cst_140 = arith.constant dense<0.000000e+00> : vector<8x2xf32>
    %567 = tpu.matmul %566, %3, %cst_140 {dimension_numbers = #tpu.dot_dimension_numbers<[1], [0], [0], [1], [0, 0, 1, 1], [], []>} : vector<8x32xbf16>, vector<32x2xbf16>, vector<8x2xf32> -> vector<8x2xf32>
    %568 = vector.broadcast %7 : vector<1x2xf32> to vector<8x2xf32>
    %569 = arith.addf %567, %568 : vector<8x2xf32>
    %cst_141 = arith.constant 0.000000e+00 : f32
    %570 = vector.broadcast %cst_141 : f32 to vector<8x2xf32>
    %571 = arith.maximumf %569, %570 : vector<8x2xf32>
    %572 = math.absf %569 : vector<8x2xf32>
    %cst_142 = arith.constant 0.000000e+00 : f32
    %573 = vector.broadcast %cst_142 : f32 to vector<8x2xf32>
    %574 = arith.subf %573, %572 : vector<8x2xf32>
    %575 = math.exp %574 : vector<8x2xf32>
    %576 = math.log1p %575 : vector<8x2xf32>
    %577 = arith.addf %571, %576 : vector<8x2xf32>
    %578 = vector.extract_strided_slice %577 {offsets = [0, 0], sizes = [8, 1], strides = [1, 1]} : vector<8x2xf32> to vector<8x1xf32>
    %579 = vector.extract_strided_slice %577 {offsets = [0, 1], sizes = [8, 1], strides = [1, 1]} : vector<8x2xf32> to vector<8x1xf32>
    %580 = vector.broadcast %578 : vector<8x1xf32> to vector<8x128xf32>
    %581 = arith.mulf %580, %529 : vector<8x128xf32>
    %582 = arith.subf %525, %581 : vector<8x128xf32>
    %583 = vector.broadcast %579 : vector<8x1xf32> to vector<8x128xf32>
    %584 = arith.subf %582, %583 : vector<8x128xf32>
    %cst_143 = arith.constant 0.000000e+00 : f32
    %585 = vector.broadcast %cst_143 : f32 to vector<8x128xf32>
    %586 = arith.maximumf %584, %585 : vector<8x128xf32>
    %cst_144 = arith.constant 0.000000e+00 : f32
    %587 = vector.broadcast %cst_144 : f32 to vector<8x128xf32>
    %588 = arith.subf %587, %582 : vector<8x128xf32>
    %589 = vector.broadcast %579 : vector<8x1xf32> to vector<8x128xf32>
    %590 = arith.subf %588, %589 : vector<8x128xf32>
    %cst_145 = arith.constant 0.000000e+00 : f32
    %591 = vector.broadcast %cst_145 : f32 to vector<8x128xf32>
    %592 = arith.maximumf %590, %591 : vector<8x128xf32>
    %593 = arith.subf %586, %592 : vector<8x128xf32>
    %c0_146 = arith.constant 0 : index
    %c0_147 = arith.constant 0 : index
    %594 = vector.load %arg5[%c0_146, %c0_147] : memref<8x128xf32, #tpu.memory_space<vmem>>, vector<8x128xf32>
    tpu.vector_store %arg5[%c0_146, %c0_147], %593 {strides = array<i32>} : memref<8x128xf32, #tpu.memory_space<vmem>>, vector<8x128xf32>,
    %595 = tpu.concatenate %84, %155, %226, %297, %368, %439, %510, %578 in 1 : vector<8x1xf32>, vector<8x1xf32>, vector<8x1xf32>, vector<8x1xf32>, vector<8x1xf32>, vector<8x1xf32>, vector<8x1xf32>, vector<8x1xf32> -> vector<8x8xf32>
    %c0_148 = arith.constant 0 : index
    %c0_149 = arith.constant 0 : index
    %596 = vector.load %arg6[%c0_148, %c0_149] : memref<8x8xf32, #tpu.memory_space<vmem>>, vector<8x8xf32>
    tpu.vector_store %arg6[%c0_148, %c0_149], %595 {strides = array<i32>} : memref<8x8xf32, #tpu.memory_space<vmem>>, vector<8x8xf32>,
    %597 = tpu.concatenate %85, %156, %227, %298, %369, %440, %511, %579 in 1 : vector<8x1xf32>, vector<8x1xf32>, vector<8x1xf32>, vector<8x1xf32>, vector<8x1xf32>, vector<8x1xf32>, vector<8x1xf32>, vector<8x1xf32> -> vector<8x8xf32>
    %c0_150 = arith.constant 0 : index
    %c0_151 = arith.constant 0 : index
    %598 = vector.load %arg7[%c0_150, %c0_151] : memref<8x8xf32, #tpu.memory_space<vmem>>, vector<8x8xf32>
    tpu.vector_store %arg7[%c0_150, %c0_151], %597 {strides = array<i32>} : memref<8x8xf32, #tpu.memory_space<vmem>>, vector<8x8xf32>,
    return
  }
}

</mosaic_0001>

<llo_original>
// kernel: na_alista_forward.1
$region0: #{na_alista_forward.1}
  #allocation0 [shape = 'u32[]', space=smem, size = 0x4, offset = 0x4, fixed_abs, tag = 'smem constant byte address 0x4 - core index']
  #allocation1 [shape = 'u32[144,128]{1,0:T(1,128)}', space=vmem, size = 0x12000, scoped, tag = 'internal scratch']
  %s0 = inlined_call_operand.hbm [shape: f32[8,64], index: 0, kind: input, shape index: {}]
  %s1 = inlined_call_operand.hbm [shape: bf16[128,128], index: 1, kind: input, shape index: {}]
  %s2 = inlined_call_operand.hbm [shape: f32[64,128], index: 2, kind: input, shape index: {}]
  %s3 = inlined_call_operand.hbm [shape: bf16[32,162], index: 3, kind: input, shape index: {}]
  %s4 = inlined_call_operand.vmem [shape: f32[6,128], index: 4, kind: input, shape index: {}]
  %s5 = inlined_call_operand.hbm [shape: f32[8,128], index: 5, kind: output, shape index: {0}]
  %s6 = inlined_call_operand.hbm [shape: f32[8,8], index: 6, kind: output, shape index: {1}]
  %s7 = inlined_call_operand.hbm [shape: f32[8,8], index: 7, kind: output, shape index: {2}]
  %8 = xla_tuple %s5, %s6, %s7
  %s9 = sld [smem:[#allocation0]]
  $region62: #{na_alista_forward.1} parent=0
    _
  %s11 = ssub.s32 1, %s9
  %s12 = scalar_select 0, %s11, %s9
  $region1: #{na_alista_forward.1} parent=0
    #allocation2 [shape = 'u8[4096]{0}', space=vmem, size = 0x1000, scoped, tag = 'input window, operand 0, single buffered']
    #allocation3 [shape = 's32[1]{0}', space=sflag, size = 0x4, scoped, tag = 'scoped memory for na_alista_forward.1']
    #allocation4 [shape = 's32[1]{0}', space=sflag, size = 0x4, scoped, tag = 'scoped memory for na_alista_forward.1']
    #allocation5 [shape = 'u8[32768]{0}', space=vmem, size = 0x8000, scoped, tag = 'input window, operand 1, single buffered']
    #allocation6 [shape = 's32[1]{0}', space=sflag, size = 0x4, scoped, tag = 'scoped memory for na_alista_forward.1']
    #allocation7 [shape = 'u8[32768]{0}', space=vmem, size = 0x8000, scoped, tag = 'input window, operand 2, single buffered']
    #allocation8 [shape = 'u8[16384]{0}', space=vmem, size = 0x4000, scoped, tag = 'input window, operand 3, single buffered']
    #allocation9 [shape = 's32[1]{0}', space=sflag, size = 0x4, scoped, tag = 'scoped memory for na_alista_forward.1']
    #allocation10 [shape = 'u8[4096]{0}', space=vmem, size = 0x1000, scoped, tag = 'output window, operand 0, single buffered']
    #allocation11 [shape = 'u8[4096]{0}', space=vmem, size = 0x1000, scoped, tag = 'output window, operand 1, single buffered']
    #allocation12 [shape = 's32[1]{0}', space=sflag, size = 0x4, scoped, tag = 'scoped memory for na_alista_forward.1']
    #allocation13 [shape = 'u8[4096]{0}', space=vmem, size = 0x1000, scoped, tag = 'output window, operand 2, single buffered']
    %13 = vsyncpa [#allocation3], 0
    %14 = vsyncpa [#allocation6], 0
    %15 = vsyncpa [#allocation9], 0
    %16 = vsyncpa [#allocation4], 0
    %17 = vsyncpa [#allocation12], 0
    // Predicated region
    $region2: #{na_alista_forward.1} parent=1 // pred_check
      _
    $region3: #{na_alista_forward.1} parent=1 // pred_check_branch
      %19 = sbr.rel (0) target = $region5
    $region4: #{na_alista_forward.1} parent=1 // pred_region
      %s21 = ssub.s32 128, 128
      %22 = vsyncadd [#allocation3], %s21
      %s24 = sshll.u32 [#allocation2], 4
      %s25 = int_to_ptr.vmem [resolvable:$true] %s24
      %27 = dma.hbm_to_vmem [thread:$0]  %s0, 128, %s25, [#allocation3]
    $region5: #{na_alista_forward.1} parent=1 // pred_fallthru
      _
    // Predicated region
    $region6: #{na_alista_forward.1} parent=1 // pred_check
      _
    $region7: #{na_alista_forward.1} parent=1 // pred_check_branch
      %29 = sbr.rel (0) target = $region9
    $region8: #{na_alista_forward.1} parent=1 // pred_region
      %s31 = ssub.s32 1024, 1024
      %32 = vsyncadd [#allocation6], %s31
      %s33 = sshll.u32 [#allocation5], 4
      %s34 = int_to_ptr.vmem [resolvable:$true] %s33
      %39 = dma.hbm_to_vmem [thread:$0]  %s1, 1024, %s34, [#allocation6], 64, 64, 4
    $region9: #{na_alista_forward.1} parent=1 // pred_fallthru
      _
    // Predicated region
    $region10: #{na_alista_forward.1} parent=1 // pred_check
      _
    $region11: #{na_alista_forward.1} parent=1 // pred_check_branch
      %41 = sbr.rel (0) target = $region13
    $region12: #{na_alista_forward.1} parent=1 // pred_region
      %s43 = ssub.s32 1024, 1024
      %44 = vsyncadd [#allocation6], %s43
      %s45 = sshll.u32 [#allocation7], 4
      %s46 = int_to_ptr.vmem [resolvable:$true] %s45
      %51 = dma.hbm_to_vmem [thread:$0]  %s2, 1024, %s46, [#allocation6], 128, 128, 8
    $region13: #{na_alista_forward.1} parent=1 // pred_fallthru
      _
    // Predicated region
    $region14: #{na_alista_forward.1} parent=1 // pred_check
      _
    $region15: #{na_alista_forward.1} parent=1 // pred_check_branch
      %53 = sbr.rel (0) target = $region17
    $region16: #{na_alista_forward.1} parent=1 // pred_region
      %s55 = ssub.s32 512, 512
      %56 = vsyncadd [#allocation9], %s55
      %s57 = sshll.u32 [#allocation8], 4
      %s58 = int_to_ptr.vmem [resolvable:$true] %s57
      %63 = dma.hbm_to_vmem [thread:$0]  %s3, 512, %s58, [#allocation9], 128, 128, 8
    $region17: #{na_alista_forward.1} parent=1 // pred_fallthru
      _
    // Predicated region
    $region18: #{na_alista_forward.1} parent=1 // pred_check
      _
    $region19: #{na_alista_forward.1} parent=1 // pred_check_branch
      %65 = sbr.rel (0) target = $region21
    $region20: #{na_alista_forward.1} parent=1 // pred_region
      _
    $region21: #{na_alista_forward.1} parent=1 // pred_fallthru
      _
    // Predicated region
    $region22: #{na_alista_forward.1} parent=1 // pred_check
      _
    $region23: #{na_alista_forward.1} parent=1 // pred_check_branch
      %67 = sbr.rel (0) target = $region25
    $region24: #{na_alista_forward.1} parent=1 // pred_region
      %68 = dma.done [#allocation3], 128
    $region25: #{na_alista_forward.1} parent=1 // pred_fallthru
      _
    // Predicated region
    $region26: #{na_alista_forward.1} parent=1 // pred_check
      _
    $region27: #{na_alista_forward.1} parent=1 // pred_check_branch
      %70 = sbr.rel (0) target = $region29
    $region28: #{na_alista_forward.1} parent=1 // pred_region
      %71 = dma.done [#allocation6], 1024
    $region29: #{na_alista_forward.1} parent=1 // pred_fallthru
      _
    // Predicated region
    $region30: #{na_alista_forward.1} parent=1 // pred_check
      _
    $region31: #{na_alista_forward.1} parent=1 // pred_check_branch
      %73 = sbr.rel (0) target = $region33
    $region32: #{na_alista_forward.1} parent=1 // pred_region
      %74 = dma.done [#allocation6], 1024
    $region33: #{na_alista_forward.1} parent=1 // pred_fallthru
      _
    // Predicated region
    $region34: #{na_alista_forward.1} parent=1 // pred_check
      _
    $region35: #{na_alista_forward.1} parent=1 // pred_check_branch
      %76 = sbr.rel (0) target = $region37
    $region36: #{na_alista_forward.1} parent=1 // pred_region
      %77 = dma.done [#allocation9], 512
    $region37: #{na_alista_forward.1} parent=1 // pred_fallthru
      _
    %v79 = vld [vmem:[#allocation2] sm:$0xff]
    %v80 = vld [vmem:[#allocation8] sm:$0xf]
    %v81 = vld [vmem:[#allocation8 + $0x8] sm:$0xf]
    %v82 = vld [vmem:[#allocation8 + $0x10] sm:$0xf]
    %v83 = vld [vmem:[#allocation8 + $0x18] sm:$0xf]
    %v84 = vld [vmem:[#allocation8 + $0x4] sm:$0xf]
    %v85 = vld [vmem:[#allocation8 + $0xc] sm:$0xf]
    %v86 = vld [vmem:[#allocation8 + $0x14] sm:$0xf]
    %v87 = vld [vmem:[#allocation8 + $0x1c] sm:$0xf]
    %v88 = vld [vmem:[%s4] sm:$0x1]
    %v89 = vld [vmem:[%s4 + $0x1] sm:$0x1]
    %v90 = vld [vmem:[%s4 + $0x2] sm:$0x1]
    %v91 = vld [vmem:[%s4 + $0x3] sm:$0x1]
    %v92 = vld [vmem:[%s4 + $0x4] sm:$0x1]
    %v93 = vlaneseq
    %v94 = vshrl.u32 %v93, 7
    %v95 = vsub.s32 0, %v94
    %v96 = vrot.slane %v92, %v95
    %v97 = vld [vmem:[%s4 + $0x5] sm:$0x1]
    %v98 = vlaneseq
    %v99 = vshrl.u32 %v98, 7
    %v100 = vsub.s32 0, %v99
    %v101 = vrot.slane %v97, %v100
    %v102 = vld [vmem:[#allocation7] sm:$0xff]
    %v103 = vld [vmem:[#allocation7 + $0x8] sm:$0xff]
    %v104 = vld [vmem:[#allocation7 + $0x10] sm:$0xff]
    %v105 = vld [vmem:[#allocation7 + $0x18] sm:$0xff]
    %v106 = vld [vmem:[#allocation7 + $0x20] sm:$0xff]
    %v107 = vld [vmem:[#allocation7 + $0x28] sm:$0xff]
    %v108 = vld [vmem:[#allocation7 + $0x30] sm:$0xff]
    %v109 = vld [vmem:[#allocation7 + $0x38] sm:$0xff]
    %vm110 = vcmask 523264
    %v112 = vsel %vm110, %v79, 0
    %114 = vmatprep.subr.mxu0 0.0
    %v115 = vand.u32 %v102, 4294901760
    %116 = vmatpush1.msra.mxu0 %v115
    %117 = vmatprep.subr.mxu0 0.0
    %v118 = vand.u32 %v103, 4294901760
    %119 = vmatpush1.msra.mxu0 %v118
    %120 = vmatprep.subr.mxu0 0.0
    %v121 = vand.u32 %v104, 4294901760
    %122 = vmatpush1.msra.mxu0 %v121
    %123 = vmatprep.subr.mxu0 0.0
    %v124 = vand.u32 %v105, 4294901760
    %125 = vmatpush1.msra.mxu0 %v124
    %126 = vmatprep.subr.mxu0 0.0
    %v127 = vand.u32 %v106, 4294901760
    %128 = vmatpush1.msra.mxu0 %v127
    %129 = vmatprep.subr.mxu0 0.0
    %v130 = vand.u32 %v107, 4294901760
    %131 = vmatpush1.msra.mxu0 %v130
    %132 = vmatprep.subr.mxu0 0.0
    %v133 = vand.u32 %v108, 4294901760
    %134 = vmatpush1.msra.mxu0 %v133
    %135 = vmatprep.subr.mxu0 0.0
    %v136 = vand.u32 %v109, 4294901760
    %137 = vmatpush1.msra.mxu0 %v136
    %138 = vmatprep.subr.mxu0 0.0
    %139 = vmatpush1.msra.mxu0 0.0
    %140 = vmatprep.subr.mxu0 0.0
    %141 = vmatpush1.msra.mxu0 0.0
    %142 = vmatprep.subr.mxu0 0.0
    %143 = vmatpush1.msra.mxu0 0.0
    %144 = vmatprep.subr.mxu0 0.0
    %145 = vmatpush1.msra.mxu0 0.0
    %146 = vmatprep.subr.mxu0 0.0
    %147 = vmatpush1.msra.mxu0 0.0
    %148 = vmatprep.subr.mxu0 0.0
    %149 = vmatpush1.msra.mxu0 0.0
    %150 = vmatprep.subr.mxu0 0.0
    %151 = vmatpush1.msra.mxu0 0.0
    %152 = vmatprep.subr.mxu0 0.0
    %153 = vmatpush1.msra.mxu0 0.0
    %154 = vmatprep.subr.mxu0 0.0
    %155 = vmatpush1.msra.mxu0 0.0
    %156 = vmatprep.subr.mxu0 0.0
    %157 = vmatpush1.msra.mxu0 0.0
    %158 = vmatprep.subr.mxu0 0.0
    %159 = vmatpush1.msra.mxu0 0.0
    %160 = vmatprep.subr.mxu0 0.0
    %161 = vmatpush1.msra.mxu0 0.0
    %162 = vmatprep.subr.mxu0 0.0
    %163 = vmatpush1.msra.mxu0 0.0
    %164 = vmatprep.subr.mxu0 0.0
    %165 = vmatpush1.msra.mxu0 0.0
    %166 = vmatprep.subr.mxu0 0.0
    %167 = vmatpush1.msra.mxu0 0.0
    %168 = vmatprep.subr.mxu0 0.0
    %169 = vmatpush1.msra.mxu0 0.0
    %170 = vmatprep.subr.mxu0 0.0
    %171 = vmatpush1.msra.mxu0 0.0
    %172 = vmatprep.subr.mxu0 0.0
    %173 = vmatpush1.msra.mxu0 0.0
    %174 = vmatprep.subr.mxu0 0.0
    %175 = vmatpush1.msra.mxu0 0.0
    %176 = vmatprep.subr.mxu0 0.0
    %177 = vmatpush1.msra.mxu0 0.0
    %178 = vmatprep.subr.mxu0 0.0
    %179 = vmatpush1.msra.mxu0 0.0
    %180 = vmatprep.subr.mxu0 0.0
    %181 = vmatpush1.msra.mxu0 0.0
    %182 = vmatprep.subr.mxu0 0.0
    %183 = vmatpush1.msra.mxu0 0.0
    %184 = vmatprep.subr.mxu0 0.0
    %185 = vmatpush1.msra.mxu0 0.0
    %186 = vmatprep.mubr.f32.mxu0 0.0
    %v187 = vand.u32 %v112, 4294901760
    %v188 = vsub.f32 %v112, %v187
    %v189 = vand.u32 %v188, 4294901760
    %v190 = vsub.f32 %v188, %v189
    %v191 = vand.u32 %v190, 4294901760
    %192 = vmatmul.mubr.f32.gmra.mrb[0].mxu0 %v191
    %v193 = vpop.f32.mrb[0].mxu0
    %v194 = vadd.f32 0.0, %v193
    %v195 = vpop.f32.mrb[0].mxu0
    %196 = vdwg.mxu0
    %197 = vmatprep.subr.mxu0 0.0
    %v198 = vand.u32 %v102, 4294901760
    %v199 = vsub.f32 %v102, %v198
    %v200 = vand.u32 %v199, 4294901760
    %v201 = vsub.f32 %v199, %v200
    %v202 = vand.u32 %v201, 4294901760
    %203 = vmatpush1.msra.mxu0 %v202
    %204 = vmatprep.subr.mxu0 0.0
    %v205 = vand.u32 %v103, 4294901760
    %v206 = vsub.f32 %v103, %v205
    %v207 = vand.u32 %v206, 4294901760
    %v208 = vsub.f32 %v206, %v207
    %v209 = vand.u32 %v208, 4294901760
    %210 = vmatpush1.msra.mxu0 %v209
    %211 = vmatprep.subr.mxu0 0.0
    %v212 = vand.u32 %v104, 4294901760
    %v213 = vsub.f32 %v104, %v212
    %v214 = vand.u32 %v213, 4294901760
    %v215 = vsub.f32 %v213, %v214
    %v216 = vand.u32 %v215, 4294901760
    %217 = vmatpush1.msra.mxu0 %v216
    %218 = vmatprep.subr.mxu0 0.0
    %v219 = vand.u32 %v105, 4294901760
    %v220 = vsub.f32 %v105, %v219
    %v221 = vand.u32 %v220, 4294901760
    %v222 = vsub.f32 %v220, %v221
    %v223 = vand.u32 %v222, 4294901760
    %224 = vmatpush1.msra.mxu0 %v223
    %225 = vmatprep.subr.mxu0 0.0
    %v226 = vand.u32 %v106, 4294901760
    %v227 = vsub.f32 %v106, %v226
    %v228 = vand.u32 %v227, 4294901760
    %v229 = vsub.f32 %v227, %v228
    %v230 = vand.u32 %v229, 4294901760
    %231 = vmatpush1.msra.mxu0 %v230
    %232 = vmatprep.subr.mxu0 0.0
    %v233 = vand.u32 %v107, 4294901760
    %v234 = vsub.f32 %v107, %v233
    %v235 = vand.u32 %v234, 4294901760
    %v236 = vsub.f32 %v234, %v235
    %v237 = vand.u32 %v236, 4294901760
    %238 = vmatpush1.msra.mxu0 %v237
    %239 = vmatprep.subr.mxu0 0.0
    %v240 = vand.u32 %v108, 4294901760
    %v241 = vsub.f32 %v108, %v240
    %v242 = vand.u32 %v241, 4294901760
    %v243 = vsub.f32 %v241, %v242
    %v244 = vand.u32 %v243, 4294901760
    %245 = vmatpush1.msra.mxu0 %v244
    %246 = vmatprep.subr.mxu0 0.0
    %v247 = vand.u32 %v109, 4294901760
    %v248 = vsub.f32 %v109, %v247
    %v249 = vand.u32 %v248, 4294901760
    %v250 = vsub.f32 %v248, %v249
    %v251 = vand.u32 %v250, 4294901760
    %252 = vmatpush1.msra.mxu0 %v251
    %253 = vmatprep.subr.mxu0 0.0
    %254 = vmatpush1.msra.mxu0 0.0
    %255 = vmatprep.subr.mxu0 0.0
    %256 = vmatpush1.msra.mxu0 0.0
    %257 = vmatprep.subr.mxu0 0.0
    %258 = vmatpush1.msra.mxu0 0.0
    %259 = vmatprep.subr.mxu0 0.0
    %260 = vmatpush1.msra.mxu0 0.0
    %261 = vmatprep.subr.mxu0 0.0
    %262 = vmatpush1.msra.mxu0 0.0
    %263 = vmatprep.subr.mxu0 0.0
    %264 = vmatpush1.msra.mxu0 0.0
    %265 = vmatprep.subr.mxu0 0.0
    %266 = vmatpush1.msra.mxu0 0.0
    %267 = vmatprep.subr.mxu0 0.0
    %268 = vmatpush1.msra.mxu0 0.0
    %269 = vmatprep.subr.mxu0 0.0
    %270 = vmatpush1.msra.mxu0 0.0
    %271 = vmatprep.subr.mxu0 0.0
    %272 = vmatpush1.msra.mxu0 0.0
    %273 = vmatprep.subr.mxu0 0.0
    %274 = vmatpush1.msra.mxu0 0.0
    %275 = vmatprep.subr.mxu0 0.0
    %276 = vmatpush1.msra.mxu0 0.0
    %277 = vmatprep.subr.mxu0 0.0
    %278 = vmatpush1.msra.mxu0 0.0
    %279 = vmatprep.subr.mxu0 0.0
    %280 = vmatpush1.msra.mxu0 0.0
    %281 = vmatprep.subr.mxu0 0.0
    %282 = vmatpush1.msra.mxu0 0.0
    %283 = vmatprep.subr.mxu0 0.0
    %284 = vmatpush1.msra.mxu0 0.0
    %285 = vmatprep.subr.mxu0 0.0
    %286 = vmatpush1.msra.mxu0 0.0
    %287 = vmatprep.subr.mxu0 0.0
    %288 = vmatpush1.msra.mxu0 0.0
    %289 = vmatprep.subr.mxu0 0.0
    %290 = vmatpush1.msra.mxu0 0.0
    %291 = vmatprep.subr.mxu0 0.0
    %292 = vmatpush1.msra.mxu0 0.0
    %293 = vmatprep.subr.mxu0 0.0
    %294 = vmatpush1.msra.mxu0 0.0
    %295 = vmatprep.subr.mxu0 0.0
    %296 = vmatpush1.msra.mxu0 0.0
    %297 = vmatprep.subr.mxu0 0.0
    %298 = vmatpush1.msra.mxu0 0.0
    %299 = vmatprep.subr.mxu0 0.0
    %300 = vmatpush1.msra.mxu0 0.0
    %301 = vmatprep.mubr.f32.mxu0 0.0
    %v302 = vand.u32 %v112, 4294901760
    %303 = vmatmul.mubr.f32.gmra.mrb[0].mxu0 %v302
    %v304 = vpop.f32.mrb[0].mxu0
    %v305 = vadd.f32 %v194, %v304
    %v306 = vpop.f32.mrb[0].mxu0
    %307 = vdwg.mxu0
    %308 = vmatprep.subr.mxu0 0.0
    %v309 = vand.u32 %v102, 4294901760
    %v310 = vsub.f32 %v102, %v309
    %311 = vmatpush1.msra.mxu0 %v310
    %312 = vmatprep.subr.mxu0 0.0
    %v313 = vand.u32 %v103, 4294901760
    %v314 = vsub.f32 %v103, %v313
    %315 = vmatpush1.msra.mxu0 %v314
    %316 = vmatprep.subr.mxu0 0.0
    %v317 = vand.u32 %v104, 4294901760
    %v318 = vsub.f32 %v104, %v317
    %319 = vmatpush1.msra.mxu0 %v318
    %320 = vmatprep.subr.mxu0 0.0
    %v321 = vand.u32 %v105, 4294901760
    %v322 = vsub.f32 %v105, %v321
    %323 = vmatpush1.msra.mxu0 %v322
    %324 = vmatprep.subr.mxu0 0.0
    %v325 = vand.u32 %v106, 4294901760
    %v326 = vsub.f32 %v106, %v325
    %327 = vmatpush1.msra.mxu0 %v326
    %328 = vmatprep.subr.mxu0 0.0
    %v329 = vand.u32 %v107, 4294901760
    %v330 = vsub.f32 %v107, %v329
    %331 = vmatpush1.msra.mxu0 %v330
    %332 = vmatprep.subr.mxu0 0.0
    %v333 = vand.u32 %v108, 4294901760
    %v334 = vsub.f32 %v108, %v333
    %335 = vmatpush1.msra.mxu0 %v334
    %336 = vmatprep.subr.mxu0 0.0
    %v337 = vand.u32 %v109, 4294901760
    %v338 = vsub.f32 %v109, %v337
    %339 = vmatpush1.msra.mxu0 %v338
    %340 = vmatprep.subr.mxu0 0.0
    %341 = vmatpush1.msra.mxu0 0.0
    %342 = vmatprep.subr.mxu0 0.0
    %343 = vmatpush1.msra.mxu0 0.0
    %344 = vmatprep.subr.mxu0 0.0
    %345 = vmatpush1.msra.mxu0 0.0
    %346 = vmatprep.subr.mxu0 0.0
    %347 = vmatpush1.msra.mxu0 0.0
    %348 = vmatprep.subr.mxu0 0.0
    %349 = vmatpush1.msra.mxu0 0.0
    %350 = vmatprep.subr.mxu0 0.0
    %351 = vmatpush1.msra.mxu0 0.0
    %352 = vmatprep.subr.mxu0 0.0
    %353 = vmatpush1.msra.mxu0 0.0
    %354 = vmatprep.subr.mxu0 0.0
    %355 = vmatpush1.msra.mxu0 0.0
    %356 = vmatprep.subr.mxu0 0.0
    %357 = vmatpush1.msra.mxu0 0.0
    %358 = vmatprep.subr.mxu0 0.0
    %359 = vmatpush1.msra.mxu0 0.0
    %360 = vmatprep.subr.mxu0 0.0
    %361 = vmatpush1.msra.mxu0 0.0
    %362 = vmatprep.subr.mxu0 0.0
    %363 = vmatpush1.msra.mxu0 0.0
    %364 = vmatprep.subr.mxu0 0.0
    %365 = vmatpush1.msra.mxu0 0.0
    %366 = vmatprep.subr.mxu0 0.0
    %367 = vmatpush1.msra.mxu0 0.0
    %368 = vmatprep.subr.mxu0 0.0
    %369 = vmatpush1.msra.mxu0 0.0
    %370 = vmatprep.subr.mxu0 0.0
    %371 = vmatpush1.msra.mxu0 0.0
    %372 = vmatprep.subr.mxu0 0.0
    %373 = vmatpush1.msra.mxu0 0.0
    %374 = vmatprep.subr.mxu0 0.0
    %375 = vmatpush1.msra.mxu0 0.0
    %376 = vmatprep.subr.mxu0 0.0
    %377 = vmatpush1.msra.mxu0 0.0
    %378 = vmatprep.subr.mxu0 0.0
    %379 = vmatpush1.msra.mxu0 0.0
    %380 = vmatprep.subr.mxu0 0.0
    %381 = vmatpush1.msra.mxu0 0.0
    %382 = vmatprep.subr.mxu0 0.0
    %383 = vmatpush1.msra.mxu0 0.0
    %384 = vmatprep.subr.mxu0 0.0
    %385 = vmatpush1.msra.mxu0 0.0
    %386 = vmatprep.subr.mxu0 0.0
    %387 = vmatpush1.msra.mxu0 0.0
    %388 = vmatprep.mubr.f32.mxu0 0.0
    %v389 = vand.u32 %v112, 4294901760
    %v390 = vsub.f32 %v112, %v389
    %391 = vmatmul.mubr.f32.gmra.mrb[0].mxu0 %v390
    %v392 = vpop.f32.mrb[0].mxu0
    %v393 = vadd.f32 %v305, %v392
    %v394 = vpop.f32.mrb[0].mxu0
    %395 = vdwg.mxu0
    %396 = vmatprep.subr.mxu0 0.0
    %v397 = vand.u32 %v102, 4294901760
    %398 = vmatpush1.msra.mxu0 %v397
    %399 = vmatprep.subr.mxu0 0.0
    %v400 = vand.u32 %v103, 4294901760
    %401 = vmatpush1.msra.mxu0 %v400
    %402 = vmatprep.subr.mxu0 0.0
    %v403 = vand.u32 %v104, 4294901760
    %404 = vmatpush1.msra.mxu0 %v403
    %405 = vmatprep.subr.mxu0 0.0
    %v406 = vand.u32 %v105, 4294901760
    %407 = vmatpush1.msra.mxu0 %v406
    %408 = vmatprep.subr.mxu0 0.0
    %v409 = vand.u32 %v106, 4294901760
    %410 = vmatpush1.msra.mxu0 %v409
    %411 = vmatprep.subr.mxu0 0.0
    %v412 = vand.u32 %v107, 4294901760
    %413 = vmatpush1.msra.mxu0 %v412
    %414 = vmatprep.subr.mxu0 0.0
    %v415 = vand.u32 %v108, 4294901760
    %416 = vmatpush1.msra.mxu0 %v415
    %417 = vmatprep.subr.mxu0 0.0
    %v418 = vand.u32 %v109, 4294901760
    %419 = vmatpush1.msra.mxu0 %v418
    %420 = vmatprep.subr.mxu0 0.0
    %421 = vmatpush1.msra.mxu0 0.0
    %422 = vmatprep.subr.mxu0 0.0
    %423 = vmatpush1.msra.mxu0 0.0
    %424 = vmatprep.subr.mxu0 0.0
    %425 = vmatpush1.msra.mxu0 0.0
    %426 = vmatprep.subr.mxu0 0.0
    %427 = vmatpush1.msra.mxu0 0.0
    %428 = vmatprep.subr.mxu0 0.0
    %429 = vmatpush1.msra.mxu0 0.0
    %430 = vmatprep.subr.mxu0 0.0
    %431 = vmatpush1.msra.mxu0 0.0
    %432 = vmatprep.subr.mxu0 0.0
    %433 = vmatpush1.msra.mxu0 0.0
    %434 = vmatprep.subr.mxu0 0.0
    %435 = vmatpush1.msra.mxu0 0.0
    %436 = vmatprep.subr.mxu0 0.0
    %437 = vmatpush1.msra.mxu0 0.0
    %438 = vmatprep.subr.mxu0 0.0
    %439 = vmatpush1.msra.mxu0 0.0
    %440 = vmatprep.subr.mxu0 0.0
    %441 = vmatpush1.msra.mxu0 0.0
    %442 = vmatprep.subr.mxu0 0.0
    %443 = vmatpush1.msra.mxu0 0.0
    %444 = vmatprep.subr.mxu0 0.0
    %445 = vmatpush1.msra.mxu0 0.0
    %446 = vmatprep.subr.mxu0 0.0
    %447 = vmatpush1.msra.mxu0 0.0
    %448 = vmatprep.subr.mxu0 0.0
    %449 = vmatpush1.msra.mxu0 0.0
    %450 = vmatprep.subr.mxu0 0.0
    %451 = vmatpush1.msra.mxu0 0.0
    %452 = vmatprep.subr.mxu0 0.0
    %453 = vmatpush1.msra.mxu0 0.0
    %454 = vmatprep.subr.mxu0 0.0
    %455 = vmatpush1.msra.mxu0 0.0
    %456 = vmatprep.subr.mxu0 0.0
    %457 = vmatpush1.msra.mxu0 0.0
    %458 = vmatprep.subr.mxu0 0.0
    %459 = vmatpush1.msra.mxu0 0.0
    %460 = vmatprep.subr.mxu0 0.0
    %461 = vmatpush1.msra.mxu0 0.0
    %462 = vmatprep.subr.mxu0 0.0
    %463 = vmatpush1.msra.mxu0 0.0
    %464 = vmatprep.subr.mxu0 0.0
    %465 = vmatpush1.msra.mxu0 0.0
    %466 = vmatprep.subr.mxu0 0.0
    %467 = vmatpush1.msra.mxu0 0.0
    %468 = vmatprep.mubr.f32.mxu0 0.0
    %v469 = vand.u32 %v112, 4294901760
    %v470 = vsub.f32 %v112, %v469
    %v471 = vand.u32 %v470, 4294901760
    %472 = vmatmul.mubr.f32.gmra.mrb[0].mxu0 %v471
    %v473 = vpop.f32.mrb[0].mxu0
    %v474 = vadd.f32 %v393, %v473
    %v475 = vpop.f32.mrb[0].mxu0
    %476 = vdwg.mxu0
    %477 = vmatprep.subr.mxu0 0.0
    %v478 = vand.u32 %v102, 4294901760
    %v479 = vsub.f32 %v102, %v478
    %v480 = vand.u32 %v479, 4294901760
    %481 = vmatpush1.msra.mxu0 %v480
    %482 = vmatprep.subr.mxu0 0.0
    %v483 = vand.u32 %v103, 4294901760
    %v484 = vsub.f32 %v103, %v483
    %v485 = vand.u32 %v484, 4294901760
    %486 = vmatpush1.msra.mxu0 %v485
    %487 = vmatprep.subr.mxu0 0.0
    %v488 = vand.u32 %v104, 4294901760
    %v489 = vsub.f32 %v104, %v488
    %v490 = vand.u32 %v489, 4294901760
    %491 = vmatpush1.msra.mxu0 %v490
    %492 = vmatprep.subr.mxu0 0.0
    %v493 = vand.u32 %v105, 4294901760
    %v494 = vsub.f32 %v105, %v493
    %v495 = vand.u32 %v494, 4294901760
    %496 = vmatpush1.msra.mxu0 %v495
    %497 = vmatprep.subr.mxu0 0.0
    %v498 = vand.u32 %v106, 4294901760
    %v499 = vsub.f32 %v106, %v498
    %v500 = vand.u32 %v499, 4294901760
    %501 = vmatpush1.msra.mxu0 %v500
    %502 = vmatprep.subr.mxu0 0.0
    %v503 = vand.u32 %v107, 4294901760
    %v504 = vsub.f32 %v107, %v503
    %v505 = vand.u32 %v504, 4294901760
    %506 = vmatpush1.msra.mxu0 %v505
    %507 = vmatprep.subr.mxu0 0.0
    %v508 = vand.u32 %v108, 4294901760
    %v509 = vsub.f32 %v108, %v508
    %v510 = vand.u32 %v509, 4294901760
    %511 = vmatpush1.msra.mxu0 %v510
    %512 = vmatprep.subr.mxu0 0.0
    %v513 = vand.u32 %v109, 4294901760
    %v514 = vsub.f32 %v109, %v513
    %v515 = vand.u32 %v514, 4294901760
    %516 = vmatpush1.msra.mxu0 %v515
    %517 = vmatprep.subr.mxu0 0.0
    %518 = vmatpush1.msra.mxu0 0.0
    %519 = vmatprep.subr.mxu0 0.0
    %520 = vmatpush1.msra.mxu0 0.0
    %521 = vmatprep.subr.mxu0 0.0
    %522 = vmatpush1.msra.mxu0 0.0
    %523 = vmatprep.subr.mxu0 0.0
    %524 = vmatpush1.msra.mxu0 0.0
    %525 = vmatprep.subr.mxu0 0.0
    %526 = vmatpush1.msra.mxu0 0.0
    %527 = vmatprep.subr.mxu0 0.0
    %528 = vmatpush1.msra.mxu0 0.0
    %529 = vmatprep.subr.mxu0 0.0
    %530 = vmatpush1.msra.mxu0 0.0
    %531 = vmatprep.subr.mxu0 0.0
    %532 = vmatpush1.msra.mxu0 0.0
    %533 = vmatprep.subr.mxu0 0.0
    %534 = vmatpush1.msra.mxu0 0.0
    %535 = vmatprep.subr.mxu0 0.0
    %536 = vmatpush1.msra.mxu0 0.0
    %537 = vmatprep.subr.mxu0 0.0
    %538 = vmatpush1.msra.mxu0 0.0
    %539 = vmatprep.subr.mxu0 0.0
    %540 = vmatpush1.msra.mxu0 0.0
    %541 = vmatprep.subr.mxu0 0.0
    %542 = vmatpush1.msra.mxu0 0.0
    %543 = vmatprep.subr.mxu0 0.0
    %544 = vmatpush1.msra.mxu0 0.0
    %545 = vmatprep.subr.mxu0 0.0
    %546 = vmatpush1.msra.mxu0 0.0
    %547 = vmatprep.subr.mxu0 0.0
    %548 = vmatpush1.msra.mxu0 0.0
    %549 = vmatprep.subr.mxu0 0.0
    %550 = vmatpush1.msra.mxu0 0.0
    %551 = vmatprep.subr.mxu0 0.0
    %552 = vmatpush1.msra.mxu0 0.0
    %553 = vmatprep.subr.mxu0 0.0
    %554 = vmatpush1.msra.mxu0 0.0
    %555 = vmatprep.subr.mxu0 0.0
    %556 = vmatpush1.msra.mxu0 0.0
    %557 = vmatprep.subr.mxu0 0.0
    %558 = vmatpush1.msra.mxu0 0.0
    %559 = vmatprep.subr.mxu0 0.0
    %560 = vmatpush1.msra.mxu0 0.0
    %561 = vmatprep.subr.mxu0 0.0
    %562 = vmatpush1.msra.mxu0 0.0
    %563 = vmatprep.subr.mxu0 0.0
    %564 = vmatpush1.msra.mxu0 0.0
    %565 = vmatprep.mubr.f32.mxu0 0.0
    %v566 = vand.u32 %v112, 4294901760
    %567 = vmatmul.mubr.f32.gmra.mrb[0].mxu0 %v566
    %v568 = vpop.f32.mrb[0].mxu0
    %v569 = vadd.f32 %v474, %v568
    %v570 = vpop.f32.mrb[0].mxu0
    %571 = vdwg.mxu0
    %572 = vmatprep.subr.mxu0 0.0
    %v573 = vand.u32 %v102, 4294901760
    %574 = vmatpush1.msra.mxu0 %v573
    %575 = vmatprep.subr.mxu0 0.0
    %v576 = vand.u32 %v103, 4294901760
    %577 = vmatpush1.msra.mxu0 %v576
    %578 = vmatprep.subr.mxu0 0.0
    %v579 = vand.u32 %v104, 4294901760
    %580 = vmatpush1.msra.mxu0 %v579
    %581 = vmatprep.subr.mxu0 0.0
    %v582 = vand.u32 %v105, 4294901760
    %583 = vmatpush1.msra.mxu0 %v582
    %584 = vmatprep.subr.mxu0 0.0
    %v585 = vand.u32 %v106, 4294901760
    %586 = vmatpush1.msra.mxu0 %v585
    %587 = vmatprep.subr.mxu0 0.0
    %v588 = vand.u32 %v107, 4294901760
    %589 = vmatpush1.msra.mxu0 %v588
    %590 = vmatprep.subr.mxu0 0.0
    %v591 = vand.u32 %v108, 4294901760
    %592 = vmatpush1.msra.mxu0 %v591
    %593 = vmatprep.subr.mxu0 0.0
    %v594 = vand.u32 %v109, 4294901760
    %595 = vmatpush1.msra.mxu0 %v594
    %596 = vmatprep.subr.mxu0 0.0
    %597 = vmatpush1.msra.mxu0 0.0
    %598 = vmatprep.subr.mxu0 0.0
    %599 = vmatpush1.msra.mxu0 0.0
    %600 = vmatprep.subr.mxu0 0.0
    %601 = vmatpush1.msra.mxu0 0.0
    %602 = vmatprep.subr.mxu0 0.0
    %603 = vmatpush1.msra.mxu0 0.0
    %604 = vmatprep.subr.mxu0 0.0
    %605 = vmatpush1.msra.mxu0 0.0
    %606 = vmatprep.subr.mxu0 0.0
    %607 = vmatpush1.msra.mxu0 0.0
    %608 = vmatprep.subr.mxu0 0.0
    %609 = vmatpush1.msra.mxu0 0.0
    %610 = vmatprep.subr.mxu0 0.0
    %611 = vmatpush1.msra.mxu0 0.0
    %612 = vmatprep.subr.mxu0 0.0
    %613 = vmatpush1.msra.mxu0 0.0
    %614 = vmatprep.subr.mxu0 0.0
    %615 = vmatpush1.msra.mxu0 0.0
    %616 = vmatprep.subr.mxu0 0.0
    %617 = vmatpush1.msra.mxu0 0.0
    %618 = vmatprep.subr.mxu0 0.0
    %619 = vmatpush1.msra.mxu0 0.0
    %620 = vmatprep.subr.mxu0 0.0
    %621 = vmatpush1.msra.mxu0 0.0
    %622 = vmatprep.subr.mxu0 0.0
    %623 = vmatpush1.msra.mxu0 0.0
    %624 = vmatprep.subr.mxu0 0.0
    %625 = vmatpush1.msra.mxu0 0.0
    %626 = vmatprep.subr.mxu0 0.0
    %627 = vmatpush1.msra.mxu0 0.0
    %628 = vmatprep.subr.mxu0 0.0
    %629 = vmatpush1.msra.mxu0 0.0
    %630 = vmatprep.subr.mxu0 0.0
    %631 = vmatpush1.msra.mxu0 0.0
    %632 = vmatprep.subr.mxu0 0.0
    %633 = vmatpush1.msra.mxu0 0.0
    %634 = vmatprep.subr.mxu0 0.0
    %635 = vmatpush1.msra.mxu0 0.0
    %636 = vmatprep.subr.mxu0 0.0
    %637 = vmatpush1.msra.mxu0 0.0
    %638 = vmatprep.subr.mxu0 0.0
    %639 = vmatpush1.msra.mxu0 0.0
    %640 = vmatprep.subr.mxu0 0.0
    %641 = vmatpush1.msra.mxu0 0.0
    %642 = vmatprep.subr.mxu0 0.0
    %643 = vmatpush1.msra.mxu0 0.0
    %644 = vmatprep.mubr.f32.mxu0 0.0
    %v645 = vand.u32 %v112, 4294901760
    %646 = vmatmul.mubr.f32.gmra.mrb[0].mxu0 %v645
    %v647 = vpop.f32.mrb[0].mxu0
    %v648 = vadd.f32 %v569, %v647
    %v649 = vpop.f32.mrb[0].mxu0
    %650 = vdwg.mxu0
    %v651 = vsub.f32 0.0, %v648
    %v652 = vand.u32 2147483647, %v651
    %653 = vadd.xlane.f32.xlu0 %v652
    %v654 = vpop.xlane.xlu0 %653
    %v655 = vrot.slane %v654, 4
    %v656 = vadd.f32 %v654, %v655
    %v657 = vrot.slane %v656, 2
    %v658 = vadd.f32 %v656, %v657
    %v659 = vrot.slane %v658, 1
    %v660 = vadd.f32 %v658, %v659
    %v661 = vmul.f32 %v660, 0.125
    %v662 = vsub.f32 %v654, %v661
    %v663 = vmul.f32 %v662, %v662
    %v664 = vrot.slane %v663, 4
    %v665 = vadd.f32 %v663, %v664
    %v666 = vrot.slane %v665, 2
    %v667 = vadd.f32 %v665, %v666
    %v668 = vrot.slane %v667, 1
    %v669 = vadd.f32 %v667, %v668
    %v670 = vmul.f32 %v669, 0.14285715
    %v671 = vrsqrt.pop %v670
    %v672 = vmul.f32 %v670, %v671
    %vm673 = vcmp.eq.f32.partialorder %v670, inf
    %v674 = vsel %vm673, %v670, %v672
    %vm675 = vcmp.eq.f32.partialorder %v670, 0.0
    %v676 = vand.u32 %v670, 2147483648
    %v677 = vsel %vm675, %v676, %v674
    %v678 = vrcp.pop %v677
    %v679 = vmul.f32 1.0, %v678
    %v680 = vmul.f32 %v662, %v679
    %v681 = vlaneseq
    %v682 = vshrl.u32 %v681, 7
    %v683 = vsub.s32 0, %v682
    %v684 = vrot.slane %v88, %v683
    %v685 = vmul.f32 %v680, %v684
    %v686 = vpack.c.bf16 %v96, %v96
    %v691 = vunpack.c.l.b16 %v80
    %v692 = vunpack.c.l.b16 %v81
    %v693 = vunpack.c.l.b16 %v82
    %v694 = vunpack.c.l.b16 %v83
    %v695 = vpack.c.b16 %v692, %v691
    %v696 = vpack.c.b16 %v694, %v693
    %vm699 = vcmask 261120
    %v701 = vsel %vm699, %v686, 0
    %703 = vmatprep.subr.bf16.mxu0 0
    %704 = vmatpush1.bf16.msra.mxu0 %v695
    %705 = vmatprep.subr.bf16.mxu0 0
    %706 = vmatpush1.bf16.msra.mxu0 %v696
    %707 = vmatprep.subr.bf16.mxu0 0
    %708 = vmatpush1.bf16.msra.mxu0 0
    %709 = vmatprep.subr.bf16.mxu0 0
    %710 = vmatpush1.bf16.msra.mxu0 0
    %711 = vmatprep.subr.bf16.mxu0 0
    %712 = vmatpush1.bf16.msra.mxu0 0
    %713 = vmatprep.subr.bf16.mxu0 0
    %714 = vmatpush1.bf16.msra.mxu0 0
    %715 = vmatprep.subr.bf16.mxu0 0
    %716 = vmatpush1.bf16.msra.mxu0 0
    %717 = vmatprep.subr.bf16.mxu0 0
    %718 = vmatpush1.bf16.msra.mxu0 0
    %719 = vmatprep.subr.bf16.mxu0 0
    %720 = vmatpush1.bf16.msra.mxu0 0
    %721 = vmatprep.subr.bf16.mxu0 0
    %722 = vmatpush1.bf16.msra.mxu0 0
    %723 = vmatprep.subr.bf16.mxu0 0
    %724 = vmatpush1.bf16.msra.mxu0 0
    %725 = vmatprep.subr.bf16.mxu0 0
    %726 = vmatpush1.bf16.msra.mxu0 0
    %727 = vmatprep.subr.bf16.mxu0 0
    %728 = vmatpush1.bf16.msra.mxu0 0
    %729 = vmatprep.subr.bf16.mxu0 0
    %730 = vmatpush1.bf16.msra.mxu0 0
    %731 = vmatprep.subr.bf16.mxu0 0
    %732 = vmatpush1.bf16.msra.mxu0 0
    %733 = vmatprep.subr.bf16.mxu0 0
    %734 = vmatpush1.bf16.msra.mxu0 0
    %735 = vmatprep.mubr.bf16.mxu0 0
    %736 = vmatmul.mubr.bf16.gmra.mrb[0].mxu0 %v701
    %v737 = vpop.f32.mrb[0].mxu0
    %v738 = vadd.f32 0.0, %v737
    %v739 = vpop.f32.mrb[0].mxu0
    %v740 = vpop.f32.mrb[0].mxu0
    %v741 = vpop.f32.mrb[0].mxu0
    %742 = vdwg.mxu0
    %v743 = vadd.f32 %v685, %v738
    %v744 = vlaneseq
    %v745 = vshrl.u32 %v744, 7
    %v746 = vsub.s32 0, %v745
    %v747 = vrot.slane %v89, %v746
    %v748 = vadd.f32 %v743, %v747
    %v749 = vxor.u32 %v748, 2147483648
    %v750 = vmul.f32 %v749, 1.442695
    %v751 = vpow.pop %v750
    %v752 = vadd.f32 %v751, 1.0
    %v753 = vrcp.pop %v752
    %v754 = vmul.f32 1.0, %v753
    %v755 = vmul.f32 %v754, 2.0
    %v756 = vsub.f32 %v755, 1.0
    %758 = vrot.lane.b32.xlu0 %v101, 32
    %v759 = vpop.permute.xlu0 %758
    %v761 = vmul.f32 %v754, %v759
    %763 = vrot.lane.b32.xlu0 %v756, 64
    %v764 = vpop.permute.xlu0 %763
    %v766 = vmul.f32 %v754, %v764
    %768 = vrot.lane.b32.xlu0 %v766, 32
    %v769 = vpop.permute.xlu0 %768
    %v771 = vadd.f32 %v761, %v769
    %v772 = vtanh.pop %v771
    %774 = vrot.lane.b32.xlu0 %v772, 64
    %v775 = vpop.permute.xlu0 %774
    %v777 = vmul.f32 %v754, %v775
    %v778 = vpack.c.bf16 %v771, %v771
    %v779 = vlaneseq
    %v780 = vshrl.u32 %v779, 7
    %v781 = vsub.s32 0, %v780
    %v782 = vrot.slane %v90, %v781
    %784 = vrot.lane.b32.xlu0 %v778, 96
    %v785 = vpop.permute.xlu0 %784
    %v790 = vunpack.c.l.b16 %v84
    %v791 = vunpack.c.l.b16 %v85
    %v792 = vunpack.c.l.b16 %v86
    %v793 = vunpack.c.l.b16 %v87
    %v794 = vpack.c.b16 %v791, %v790
    %v795 = vpack.c.b16 %v793, %v792
    %v799 = vsel %vm699, %v785, 0
    %801 = vmatprep.subr.bf16.mxu0 0
    %802 = vmatpush1.bf16.msra.mxu0 %v794
    %803 = vmatprep.subr.bf16.mxu0 0
    %804 = vmatpush1.bf16.msra.mxu0 %v795
    %805 = vmatprep.subr.bf16.mxu0 0
    %806 = vmatpush1.bf16.msra.mxu0 0
    %807 = vmatprep.subr.bf16.mxu0 0
    %808 = vmatpush1.bf16.msra.mxu0 0
    %809 = vmatprep.subr.bf16.mxu0 0
    %810 = vmatpush1.bf16.msra.mxu0 0
    %811 = vmatprep.subr.bf16.mxu0 0
    %812 = vmatpush1.bf16.msra.mxu0 0
    %813 = vmatprep.subr.bf16.mxu0 0
    %814 = vmatpush1.bf16.msra.mxu0 0
    %815 = vmatprep.subr.bf16.mxu0 0
    %816 = vmatpush1.bf16.msra.mxu0 0
    %817 = vmatprep.subr.bf16.mxu0 0
    %818 = vmatpush1.bf16.msra.mxu0 0
    %819 = vmatprep.subr.bf16.mxu0 0
    %820 = vmatpush1.bf16.msra.mxu0 0
    %821 = vmatprep.subr.bf16.mxu0 0
    %822 = vmatpush1.bf16.msra.mxu0 0
    %823 = vmatprep.subr.bf16.mxu0 0
    %824 = vmatpush1.bf16.msra.mxu0 0
    %825 = vmatprep.subr.bf16.mxu0 0
    %826 = vmatpush1.bf16.msra.mxu0 0
    %827 = vmatprep.subr.bf16.mxu0 0
    %828 = vmatpush1.bf16.msra.mxu0 0
    %829 = vmatprep.subr.bf16.mxu0 0
    %830 = vmatpush1.bf16.msra.mxu0 0
    %831 = vmatprep.subr.bf16.mxu0 0
    %832 = vmatpush1.bf16.msra.mxu0 0
    %833 = vmatprep.mubr.bf16.mxu0 0
    %834 = vmatmul.mubr.bf16.gmra.mrb[0].mxu0 %v799
    %v835 = vpop.f32.mrb[0].mxu0
    %v836 = vadd.f32 %v782, %v835
    %v837 = vpop.f32.mrb[0].mxu0
    %v838 = vpop.f32.mrb[0].mxu0
    %v839 = vpop.f32.mrb[0].mxu0
    %840 = vdwg.mxu0
    %v841 = vmax.f32 %v836, 0.0
    %v842 = vpack.c.bf16 %v841, %v841
    %v843 = vlaneseq
    %v844 = vshrl.u32 %v843, 7
    %v845 = vsub.s32 0, %v844
    %v846 = vrot.slane %v91, %v845
    %847 = vrot.lane.b32.xlu0 %v794, 96
    %v848 = vpop.permute.xlu0 %847
    %849 = vrot.lane.b32.xlu0 %v795, 96
    %v850 = vpop.permute.xlu0 %849
    %v854 = vsel %vm699, %v842, 0
    %856 = vmatprep.subr.bf16.mxu0 0
    %857 = vmatpush1.bf16.msra.mxu0 %v848
    %858 = vmatprep.subr.bf16.mxu0 0
    %859 = vmatpush1.bf16.msra.mxu0 %v850
    %860 = vmatprep.subr.bf16.mxu0 0
    %861 = vmatpush1.bf16.msra.mxu0 0
    %862 = vmatprep.subr.bf16.mxu0 0
    %863 = vmatpush1.bf16.msra.mxu0 0
    %864 = vmatprep.subr.bf16.mxu0 0
    %865 = vmatpush1.bf16.msra.mxu0 0
    %866 = vmatprep.subr.bf16.mxu0 0
    %867 = vmatpush1.bf16.msra.mxu0 0
    %868 = vmatprep.subr.bf16.mxu0 0
    %869 = vmatpush1.bf16.msra.mxu0 0
    %870 = vmatprep.subr.bf16.mxu0 0
    %871 = vmatpush1.bf16.msra.mxu0 0
    %872 = vmatprep.subr.bf16.mxu0 0
    %873 = vmatpush1.bf16.msra.mxu0 0
    %874 = vmatprep.subr.bf16.mxu0 0
    %875 = vmatpush1.bf16.msra.mxu0 0
    %876 = vmatprep.subr.bf16.mxu0 0
    %877 = vmatpush1.bf16.msra.mxu0 0
    %878 = vmatprep.subr.bf16.mxu0 0
    %879 = vmatpush1.bf16.msra.mxu0 0
    %880 = vmatprep.subr.bf16.mxu0 0
    %881 = vmatpush1.bf16.msra.mxu0 0
    %882 = vmatprep.subr.bf16.mxu0 0
    %883 = vmatpush1.bf16.msra.mxu0 0
    %884 = vmatprep.subr.bf16.mxu0 0
    %885 = vmatpush1.bf16.msra.mxu0 0
    %886 = vmatprep.subr.bf16.mxu0 0
    %887 = vmatpush1.bf16.msra.mxu0 0
    %888 = vmatprep.mubr.bf16.mxu0 0
    %889 = vmatmul.mubr.bf16.gmra.mrb[0].mxu0 %v854
    %v890 = vpop.f32.mrb[0].mxu0
    %v891 = vadd.f32 %v846, %v890
    %v892 = vpop.f32.mrb[0].mxu0
    %v893 = vpop.f32.mrb[0].mxu0
    %v894 = vpop.f32.mrb[0].mxu0
    %895 = vdwg.mxu0
    %v896 = vmax.f32 %v891, 0.0
    %v897 = vand.u32 2147483647, %v891
    %v898 = vsub.f32 0.0, %v897
    %v899 = vmul.f32 %v898, 1.442695
    %v900 = vpow.pop %v899
    %v901 = vadd.f32 %v900, 1.0
    %v902 = vlog2.pop %v901
    %v903 = vmul.f32 %v902, 0.6931472
    %v904 = vmul.f32 -0.5, %v900
    %v905 = vadd.f32 %v904, 1.0
    %v906 = vmul.f32 %v905, %v900
    %v907 = vand.u32 2147483647, %v900
    %vm908 = vcmp.lt.f32.partialorder %v907, 0.0004427343
    %v909 = vsel %vm908, %v906, %v903
    %v910 = vadd.f32 %v896, %v909
    %912 = vset.pattern.permute.xlu0 0
    %913 = vperm.xlu0 %912, %v910
    %v914 = vpop.permute.xlu0 %913
    %v916 = vmul.f32 %v914, %v651
    %v917 = vsub.f32 0.0, %v916
    %918 = vset.pattern.permute.xlu0 1
    %919 = vperm.xlu0 %918, %v910
    %v920 = vpop.permute.xlu0 %919
    %v922 = vsub.f32 %v917, %v920
    %v923 = vmax.f32 %v922, 0.0
    %v924 = vsub.f32 0.0, %v917
    %v925 = vsub.f32 %v924, %v920
    %v926 = vmax.f32 %v925, 0.0
    %v927 = vsub.f32 %v923, %v926
    %v928 = vpack.c.bf16 %v927, %v927
    %v929 = vld [vmem:[#allocation5] sm:$0xf]
    %v930 = vld [vmem:[#allocation5 + $0x4] sm:$0xf]
    %v931 = vld [vmem:[#allocation5 + $0x8] sm:$0xf]
    %v932 = vld [vmem:[#allocation5 + $0xc] sm:$0xf]
    %v933 = vld [vmem:[#allocation5 + $0x10] sm:$0xf]
    %v934 = vld [vmem:[#allocation5 + $0x14] sm:$0xf]
    %v935 = vld [vmem:[#allocation5 + $0x18] sm:$0xf]
    %v936 = vld [vmem:[#allocation5 + $0x1c] sm:$0xf]
    %v937 = vld [vmem:[#allocation5 + $0x20] sm:$0xf]
    %v938 = vld [vmem:[#allocation5 + $0x24] sm:$0xf]
    %v939 = vld [vmem:[#allocation5 + $0x28] sm:$0xf]
    %v940 = vld [vmem:[#allocation5 + $0x2c] sm:$0xf]
    %v941 = vld [vmem:[#allocation5 + $0x30] sm:$0xf]
    %v942 = vld [vmem:[#allocation5 + $0x34] sm:$0xf]
    %v943 = vld [vmem:[#allocation5 + $0x38] sm:$0xf]
    %v944 = vld [vmem:[#allocation5 + $0x3c] sm:$0xf]
    %v961 = vunpack.c.l.b16 %v929
    %v962 = vunpack.c.l.b16 %v930
    %v963 = vunpack.c.l.b16 %v931
    %v964 = vunpack.c.l.b16 %v932
    %v965 = vunpack.c.l.b16 %v933
    %v966 = vunpack.c.l.b16 %v934
    %v967 = vunpack.c.l.b16 %v935
    %v968 = vunpack.c.l.b16 %v936
    %v969 = vunpack.c.l.b16 %v937
    %v970 = vunpack.c.l.b16 %v938
    %v971 = vunpack.c.l.b16 %v939
    %v972 = vunpack.c.l.b16 %v940
    %v973 = vunpack.c.l.b16 %v941
    %v974 = vunpack.c.l.b16 %v942
    %v975 = vunpack.c.l.b16 %v943
    %v976 = vunpack.c.l.b16 %v944
    %v977 = vpack.c.b16 %v962, %v961
    %v978 = vpack.c.b16 %v964, %v963
    %v979 = vpack.c.b16 %v966, %v965
    %v980 = vpack.c.b16 %v968, %v967
    %v981 = vpack.c.b16 %v970, %v969
    %v982 = vpack.c.b16 %v972, %v971
    %v983 = vpack.c.b16 %v974, %v973
    %v984 = vpack.c.b16 %v976, %v975
    %993 = vmatprep.subr.bf16.mxu0 0
    %994 = vmatpush1.bf16.msra.mxu0 %v977
    %995 = vmatprep.subr.bf16.mxu0 0
    %996 = vmatpush1.bf16.msra.mxu0 %v978
    %997 = vmatprep.subr.bf16.mxu0 0
    %998 = vmatpush1.bf16.msra.mxu0 %v979
    %999 = vmatprep.subr.bf16.mxu0 0
    %1000 = vmatpush1.bf16.msra.mxu0 %v980
    %1001 = vmatprep.subr.bf16.mxu0 0
    %1002 = vmatpush1.bf16.msra.mxu0 %v981
    %1003 = vmatprep.subr.bf16.mxu0 0
    %1004 = vmatpush1.bf16.msra.mxu0 %v982
    %1005 = vmatprep.subr.bf16.mxu0 0
    %1006 = vmatpush1.bf16.msra.mxu0 %v983
    %1007 = vmatprep.subr.bf16.mxu0 0
    %1008 = vmatpush1.bf16.msra.mxu0 %v984
    %1009 = vmatprep.subr.bf16.mxu0 0
    %1010 = vmatpush1.bf16.msra.mxu0 0
    %1011 = vmatprep.subr.bf16.mxu0 0
    %1012 = vmatpush1.bf16.msra.mxu0 0
    %1013 = vmatprep.subr.bf16.mxu0 0
    %1014 = vmatpush1.bf16.msra.mxu0 0
    %1015 = vmatprep.subr.bf16.mxu0 0
    %1016 = vmatpush1.bf16.msra.mxu0 0
    %1017 = vmatprep.subr.bf16.mxu0 0
    %1018 = vmatpush1.bf16.msra.mxu0 0
    %1019 = vmatprep.subr.bf16.mxu0 0
    %1020 = vmatpush1.bf16.msra.mxu0 0
    %1021 = vmatprep.subr.bf16.mxu0 0
    %1022 = vmatpush1.bf16.msra.mxu0 0
    %1023 = vmatprep.subr.bf16.mxu0 0
    %1024 = vmatpush1.bf16.msra.mxu0 0
    %1025 = vmatprep.mubr.bf16.mxu0 0
    %1026 = vmatmul.mubr.bf16.gmra.mrb[0].mxu0 %v928
    %v1027 = vpop.f32.mrb[0].mxu0
    %v1028 = vadd.f32 0.0, %v1027
    %v1029 = vpop.f32.mrb[0].mxu0
    %v1030 = vpop.f32.mrb[0].mxu0
    %v1031 = vpop.f32.mrb[0].mxu0
    %1032 = vdwg.mxu0
    %v1033 = vsub.f32 %v1028, %v648
    %v1034 = vand.u32 2147483647, %v1033
    %1035 = vadd.xlane.f32.xlu0 %v1034
    %v1036 = vpop.xlane.xlu0 %1035
    %v1037 = vsub.f32 %v1036, %v661
    %v1038 = vmul.f32 %v1037, %v679
    %v1039 = vmul.f32 %v1038, %v684
    %v1040 = vpack.c.bf16 %v777, %v777
    %1042 = vrot.lane.b32.xlu0 %v1040, 32
    %v1043 = vpop.permute.xlu0 %1042
    %v1045 = vsel %vm699, %v1043, 0
    %1047 = vmatprep.subr.bf16.mxu0 0
    %1048 = vmatpush1.bf16.msra.mxu0 %v695
    %1049 = vmatprep.subr.bf16.mxu0 0
    %1050 = vmatpush1.bf16.msra.mxu0 %v696
    %1051 = vmatprep.subr.bf16.mxu0 0
    %1052 = vmatpush1.bf16.msra.mxu0 0
    %1053 = vmatprep.subr.bf16.mxu0 0
    %1054 = vmatpush1.bf16.msra.mxu0 0
    %1055 = vmatprep.subr.bf16.mxu0 0
    %1056 = vmatpush1.bf16.msra.mxu0 0
    %1057 = vmatprep.subr.bf16.mxu0 0
    %1058 = vmatpush1.bf16.msra.mxu0 0
    %1059 = vmatprep.subr.bf16.mxu0 0
    %1060 = vmatpush1.bf16.msra.mxu0 0
    %1061 = vmatprep.subr.bf16.mxu0 0
    %1062 = vmatpush1.bf16.msra.mxu0 0
    %1063 = vmatprep.subr.bf16.mxu0 0
    %1064 = vmatpush1.bf16.msra.mxu0 0
    %1065 = vmatprep.subr.bf16.mxu0 0
    %1066 = vmatpush1.bf16.msra.mxu0 0
    %1067 = vmatprep.subr.bf16.mxu0 0
    %1068 = vmatpush1.bf16.msra.mxu0 0
    %1069 = vmatprep.subr.bf16.mxu0 0
    %1070 = vmatpush1.bf16.msra.mxu0 0
    %1071 = vmatprep.subr.bf16.mxu0 0
    %1072 = vmatpush1.bf16.msra.mxu0 0
    %1073 = vmatprep.subr.bf16.mxu0 0
    %1074 = vmatpush1.bf16.msra.mxu0 0
    %1075 = vmatprep.subr.bf16.mxu0 0
    %1076 = vmatpush1.bf16.msra.mxu0 0
    %1077 = vmatprep.subr.bf16.mxu0 0
    %1078 = vmatpush1.bf16.msra.mxu0 0
    %1079 = vmatprep.mubr.bf16.mxu0 0
    %1080 = vmatmul.mubr.bf16.gmra.mrb[0].mxu0 %v1045
    %v1081 = vpop.f32.mrb[0].mxu0
    %v1082 = vadd.f32 0.0, %v1081
    %v1083 = vpop.f32.mrb[0].mxu0
    %v1084 = vpop.f32.mrb[0].mxu0
    %v1085 = vpop.f32.mrb[0].mxu0
    %1086 = vdwg.mxu0
    %v1087 = vadd.f32 %v1039, %v1082
    %v1088 = vadd.f32 %v1087, %v747
    %v1089 = vxor.u32 %v1088, 2147483648
    %v1090 = vmul.f32 %v1089, 1.442695
    %v1091 = vpow.pop %v1090
    %v1092 = vadd.f32 %v1091, 1.0
    %v1093 = vrcp.pop %v1092
    %v1094 = vmul.f32 1.0, %v1093
    %v1095 = vmul.f32 %v1094, 2.0
    %v1096 = vsub.f32 %v1095, 1.0
    %v1097 = vmul.f32 %v1094, %v771
    %1099 = vrot.lane.b32.xlu0 %v1096, 64
    %v1100 = vpop.permute.xlu0 %1099
    %v1102 = vmul.f32 %v1094, %v1100
    %1104 = vrot.lane.b32.xlu0 %v1102, 32
    %v1105 = vpop.permute.xlu0 %1104
    %v1107 = vadd.f32 %v1097, %v1105
    %v1108 = vtanh.pop %v1107
    %1110 = vrot.lane.b32.xlu0 %v1108, 64
    %v1111 = vpop.permute.xlu0 %1110
    %v1113 = vmul.f32 %v1094, %v1111
    %v1114 = vpack.c.bf16 %v1107, %v1107
    %1116 = vrot.lane.b32.xlu0 %v1114, 96
    %v1117 = vpop.permute.xlu0 %1116
    %v1119 = vsel %vm699, %v1117, 0
    %1121 = vmatprep.subr.bf16.mxu0 0
    %1122 = vmatpush1.bf16.msra.mxu0 %v794
    %1123 = vmatprep.subr.bf16.mxu0 0
    %1124 = vmatpush1.bf16.msra.mxu0 %v795
    %1125 = vmatprep.subr.bf16.mxu0 0
    %1126 = vmatpush1.bf16.msra.mxu0 0
    %1127 = vmatprep.subr.bf16.mxu0 0
    %1128 = vmatpush1.bf16.msra.mxu0 0
    %1129 = vmatprep.subr.bf16.mxu0 0
    %1130 = vmatpush1.bf16.msra.mxu0 0
    %1131 = vmatprep.subr.bf16.mxu0 0
    %1132 = vmatpush1.bf16.msra.mxu0 0
    %1133 = vmatprep.subr.bf16.mxu0 0
    %1134 = vmatpush1.bf16.msra.mxu0 0
    %1135 = vmatprep.subr.bf16.mxu0 0
    %1136 = vmatpush1.bf16.msra.mxu0 0
    %1137 = vmatprep.subr.bf16.mxu0 0
    %1138 = vmatpush1.bf16.msra.mxu0 0
    %1139 = vmatprep.subr.bf16.mxu0 0
    %1140 = vmatpush1.bf16.msra.mxu0 0
    %1141 = vmatprep.subr.bf16.mxu0 0
    %1142 = vmatpush1.bf16.msra.mxu0 0
    %1143 = vmatprep.subr.bf16.mxu0 0
    %1144 = vmatpush1.bf16.msra.mxu0 0
    %1145 = vmatprep.subr.bf16.mxu0 0
    %1146 = vmatpush1.bf16.msra.mxu0 0
    %1147 = vmatprep.subr.bf16.mxu0 0
    %1148 = vmatpush1.bf16.msra.mxu0 0
    %1149 = vmatprep.subr.bf16.mxu0 0
    %1150 = vmatpush1.bf16.msra.mxu0 0
    %1151 = vmatprep.subr.bf16.mxu0 0
    %1152 = vmatpush1.bf16.msra.mxu0 0
    %1153 = vmatprep.mubr.bf16.mxu0 0
    %1154 = vmatmul.mubr.bf16.gmra.mrb[0].mxu0 %v1119
    %v1155 = vpop.f32.mrb[0].mxu0
    %v1156 = vadd.f32 %v782, %v1155
    %v1157 = vpop.f32.mrb[0].mxu0
    %v1158 = vpop.f32.mrb[0].mxu0
    %v1159 = vpop.f32.mrb[0].mxu0
    %1160 = vdwg.mxu0
    %v1161 = vmax.f32 %v1156, 0.0
    %v1162 = vpack.c.bf16 %v1161, %v1161
    %v1164 = vsel %vm699, %v1162, 0
    %1166 = vmatprep.subr.bf16.mxu0 0
    %1167 = vmatpush1.bf16.msra.mxu0 %v848
    %1168 = vmatprep.subr.bf16.mxu0 0
    %1169 = vmatpush1.bf16.msra.mxu0 %v850
    %1170 = vmatprep.subr.bf16.mxu0 0
    %1171 = vmatpush1.bf16.msra.mxu0 0
    %1172 = vmatprep.subr.bf16.mxu0 0
    %1173 = vmatpush1.bf16.msra.mxu0 0
    %1174 = vmatprep.subr.bf16.mxu0 0
    %1175 = vmatpush1.bf16.msra.mxu0 0
    %1176 = vmatprep.subr.bf16.mxu0 0
    %1177 = vmatpush1.bf16.msra.mxu0 0
    %1178 = vmatprep.subr.bf16.mxu0 0
    %1179 = vmatpush1.bf16.msra.mxu0 0
    %1180 = vmatprep.subr.bf16.mxu0 0
    %1181 = vmatpush1.bf16.msra.mxu0 0
    %1182 = vmatprep.subr.bf16.mxu0 0
    %1183 = vmatpush1.bf16.msra.mxu0 0
    %1184 = vmatprep.subr.bf16.mxu0 0
    %1185 = vmatpush1.bf16.msra.mxu0 0
    %1186 = vmatprep.subr.bf16.mxu0 0
    %1187 = vmatpush1.bf16.msra.mxu0 0
    %1188 = vmatprep.subr.bf16.mxu0 0
    %1189 = vmatpush1.bf16.msra.mxu0 0
    %1190 = vmatprep.subr.bf16.mxu0 0
    %1191 = vmatpush1.bf16.msra.mxu0 0
    %1192 = vmatprep.subr.bf16.mxu0 0
    %1193 = vmatpush1.bf16.msra.mxu0 0
    %1194 = vmatprep.subr.bf16.mxu0 0
    %1195 = vmatpush1.bf16.msra.mxu0 0
    %1196 = vmatprep.subr.bf16.mxu0 0
    %1197 = vmatpush1.bf16.msra.mxu0 0
    %1198 = vmatprep.mubr.bf16.mxu0 0
    %1199 = vmatmul.mubr.bf16.gmra.mrb[0].mxu0 %v1164
    %v1200 = vpop.f32.mrb[0].mxu0
    %v1201 = vadd.f32 %v846, %v1200
    %v1202 = vpop.f32.mrb[0].mxu0
    %v1203 = vpop.f32.mrb[0].mxu0
    %v1204 = vpop.f32.mrb[0].mxu0
    %1205 = vdwg.mxu0
    %v1206 = vmax.f32 %v1201, 0.0
    %v1207 = vand.u32 2147483647, %v1201
    %v1208 = vsub.f32 0.0, %v1207
    %v1209 = vmul.f32 %v1208, 1.442695
    %v1210 = vpow.pop %v1209
    %v1211 = vadd.f32 %v1210, 1.0
    %v1212 = vlog2.pop %v1211
    %v1213 = vmul.f32 %v1212, 0.6931472
    %v1214 = vmul.f32 -0.5, %v1210
    %v1215 = vadd.f32 %v1214, 1.0
    %v1216 = vmul.f32 %v1215, %v1210
    %v1217 = vand.u32 2147483647, %v1210
    %vm1218 = vcmp.lt.f32.partialorder %v1217, 0.0004427343
    %v1219 = vsel %vm1218, %v1216, %v1213
    %v1220 = vadd.f32 %v1206, %v1219
    %1222 = vset.pattern.permute.xlu0 0
    %1223 = vperm.xlu0 %1222, %v1220
    %v1224 = vpop.permute.xlu0 %1223
    %v1226 = vmul.f32 %v1224, %v1033
    %v1227 = vsub.f32 %v927, %v1226
    %1228 = vset.pattern.permute.xlu0 1
    %1229 = vperm.xlu0 %1228, %v1220
    %v1230 = vpop.permute.xlu0 %1229
    %v1232 = vsub.f32 %v1227, %v1230
    %v1233 = vmax.f32 %v1232, 0.0
    %v1234 = vsub.f32 0.0, %v1227
    %v1235 = vsub.f32 %v1234, %v1230
    %v1236 = vmax.f32 %v1235, 0.0
    %v1237 = vsub.f32 %v1233, %v1236
    %v1238 = vpack.c.bf16 %v1237, %v1237
    %1239 = vmatprep.subr.bf16.mxu0 0
    %1240 = vmatpush1.bf16.msra.mxu0 %v977
    %1241 = vmatprep.subr.bf16.mxu0 0
    %1242 = vmatpush1.bf16.msra.mxu0 %v978
    %1243 = vmatprep.subr.bf16.mxu0 0
    %1244 = vmatpush1.bf16.msra.mxu0 %v979
    %1245 = vmatprep.subr.bf16.mxu0 0
    %1246 = vmatpush1.bf16.msra.mxu0 %v980
    %1247 = vmatprep.subr.bf16.mxu0 0
    %1248 = vmatpush1.bf16.msra.mxu0 %v981
    %1249 = vmatprep.subr.bf16.mxu0 0
    %1250 = vmatpush1.bf16.msra.mxu0 %v982
    %1251 = vmatprep.subr.bf16.mxu0 0
    %1252 = vmatpush1.bf16.msra.mxu0 %v983
    %1253 = vmatprep.subr.bf16.mxu0 0
    %1254 = vmatpush1.bf16.msra.mxu0 %v984
    %1255 = vmatprep.subr.bf16.mxu0 0
    %1256 = vmatpush1.bf16.msra.mxu0 0
    %1257 = vmatprep.subr.bf16.mxu0 0
    %1258 = vmatpush1.bf16.msra.mxu0 0
    %1259 = vmatprep.subr.bf16.mxu0 0
    %1260 = vmatpush1.bf16.msra.mxu0 0
    %1261 = vmatprep.subr.bf16.mxu0 0
    %1262 = vmatpush1.bf16.msra.mxu0 0
    %1263 = vmatprep.subr.bf16.mxu0 0
    %1264 = vmatpush1.bf16.msra.mxu0 0
    %1265 = vmatprep.subr.bf16.mxu0 0
    %1266 = vmatpush1.bf16.msra.mxu0 0
    %1267 = vmatprep.subr.bf16.mxu0 0
    %1268 = vmatpush1.bf16.msra.mxu0 0
    %1269 = vmatprep.subr.bf16.mxu0 0
    %1270 = vmatpush1.bf16.msra.mxu0 0
    %1271 = vmatprep.mubr.bf16.mxu0 0
    %1272 = vmatmul.mubr.bf16.gmra.mrb[0].mxu0 %v1238
    %v1273 = vpop.f32.mrb[0].mxu0
    %v1274 = vadd.f32 0.0, %v1273
    %v1275 = vpop.f32.mrb[0].mxu0
    %v1276 = vpop.f32.mrb[0].mxu0
    %v1277 = vpop.f32.mrb[0].mxu0
    %1278 = vdwg.mxu0
    %v1279 = vsub.f32 %v1274, %v648
    %v1280 = vand.u32 2147483647, %v1279
    %1281 = vadd.xlane.f32.xlu0 %v1280
    %v1282 = vpop.xlane.xlu0 %1281
    %v1283 = vsub.f32 %v1282, %v661
    %v1284 = vmul.f32 %v1283, %v679
    %v1285 = vmul.f32 %v1284, %v684
    %v1286 = vpack.c.bf16 %v1113, %v1113
    %1288 = vrot.lane.b32.xlu0 %v1286, 32
    %v1289 = vpop.permute.xlu0 %1288
    %v1291 = vsel %vm699, %v1289, 0
    %1293 = vmatprep.subr.bf16.mxu0 0
    %1294 = vmatpush1.bf16.msra.mxu0 %v695
    %1295 = vmatprep.subr.bf16.mxu0 0
    %1296 = vmatpush1.bf16.msra.mxu0 %v696
    %1297 = vmatprep.subr.bf16.mxu0 0
    %1298 = vmatpush1.bf16.msra.mxu0 0
    %1299 = vmatprep.subr.bf16.mxu0 0
    %1300 = vmatpush1.bf16.msra.mxu0 0
    %1301 = vmatprep.subr.bf16.mxu0 0
    %1302 = vmatpush1.bf16.msra.mxu0 0
    %1303 = vmatprep.subr.bf16.mxu0 0
    %1304 = vmatpush1.bf16.msra.mxu0 0
    %1305 = vmatprep.subr.bf16.mxu0 0
    %1306 = vmatpush1.bf16.msra.mxu0 0
    %1307 = vmatprep.subr.bf16.mxu0 0
    %1308 = vmatpush1.bf16.msra.mxu0 0
    %1309 = vmatprep.subr.bf16.mxu0 0
    %1310 = vmatpush1.bf16.msra.mxu0 0
    %1311 = vmatprep.subr.bf16.mxu0 0
    %1312 = vmatpush1.bf16.msra.mxu0 0
    %1313 = vmatprep.subr.bf16.mxu0 0
    %1314 = vmatpush1.bf16.msra.mxu0 0
    %1315 = vmatprep.subr.bf16.mxu0 0
    %1316 = vmatpush1.bf16.msra.mxu0 0
    %1317 = vmatprep.subr.bf16.mxu0 0
    %1318 = vmatpush1.bf16.msra.mxu0 0
    %1319 = vmatprep.subr.bf16.mxu0 0
    %1320 = vmatpush1.bf16.msra.mxu0 0
    %1321 = vmatprep.subr.bf16.mxu0 0
    %1322 = vmatpush1.bf16.msra.mxu0 0
    %1323 = vmatprep.subr.bf16.mxu0 0
    %1324 = vmatpush1.bf16.msra.mxu0 0
    %1325 = vmatprep.mubr.bf16.mxu0 0
    %1326 = vmatmul.mubr.bf16.gmra.mrb[0].mxu0 %v1291
    %v1327 = vpop.f32.mrb[0].mxu0
    %v1328 = vadd.f32 0.0, %v1327
    %v1329 = vpop.f32.mrb[0].mxu0
    %v1330 = vpop.f32.mrb[0].mxu0
    %v1331 = vpop.f32.mrb[0].mxu0
    %1332 = vdwg.mxu0
    %v1333 = vadd.f32 %v1285, %v1328
    %v1334 = vadd.f32 %v1333, %v747
    %v1335 = vxor.u32 %v1334, 2147483648
    %v1336 = vmul.f32 %v1335, 1.442695
    %v1337 = vpow.pop %v1336
    %v1338 = vadd.f32 %v1337, 1.0
    %v1339 = vrcp.pop %v1338
    %v1340 = vmul.f32 1.0, %v1339
    %v1341 = vmul.f32 %v1340, 2.0
    %v1342 = vsub.f32 %v1341, 1.0
    %v1343 = vmul.f32 %v1340, %v1107
    %1345 = vrot.lane.b32.xlu0 %v1342, 64
    %v1346 = vpop.permute.xlu0 %1345
    %v1348 = vmul.f32 %v1340, %v1346
    %1350 = vrot.lane.b32.xlu0 %v1348, 32
    %v1351 = vpop.permute.xlu0 %1350
    %v1353 = vadd.f32 %v1343, %v1351
    %v1354 = vtanh.pop %v1353
    %1356 = vrot.lane.b32.xlu0 %v1354, 64
    %v1357 = vpop.permute.xlu0 %1356
    %v1359 = vmul.f32 %v1340, %v1357
    %v1360 = vpack.c.bf16 %v1353, %v1353
    %1362 = vrot.lane.b32.xlu0 %v1360, 96
    %v1363 = vpop.permute.xlu0 %1362
    %v1365 = vsel %vm699, %v1363, 0
    %1367 = vmatprep.subr.bf16.mxu0 0
    %1368 = vmatpush1.bf16.msra.mxu0 %v794
    %1369 = vmatprep.subr.bf16.mxu0 0
    %1370 = vmatpush1.bf16.msra.mxu0 %v795
    %1371 = vmatprep.subr.bf16.mxu0 0
    %1372 = vmatpush1.bf16.msra.mxu0 0
    %1373 = vmatprep.subr.bf16.mxu0 0
    %1374 = vmatpush1.bf16.msra.mxu0 0
    %1375 = vmatprep.subr.bf16.mxu0 0
    %1376 = vmatpush1.bf16.msra.mxu0 0
    %1377 = vmatprep.subr.bf16.mxu0 0
    %1378 = vmatpush1.bf16.msra.mxu0 0
    %1379 = vmatprep.subr.bf16.mxu0 0
    %1380 = vmatpush1.bf16.msra.mxu0 0
    %1381 = vmatprep.subr.bf16.mxu0 0
    %1382 = vmatpush1.bf16.msra.mxu0 0
    %1383 = vmatprep.subr.bf16.mxu0 0
    %1384 = vmatpush1.bf16.msra.mxu0 0
    %1385 = vmatprep.subr.bf16.mxu0 0
    %1386 = vmatpush1.bf16.msra.mxu0 0
    %1387 = vmatprep.subr.bf16.mxu0 0
    %1388 = vmatpush1.bf16.msra.mxu0 0
    %1389 = vmatprep.subr.bf16.mxu0 0
    %1390 = vmatpush1.bf16.msra.mxu0 0
    %1391 = vmatprep.subr.bf16.mxu0 0
    %1392 = vmatpush1.bf16.msra.mxu0 0
    %1393 = vmatprep.subr.bf16.mxu0 0
    %1394 = vmatpush1.bf16.msra.mxu0 0
    %1395 = vmatprep.subr.bf16.mxu0 0
    %1396 = vmatpush1.bf16.msra.mxu0 0
    %1397 = vmatprep.subr.bf16.mxu0 0
    %1398 = vmatpush1.bf16.msra.mxu0 0
    %1399 = vmatprep.mubr.bf16.mxu0 0
    %1400 = vmatmul.mubr.bf16.gmra.mrb[0].mxu0 %v1365
    %v1401 = vpop.f32.mrb[0].mxu0
    %v1402 = vadd.f32 %v782, %v1401
    %v1403 = vpop.f32.mrb[0].mxu0
    %v1404 = vpop.f32.mrb[0].mxu0
    %v1405 = vpop.f32.mrb[0].mxu0
    %1406 = vdwg.mxu0
    %v1407 = vmax.f32 %v1402, 0.0
    %v1408 = vpack.c.bf16 %v1407, %v1407
    %v1410 = vsel %vm699, %v1408, 0
    %1412 = vmatprep.subr.bf16.mxu0 0
    %1413 = vmatpush1.bf16.msra.mxu0 %v848
    %1414 = vmatprep.subr.bf16.mxu0 0
    %1415 = vmatpush1.bf16.msra.mxu0 %v850
    %1416 = vmatprep.subr.bf16.mxu0 0
    %1417 = vmatpush1.bf16.msra.mxu0 0
    %1418 = vmatprep.subr.bf16.mxu0 0
    %1419 = vmatpush1.bf16.msra.mxu0 0
    %1420 = vmatprep.subr.bf16.mxu0 0
    %1421 = vmatpush1.bf16.msra.mxu0 0
    %1422 = vmatprep.subr.bf16.mxu0 0
    %1423 = vmatpush1.bf16.msra.mxu0 0
    %1424 = vmatprep.subr.bf16.mxu0 0
    %1425 = vmatpush1.bf16.msra.mxu0 0
    %1426 = vmatprep.subr.bf16.mxu0 0
    %1427 = vmatpush1.bf16.msra.mxu0 0
    %1428 = vmatprep.subr.bf16.mxu0 0
    %1429 = vmatpush1.bf16.msra.mxu0 0
    %1430 = vmatprep.subr.bf16.mxu0 0
    %1431 = vmatpush1.bf16.msra.mxu0 0
    %1432 = vmatprep.subr.bf16.mxu0 0
    %1433 = vmatpush1.bf16.msra.mxu0 0
    %1434 = vmatprep.subr.bf16.mxu0 0
    %1435 = vmatpush1.bf16.msra.mxu0 0
    %1436 = vmatprep.subr.bf16.mxu0 0
    %1437 = vmatpush1.bf16.msra.mxu0 0
    %1438 = vmatprep.subr.bf16.mxu0 0
    %1439 = vmatpush1.bf16.msra.mxu0 0
    %1440 = vmatprep.subr.bf16.mxu0 0
    %1441 = vmatpush1.bf16.msra.mxu0 0
    %1442 = vmatprep.subr.bf16.mxu0 0
    %1443 = vmatpush1.bf16.msra.mxu0 0
    %1444 = vmatprep.mubr.bf16.mxu0 0
    %1445 = vmatmul.mubr.bf16.gmra.mrb[0].mxu0 %v1410
    %v1446 = vpop.f32.mrb[0].mxu0
    %v1447 = vadd.f32 %v846, %v1446
    %v1448 = vpop.f32.mrb[0].mxu0
    %v1449 = vpop.f32.mrb[0].mxu0
    %v1450 = vpop.f32.mrb[0].mxu0
    %1451 = vdwg.mxu0
    %v1452 = vmax.f32 %v1447, 0.0
    %v1453 = vand.u32 2147483647, %v1447
    %v1454 = vsub.f32 0.0, %v1453
    %v1455 = vmul.f32 %v1454, 1.442695
    %v1456 = vpow.pop %v1455
    %v1457 = vadd.f32 %v1456, 1.0
    %v1458 = vlog2.pop %v1457
    %v1459 = vmul.f32 %v1458, 0.6931472
    %v1460 = vmul.f32 -0.5, %v1456
    %v1461 = vadd.f32 %v1460, 1.0
    %v1462 = vmul.f32 %v1461, %v1456
    %v1463 = vand.u32 2147483647, %v1456
    %vm1464 = vcmp.lt.f32.partialorder %v1463, 0.0004427343
    %v1465 = vsel %vm1464, %v1462, %v1459
    %v1466 = vadd.f32 %v1452, %v1465
    %1468 = vset.pattern.permute.xlu0 0
    %1469 = vperm.xlu0 %1468, %v1466
    %v1470 = vpop.permute.xlu0 %1469
    %v1472 = vmul.f32 %v1470, %v1279
    %v1473 = vsub.f32 %v1237, %v1472
    %1474 = vset.pattern.permute.xlu0 1
    %1475 = vperm.xlu0 %1474, %v1466
    %v1476 = vpop.permute.xlu0 %1475
    %v1478 = vsub.f32 %v1473, %v1476
    %v1479 = vmax.f32 %v1478, 0.0
    %v1480 = vsub.f32 0.0, %v1473
    %v1481 = vsub.f32 %v1480, %v1476
    %v1482 = vmax.f32 %v1481, 0.0
    %v1483 = vsub.f32 %v1479, %v1482
    %v1484 = vpack.c.bf16 %v1483, %v1483
    %1485 = vmatprep.subr.bf16.mxu0 0
    %1486 = vmatpush1.bf16.msra.mxu0 %v977
    %1487 = vmatprep.subr.bf16.mxu0 0
    %1488 = vmatpush1.bf16.msra.mxu0 %v978
    %1489 = vmatprep.subr.bf16.mxu0 0
    %1490 = vmatpush1.bf16.msra.mxu0 %v979
    %1491 = vmatprep.subr.bf16.mxu0 0
    %1492 = vmatpush1.bf16.msra.mxu0 %v980
    %1493 = vmatprep.subr.bf16.mxu0 0
    %1494 = vmatpush1.bf16.msra.mxu0 %v981
    %1495 = vmatprep.subr.bf16.mxu0 0
    %1496 = vmatpush1.bf16.msra.mxu0 %v982
    %1497 = vmatprep.subr.bf16.mxu0 0
    %1498 = vmatpush1.bf16.msra.mxu0 %v983
    %1499 = vmatprep.subr.bf16.mxu0 0
    %1500 = vmatpush1.bf16.msra.mxu0 %v984
    %1501 = vmatprep.subr.bf16.mxu0 0
    %1502 = vmatpush1.bf16.msra.mxu0 0
    %1503 = vmatprep.subr.bf16.mxu0 0
    %1504 = vmatpush1.bf16.msra.mxu0 0
    %1505 = vmatprep.subr.bf16.mxu0 0
    %1506 = vmatpush1.bf16.msra.mxu0 0
    %1507 = vmatprep.subr.bf16.mxu0 0
    %1508 = vmatpush1.bf16.msra.mxu0 0
    %1509 = vmatprep.subr.bf16.mxu0 0
    %1510 = vmatpush1.bf16.msra.mxu0 0
    %1511 = vmatprep.subr.bf16.mxu0 0
    %1512 = vmatpush1.bf16.msra.mxu0 0
    %1513 = vmatprep.subr.bf16.mxu0 0
    %1514 = vmatpush1.bf16.msra.mxu0 0
    %1515 = vmatprep.subr.bf16.mxu0 0
    %1516 = vmatpush1.bf16.msra.mxu0 0
    %1517 = vmatprep.mubr.bf16.mxu0 0
    %1518 = vmatmul.mubr.bf16.gmra.mrb[0].mxu0 %v1484
    %v1519 = vpop.f32.mrb[0].mxu0
    %v1520 = vadd.f32 0.0, %v1519
    %v1521 = vpop.f32.mrb[0].mxu0
    %v1522 = vpop.f32.mrb[0].mxu0
    %v1523 = vpop.f32.mrb[0].mxu0
    %1524 = vdwg.mxu0
    %v1525 = vsub.f32 %v1520, %v648
    %v1526 = vand.u32 2147483647, %v1525
    %1527 = vadd.xlane.f32.xlu0 %v1526
    %v1528 = vpop.xlane.xlu0 %1527
    %v1529 = vsub.f32 %v1528, %v661
    %v1530 = vmul.f32 %v1529, %v679
    %v1531 = vmul.f32 %v1530, %v684
    %v1532 = vpack.c.bf16 %v1359, %v1359
    %1534 = vrot.lane.b32.xlu0 %v1532, 32
    %v1535 = vpop.permute.xlu0 %1534
    %v1537 = vsel %vm699, %v1535, 0
    %1539 = vmatprep.subr.bf16.mxu0 0
    %1540 = vmatpush1.bf16.msra.mxu0 %v695
    %1541 = vmatprep.subr.bf16.mxu0 0
    %1542 = vmatpush1.bf16.msra.mxu0 %v696
    %1543 = vmatprep.subr.bf16.mxu0 0
    %1544 = vmatpush1.bf16.msra.mxu0 0
    %1545 = vmatprep.subr.bf16.mxu0 0
    %1546 = vmatpush1.bf16.msra.mxu0 0
    %1547 = vmatprep.subr.bf16.mxu0 0
    %1548 = vmatpush1.bf16.msra.mxu0 0
    %1549 = vmatprep.subr.bf16.mxu0 0
    %1550 = vmatpush1.bf16.msra.mxu0 0
    %1551 = vmatprep.subr.bf16.mxu0 0
    %1552 = vmatpush1.bf16.msra.mxu0 0
    %1553 = vmatprep.subr.bf16.mxu0 0
    %1554 = vmatpush1.bf16.msra.mxu0 0
    %1555 = vmatprep.subr.bf16.mxu0 0
    %1556 = vmatpush1.bf16.msra.mxu0 0
    %1557 = vmatprep.subr.bf16.mxu0 0
    %1558 = vmatpush1.bf16.msra.mxu0 0
    %1559 = vmatprep.subr.bf16.mxu0 0
    %1560 = vmatpush1.bf16.msra.mxu0 0
    %1561 = vmatprep.subr.bf16.mxu0 0
    %1562 = vmatpush1.bf16.msra.mxu0 0
    %1563 = vmatprep.subr.bf16.mxu0 0
    %1564 = vmatpush1.bf16.msra.mxu0 0
    %1565 = vmatprep.subr.bf16.mxu0 0
    %1566 = vmatpush1.bf16.msra.mxu0 0
    %1567 = vmatprep.subr.bf16.mxu0 0
    %1568 = vmatpush1.bf16.msra.mxu0 0
    %1569 = vmatprep.subr.bf16.mxu0 0
    %1570 = vmatpush1.bf16.msra.mxu0 0
    %1571 = vmatprep.mubr.bf16.mxu0 0
    %1572 = vmatmul.mubr.bf16.gmra.mrb[0].mxu0 %v1537
    %v1573 = vpop.f32.mrb[0].mxu0
    %v1574 = vadd.f32 0.0, %v1573
    %v1575 = vpop.f32.mrb[0].mxu0
    %v1576 = vpop.f32.mrb[0].mxu0
    %v1577 = vpop.f32.mrb[0].mxu0
    %1578 = vdwg.mxu0
    %v1579 = vadd.f32 %v1531, %v1574
    %v1580 = vadd.f32 %v1579, %v747
    %v1581 = vxor.u32 %v1580, 2147483648
    %v1582 = vmul.f32 %v1581, 1.442695
    %v1583 = vpow.pop %v1582
    %v1584 = vadd.f32 %v1583, 1.0
    %v1585 = vrcp.pop %v1584
    %v1586 = vmul.f32 1.0, %v1585
    %v1587 = vmul.f32 %v1586, 2.0
    %v1588 = vsub.f32 %v1587, 1.0
    %v1589 = vmul.f32 %v1586, %v1353
    %1591 = vrot.lane.b32.xlu0 %v1588, 64
    %v1592 = vpop.permute.xlu0 %1591
    %v1594 = vmul.f32 %v1586, %v1592
    %1596 = vrot.lane.b32.xlu0 %v1594, 32
    %v1597 = vpop.permute.xlu0 %1596
    %v1599 = vadd.f32 %v1589, %v1597
    %v1600 = vtanh.pop %v1599
    %1602 = vrot.lane.b32.xlu0 %v1600, 64
    %v1603 = vpop.permute.xlu0 %1602
    %v1605 = vmul.f32 %v1586, %v1603
    %v1606 = vpack.c.bf16 %v1599, %v1599
    %1608 = vrot.lane.b32.xlu0 %v1606, 96
    %v1609 = vpop.permute.xlu0 %1608
    %v1611 = vsel %vm699, %v1609, 0
    %1613 = vmatprep.subr.bf16.mxu0 0
    %1614 = vmatpush1.bf16.msra.mxu0 %v794
    %1615 = vmatprep.subr.bf16.mxu0 0
    %1616 = vmatpush1.bf16.msra.mxu0 %v795
    %1617 = vmatprep.subr.bf16.mxu0 0
    %1618 = vmatpush1.bf16.msra.mxu0 0
    %1619 = vmatprep.subr.bf16.mxu0 0
    %1620 = vmatpush1.bf16.msra.mxu0 0
    %1621 = vmatprep.subr.bf16.mxu0 0
    %1622 = vmatpush1.bf16.msra.mxu0 0
    %1623 = vmatprep.subr.bf16.mxu0 0
    %1624 = vmatpush1.bf16.msra.mxu0 0
    %1625 = vmatprep.subr.bf16.mxu0 0
    %1626 = vmatpush1.bf16.msra.mxu0 0
    %1627 = vmatprep.subr.bf16.mxu0 0
    %1628 = vmatpush1.bf16.msra.mxu0 0
    %1629 = vmatprep.subr.bf16.mxu0 0
    %1630 = vmatpush1.bf16.msra.mxu0 0
    %1631 = vmatprep.subr.bf16.mxu0 0
    %1632 = vmatpush1.bf16.msra.mxu0 0
    %1633 = vmatprep.subr.bf16.mxu0 0
    %1634 = vmatpush1.bf16.msra.mxu0 0
    %1635 = vmatprep.subr.bf16.mxu0 0
    %1636 = vmatpush1.bf16.msra.mxu0 0
    %1637 = vmatprep.subr.bf16.mxu0 0
    %1638 = vmatpush1.bf16.msra.mxu0 0
    %1639 = vmatprep.subr.bf16.mxu0 0
    %1640 = vmatpush1.bf16.msra.mxu0 0
    %1641 = vmatprep.subr.bf16.mxu0 0
    %1642 = vmatpush1.bf16.msra.mxu0 0
    %1643 = vmatprep.subr.bf16.mxu0 0
    %1644 = vmatpush1.bf16.msra.mxu0 0
    %1645 = vmatprep.mubr.bf16.mxu0 0
    %1646 = vmatmul.mubr.bf16.gmra.mrb[0].mxu0 %v1611
    %v1647 = vpop.f32.mrb[0].mxu0
    %v1648 = vadd.f32 %v782, %v1647
    %v1649 = vpop.f32.mrb[0].mxu0
    %v1650 = vpop.f32.mrb[0].mxu0
    %v1651 = vpop.f32.mrb[0].mxu0
    %1652 = vdwg.mxu0
    %v1653 = vmax.f32 %v1648, 0.0
    %v1654 = vpack.c.bf16 %v1653, %v1653
    %v1656 = vsel %vm699, %v1654, 0
    %1658 = vmatprep.subr.bf16.mxu0 0
    %1659 = vmatpush1.bf16.msra.mxu0 %v848
    %1660 = vmatprep.subr.bf16.mxu0 0
    %1661 = vmatpush1.bf16.msra.mxu0 %v850
    %1662 = vmatprep.subr.bf16.mxu0 0
    %1663 = vmatpush1.bf16.msra.mxu0 0
    %1664 = vmatprep.subr.bf16.mxu0 0
    %1665 = vmatpush1.bf16.msra.mxu0 0
    %1666 = vmatprep.subr.bf16.mxu0 0
    %1667 = vmatpush1.bf16.msra.mxu0 0
    %1668 = vmatprep.subr.bf16.mxu0 0
    %1669 = vmatpush1.bf16.msra.mxu0 0
    %1670 = vmatprep.subr.bf16.mxu0 0
    %1671 = vmatpush1.bf16.msra.mxu0 0
    %1672 = vmatprep.subr.bf16.mxu0 0
    %1673 = vmatpush1.bf16.msra.mxu0 0
    %1674 = vmatprep.subr.bf16.mxu0 0
    %1675 = vmatpush1.bf16.msra.mxu0 0
    %1676 = vmatprep.subr.bf16.mxu0 0
    %1677 = vmatpush1.bf16.msra.mxu0 0
    %1678 = vmatprep.subr.bf16.mxu0 0
    %1679 = vmatpush1.bf16.msra.mxu0 0
    %1680 = vmatprep.subr.bf16.mxu0 0
    %1681 = vmatpush1.bf16.msra.mxu0 0
    %1682 = vmatprep.subr.bf16.mxu0 0
    %1683 = vmatpush1.bf16.msra.mxu0 0
    %1684 = vmatprep.subr.bf16.mxu0 0
    %1685 = vmatpush1.bf16.msra.mxu0 0
    %1686 = vmatprep.subr.bf16.mxu0 0
    %1687 = vmatpush1.bf16.msra.mxu0 0
    %1688 = vmatprep.subr.bf16.mxu0 0
    %1689 = vmatpush1.bf16.msra.mxu0 0
    %1690 = vmatprep.mubr.bf16.mxu0 0
    %1691 = vmatmul.mubr.bf16.gmra.mrb[0].mxu0 %v1656
    %v1692 = vpop.f32.mrb[0].mxu0
    %v1693 = vadd.f32 %v846, %v1692
    %v1694 = vpop.f32.mrb[0].mxu0
    %v1695 = vpop.f32.mrb[0].mxu0
    %v1696 = vpop.f32.mrb[0].mxu0
    %1697 = vdwg.mxu0
    %v1698 = vmax.f32 %v1693, 0.0
    %v1699 = vand.u32 2147483647, %v1693
    %v1700 = vsub.f32 0.0, %v1699
    %v1701 = vmul.f32 %v1700, 1.442695
    %v1702 = vpow.pop %v1701
    %v1703 = vadd.f32 %v1702, 1.0
    %v1704 = vlog2.pop %v1703
    %v1705 = vmul.f32 %v1704, 0.6931472
    %v1706 = vmul.f32 -0.5, %v1702
    %v1707 = vadd.f32 %v1706, 1.0
    %v1708 = vmul.f32 %v1707, %v1702
    %v1709 = vand.u32 2147483647, %v1702
    %vm1710 = vcmp.lt.f32.partialorder %v1709, 0.0004427343
    %v1711 = vsel %vm1710, %v1708, %v1705
    %v1712 = vadd.f32 %v1698, %v1711
    %1714 = vset.pattern.permute.xlu0 0
    %1715 = vperm.xlu0 %1714, %v1712
    %v1716 = vpop.permute.xlu0 %1715
    %v1718 = vmul.f32 %v1716, %v1525
    %v1719 = vsub.f32 %v1483, %v1718
    %1720 = vset.pattern.permute.xlu0 1
    %1721 = vperm.xlu0 %1720, %v1712
    %v1722 = vpop.permute.xlu0 %1721
    %v1724 = vsub.f32 %v1719, %v1722
    %v1725 = vmax.f32 %v1724, 0.0
    %v1726 = vsub.f32 0.0, %v1719
    %v1727 = vsub.f32 %v1726, %v1722
    %v1728 = vmax.f32 %v1727, 0.0
    %v1729 = vsub.f32 %v1725, %v1728
    %v1730 = vpack.c.bf16 %v1729, %v1729
    %1731 = vmatprep.subr.bf16.mxu0 0
    %1732 = vmatpush1.bf16.msra.mxu0 %v977
    %1733 = vmatprep.subr.bf16.mxu0 0
    %1734 = vmatpush1.bf16.msra.mxu0 %v978
    %1735 = vmatprep.subr.bf16.mxu0 0
    %1736 = vmatpush1.bf16.msra.mxu0 %v979
    %1737 = vmatprep.subr.bf16.mxu0 0
    %1738 = vmatpush1.bf16.msra.mxu0 %v980
    %1739 = vmatprep.subr.bf16.mxu0 0
    %1740 = vmatpush1.bf16.msra.mxu0 %v981
    %1741 = vmatprep.subr.bf16.mxu0 0
    %1742 = vmatpush1.bf16.msra.mxu0 %v982
    %1743 = vmatprep.subr.bf16.mxu0 0
    %1744 = vmatpush1.bf16.msra.mxu0 %v983
    %1745 = vmatprep.subr.bf16.mxu0 0
    %1746 = vmatpush1.bf16.msra.mxu0 %v984
    %1747 = vmatprep.subr.bf16.mxu0 0
    %1748 = vmatpush1.bf16.msra.mxu0 0
    %1749 = vmatprep.subr.bf16.mxu0 0
    %1750 = vmatpush1.bf16.msra.mxu0 0
    %1751 = vmatprep.subr.bf16.mxu0 0
    %1752 = vmatpush1.bf16.msra.mxu0 0
    %1753 = vmatprep.subr.bf16.mxu0 0
    %1754 = vmatpush1.bf16.msra.mxu0 0
    %1755 = vmatprep.subr.bf16.mxu0 0
    %1756 = vmatpush1.bf16.msra.mxu0 0
    %1757 = vmatprep.subr.bf16.mxu0 0
    %1758 = vmatpush1.bf16.msra.mxu0 0
    %1759 = vmatprep.subr.bf16.mxu0 0
    %1760 = vmatpush1.bf16.msra.mxu0 0
    %1761 = vmatprep.subr.bf16.mxu0 0
    %1762 = vmatpush1.bf16.msra.mxu0 0
    %1763 = vmatprep.mubr.bf16.mxu0 0
    %1764 = vmatmul.mubr.bf16.gmra.mrb[0].mxu0 %v1730
    %v1765 = vpop.f32.mrb[0].mxu0
    %v1766 = vadd.f32 0.0, %v1765
    %v1767 = vpop.f32.mrb[0].mxu0
    %v1768 = vpop.f32.mrb[0].mxu0
    %v1769 = vpop.f32.mrb[0].mxu0
    %1770 = vdwg.mxu0
    %v1771 = vsub.f32 %v1766, %v648
    %v1772 = vand.u32 2147483647, %v1771
    %1773 = vadd.xlane.f32.xlu0 %v1772
    %v1774 = vpop.xlane.xlu0 %1773
    %v1775 = vsub.f32 %v1774, %v661
    %v1776 = vmul.f32 %v1775, %v679
    %v1777 = vmul.f32 %v1776, %v684
    %v1778 = vpack.c.bf16 %v1605, %v1605
    %1780 = vrot.lane.b32.xlu0 %v1778, 32
    %v1781 = vpop.permute.xlu0 %1780
    %v1783 = vsel %vm699, %v1781, 0
    %1785 = vmatprep.subr.bf16.mxu0 0
    %1786 = vmatpush1.bf16.msra.mxu0 %v695
    %1787 = vmatprep.subr.bf16.mxu0 0
    %1788 = vmatpush1.bf16.msra.mxu0 %v696
    %1789 = vmatprep.subr.bf16.mxu0 0
    %1790 = vmatpush1.bf16.msra.mxu0 0
    %1791 = vmatprep.subr.bf16.mxu0 0
    %1792 = vmatpush1.bf16.msra.mxu0 0
    %1793 = vmatprep.subr.bf16.mxu0 0
    %1794 = vmatpush1.bf16.msra.mxu0 0
    %1795 = vmatprep.subr.bf16.mxu0 0
    %1796 = vmatpush1.bf16.msra.mxu0 0
    %1797 = vmatprep.subr.bf16.mxu0 0
    %1798 = vmatpush1.bf16.msra.mxu0 0
    %1799 = vmatprep.subr.bf16.mxu0 0
    %1800 = vmatpush1.bf16.msra.mxu0 0
    %1801 = vmatprep.subr.bf16.mxu0 0
    %1802 = vmatpush1.bf16.msra.mxu0 0
    %1803 = vmatprep.subr.bf16.mxu0 0
    %1804 = vmatpush1.bf16.msra.mxu0 0
    %1805 = vmatprep.subr.bf16.mxu0 0
    %1806 = vmatpush1.bf16.msra.mxu0 0
    %1807 = vmatprep.subr.bf16.mxu0 0
    %1808 = vmatpush1.bf16.msra.mxu0 0
    %1809 = vmatprep.subr.bf16.mxu0 0
    %1810 = vmatpush1.bf16.msra.mxu0 0
    %1811 = vmatprep.subr.bf16.mxu0 0
    %1812 = vmatpush1.bf16.msra.mxu0 0
    %1813 = vmatprep.subr.bf16.mxu0 0
    %1814 = vmatpush1.bf16.msra.mxu0 0
    %1815 = vmatprep.subr.bf16.mxu0 0
    %1816 = vmatpush1.bf16.msra.mxu0 0
    %1817 = vmatprep.mubr.bf16.mxu0 0
    %1818 = vmatmul.mubr.bf16.gmra.mrb[0].mxu0 %v1783
    %v1819 = vpop.f32.mrb[0].mxu0
    %v1820 = vadd.f32 0.0, %v1819
    %v1821 = vpop.f32.mrb[0].mxu0
    %v1822 = vpop.f32.mrb[0].mxu0
    %v1823 = vpop.f32.mrb[0].mxu0
    %1824 = vdwg.mxu0
    %v1825 = vadd.f32 %v1777, %v1820
    %v1826 = vadd.f32 %v1825, %v747
    %v1827 = vxor.u32 %v1826, 2147483648
    %v1828 = vmul.f32 %v1827, 1.442695
    %v1829 = vpow.pop %v1828
    %v1830 = vadd.f32 %v1829, 1.0
    %v1831 = vrcp.pop %v1830
    %v1832 = vmul.f32 1.0, %v1831
    %v1833 = vmul.f32 %v1832, 2.0
    %v1834 = vsub.f32 %v1833, 1.0
    %v1835 = vmul.f32 %v1832, %v1599
    %1837 = vrot.lane.b32.xlu0 %v1834, 64
    %v1838 = vpop.permute.xlu0 %1837
    %v1840 = vmul.f32 %v1832, %v1838
    %1842 = vrot.lane.b32.xlu0 %v1840, 32
    %v1843 = vpop.permute.xlu0 %1842
    %v1845 = vadd.f32 %v1835, %v1843
    %v1846 = vtanh.pop %v1845
    %1848 = vrot.lane.b32.xlu0 %v1846, 64
    %v1849 = vpop.permute.xlu0 %1848
    %v1851 = vmul.f32 %v1832, %v1849
    %v1852 = vpack.c.bf16 %v1845, %v1845
    %1854 = vrot.lane.b32.xlu0 %v1852, 96
    %v1855 = vpop.permute.xlu0 %1854
    %v1857 = vsel %vm699, %v1855, 0
    %1859 = vmatprep.subr.bf16.mxu0 0
    %1860 = vmatpush1.bf16.msra.mxu0 %v794
    %1861 = vmatprep.subr.bf16.mxu0 0
    %1862 = vmatpush1.bf16.msra.mxu0 %v795
    %1863 = vmatprep.subr.bf16.mxu0 0
    %1864 = vmatpush1.bf16.msra.mxu0 0
    %1865 = vmatprep.subr.bf16.mxu0 0
    %1866 = vmatpush1.bf16.msra.mxu0 0
    %1867 = vmatprep.subr.bf16.mxu0 0
    %1868 = vmatpush1.bf16.msra.mxu0 0
    %1869 = vmatprep.subr.bf16.mxu0 0
    %1870 = vmatpush1.bf16.msra.mxu0 0
    %1871 = vmatprep.subr.bf16.mxu0 0
    %1872 = vmatpush1.bf16.msra.mxu0 0
    %1873 = vmatprep.subr.bf16.mxu0 0
    %1874 = vmatpush1.bf16.msra.mxu0 0
    %1875 = vmatprep.subr.bf16.mxu0 0
    %1876 = vmatpush1.bf16.msra.mxu0 0
    %1877 = vmatprep.subr.bf16.mxu0 0
    %1878 = vmatpush1.bf16.msra.mxu0 0
    %1879 = vmatprep.subr.bf16.mxu0 0
    %1880 = vmatpush1.bf16.msra.mxu0 0
    %1881 = vmatprep.subr.bf16.mxu0 0
    %1882 = vmatpush1.bf16.msra.mxu0 0
    %1883 = vmatprep.subr.bf16.mxu0 0
    %1884 = vmatpush1.bf16.msra.mxu0 0
    %1885 = vmatprep.subr.bf16.mxu0 0
    %1886 = vmatpush1.bf16.msra.mxu0 0
    %1887 = vmatprep.subr.bf16.mxu0 0
    %1888 = vmatpush1.bf16.msra.mxu0 0
    %1889 = vmatprep.subr.bf16.mxu0 0
    %1890 = vmatpush1.bf16.msra.mxu0 0
    %1891 = vmatprep.mubr.bf16.mxu0 0
    %1892 = vmatmul.mubr.bf16.gmra.mrb[0].mxu0 %v1857
    %v1893 = vpop.f32.mrb[0].mxu0
    %v1894 = vadd.f32 %v782, %v1893
    %v1895 = vpop.f32.mrb[0].mxu0
    %v1896 = vpop.f32.mrb[0].mxu0
    %v1897 = vpop.f32.mrb[0].mxu0
    %1898 = vdwg.mxu0
    %v1899 = vmax.f32 %v1894, 0.0
    %v1900 = vpack.c.bf16 %v1899, %v1899
    %v1902 = vsel %vm699, %v1900, 0
    %1904 = vmatprep.subr.bf16.mxu0 0
    %1905 = vmatpush1.bf16.msra.mxu0 %v848
    %1906 = vmatprep.subr.bf16.mxu0 0
    %1907 = vmatpush1.bf16.msra.mxu0 %v850
    %1908 = vmatprep.subr.bf16.mxu0 0
    %1909 = vmatpush1.bf16.msra.mxu0 0
    %1910 = vmatprep.subr.bf16.mxu0 0
    %1911 = vmatpush1.bf16.msra.mxu0 0
    %1912 = vmatprep.subr.bf16.mxu0 0
    %1913 = vmatpush1.bf16.msra.mxu0 0
    %1914 = vmatprep.subr.bf16.mxu0 0
    %1915 = vmatpush1.bf16.msra.mxu0 0
    %1916 = vmatprep.subr.bf16.mxu0 0
    %1917 = vmatpush1.bf16.msra.mxu0 0
    %1918 = vmatprep.subr.bf16.mxu0 0
    %1919 = vmatpush1.bf16.msra.mxu0 0
    %1920 = vmatprep.subr.bf16.mxu0 0
    %1921 = vmatpush1.bf16.msra.mxu0 0
    %1922 = vmatprep.subr.bf16.mxu0 0
    %1923 = vmatpush1.bf16.msra.mxu0 0
    %1924 = vmatprep.subr.bf16.mxu0 0
    %1925 = vmatpush1.bf16.msra.mxu0 0
    %1926 = vmatprep.subr.bf16.mxu0 0
    %1927 = vmatpush1.bf16.msra.mxu0 0
    %1928 = vmatprep.subr.bf16.mxu0 0
    %1929 = vmatpush1.bf16.msra.mxu0 0
    %1930 = vmatprep.subr.bf16.mxu0 0
    %1931 = vmatpush1.bf16.msra.mxu0 0
    %1932 = vmatprep.subr.bf16.mxu0 0
    %1933 = vmatpush1.bf16.msra.mxu0 0
    %1934 = vmatprep.subr.bf16.mxu0 0
    %1935 = vmatpush1.bf16.msra.mxu0 0
    %1936 = vmatprep.mubr.bf16.mxu0 0
    %1937 = vmatmul.mubr.bf16.gmra.mrb[0].mxu0 %v1902
    %v1938 = vpop.f32.mrb[0].mxu0
    %v1939 = vadd.f32 %v846, %v1938
    %v1940 = vpop.f32.mrb[0].mxu0
    %v1941 = vpop.f32.mrb[0].mxu0
    %v1942 = vpop.f32.mrb[0].mxu0
    %1943 = vdwg.mxu0
    %v1944 = vmax.f32 %v1939, 0.0
    %v1945 = vand.u32 2147483647, %v1939
    %v1946 = vsub.f32 0.0, %v1945
    %v1947 = vmul.f32 %v1946, 1.442695
    %v1948 = vpow.pop %v1947
    %v1949 = vadd.f32 %v1948, 1.0
    %v1950 = vlog2.pop %v1949
    %v1951 = vmul.f32 %v1950, 0.6931472
    %v1952 = vmul.f32 -0.5, %v1948
    %v1953 = vadd.f32 %v1952, 1.0
    %v1954 = vmul.f32 %v1953, %v1948
    %v1955 = vand.u32 2147483647, %v1948
    %vm1956 = vcmp.lt.f32.partialorder %v1955, 0.0004427343
    %v1957 = vsel %vm1956, %v1954, %v1951
    %v1958 = vadd.f32 %v1944, %v1957
    %1960 = vset.pattern.permute.xlu0 0
    %1961 = vperm.xlu0 %1960, %v1958
    %v1962 = vpop.permute.xlu0 %1961
    %v1964 = vmul.f32 %v1962, %v1771
    %v1965 = vsub.f32 %v1729, %v1964
    %1966 = vset.pattern.permute.xlu0 1
    %1967 = vperm.xlu0 %1966, %v1958
    %v1968 = vpop.permute.xlu0 %1967
    %v1970 = vsub.f32 %v1965, %v1968
    %v1971 = vmax.f32 %v1970, 0.0
    %v1972 = vsub.f32 0.0, %v1965
    %v1973 = vsub.f32 %v1972, %v1968
    %v1974 = vmax.f32 %v1973, 0.0
    %v1975 = vsub.f32 %v1971, %v1974
    %v1976 = vpack.c.bf16 %v1975, %v1975
    %1977 = vmatprep.subr.bf16.mxu0 0
    %1978 = vmatpush1.bf16.msra.mxu0 %v977
    %1979 = vmatprep.subr.bf16.mxu0 0
    %1980 = vmatpush1.bf16.msra.mxu0 %v978
    %1981 = vmatprep.subr.bf16.mxu0 0
    %1982 = vmatpush1.bf16.msra.mxu0 %v979
    %1983 = vmatprep.subr.bf16.mxu0 0
    %1984 = vmatpush1.bf16.msra.mxu0 %v980
    %1985 = vmatprep.subr.bf16.mxu0 0
    %1986 = vmatpush1.bf16.msra.mxu0 %v981
    %1987 = vmatprep.subr.bf16.mxu0 0
    %1988 = vmatpush1.bf16.msra.mxu0 %v982
    %1989 = vmatprep.subr.bf16.mxu0 0
    %1990 = vmatpush1.bf16.msra.mxu0 %v983
    %1991 = vmatprep.subr.bf16.mxu0 0
    %1992 = vmatpush1.bf16.msra.mxu0 %v984
    %1993 = vmatprep.subr.bf16.mxu0 0
    %1994 = vmatpush1.bf16.msra.mxu0 0
    %1995 = vmatprep.subr.bf16.mxu0 0
    %1996 = vmatpush1.bf16.msra.mxu0 0
    %1997 = vmatprep.subr.bf16.mxu0 0
    %1998 = vmatpush1.bf16.msra.mxu0 0
    %1999 = vmatprep.subr.bf16.mxu0 0
    %2000 = vmatpush1.bf16.msra.mxu0 0
    %2001 = vmatprep.subr.bf16.mxu0 0
    %2002 = vmatpush1.bf16.msra.mxu0 0
    %2003 = vmatprep.subr.bf16.mxu0 0
    %2004 = vmatpush1.bf16.msra.mxu0 0
    %2005 = vmatprep.subr.bf16.mxu0 0
    %2006 = vmatpush1.bf16.msra.mxu0 0
    %2007 = vmatprep.subr.bf16.mxu0 0
    %2008 = vmatpush1.bf16.msra.mxu0 0
    %2009 = vmatprep.mubr.bf16.mxu0 0
    %2010 = vmatmul.mubr.bf16.gmra.mrb[0].mxu0 %v1976
    %v2011 = vpop.f32.mrb[0].mxu0
    %v2012 = vadd.f32 0.0, %v2011
    %v2013 = vpop.f32.mrb[0].mxu0
    %v2014 = vpop.f32.mrb[0].mxu0
    %v2015 = vpop.f32.mrb[0].mxu0
    %2016 = vdwg.mxu0
    %v2017 = vsub.f32 %v2012, %v648
    %v2018 = vand.u32 2147483647, %v2017
    %2019 = vadd.xlane.f32.xlu0 %v2018
    %v2020 = vpop.xlane.xlu0 %2019
    %v2021 = vsub.f32 %v2020, %v661
    %v2022 = vmul.f32 %v2021, %v679
    %v2023 = vmul.f32 %v2022, %v684
    %v2024 = vpack.c.bf16 %v1851, %v1851
    %2026 = vrot.lane.b32.xlu0 %v2024, 32
    %v2027 = vpop.permute.xlu0 %2026
    %v2029 = vsel %vm699, %v2027, 0
    %2031 = vmatprep.subr.bf16.mxu0 0
    %2032 = vmatpush1.bf16.msra.mxu0 %v695
    %2033 = vmatprep.subr.bf16.mxu0 0
    %2034 = vmatpush1.bf16.msra.mxu0 %v696
    %2035 = vmatprep.subr.bf16.mxu0 0
    %2036 = vmatpush1.bf16.msra.mxu0 0
    %2037 = vmatprep.subr.bf16.mxu0 0
    %2038 = vmatpush1.bf16.msra.mxu0 0
    %2039 = vmatprep.subr.bf16.mxu0 0
    %2040 = vmatpush1.bf16.msra.mxu0 0
    %2041 = vmatprep.subr.bf16.mxu0 0
    %2042 = vmatpush1.bf16.msra.mxu0 0
    %2043 = vmatprep.subr.bf16.mxu0 0
    %2044 = vmatpush1.bf16.msra.mxu0 0
    %2045 = vmatprep.subr.bf16.mxu0 0
    %2046 = vmatpush1.bf16.msra.mxu0 0
    %2047 = vmatprep.subr.bf16.mxu0 0
    %2048 = vmatpush1.bf16.msra.mxu0 0
    %2049 = vmatprep.subr.bf16.mxu0 0
    %2050 = vmatpush1.bf16.msra.mxu0 0
    %2051 = vmatprep.subr.bf16.mxu0 0
    %2052 = vmatpush1.bf16.msra.mxu0 0
    %2053 = vmatprep.subr.bf16.mxu0 0
    %2054 = vmatpush1.bf16.msra.mxu0 0
    %2055 = vmatprep.subr.bf16.mxu0 0
    %2056 = vmatpush1.bf16.msra.mxu0 0
    %2057 = vmatprep.subr.bf16.mxu0 0
    %2058 = vmatpush1.bf16.msra.mxu0 0
    %2059 = vmatprep.subr.bf16.mxu0 0
    %2060 = vmatpush1.bf16.msra.mxu0 0
    %2061 = vmatprep.subr.bf16.mxu0 0
    %2062 = vmatpush1.bf16.msra.mxu0 0
    %2063 = vmatprep.mubr.bf16.mxu0 0
    %2064 = vmatmul.mubr.bf16.gmra.mrb[0].mxu0 %v2029
    %v2065 = vpop.f32.mrb[0].mxu0
    %v2066 = vadd.f32 0.0, %v2065
    %v2067 = vpop.f32.mrb[0].mxu0
    %v2068 = vpop.f32.mrb[0].mxu0
    %v2069 = vpop.f32.mrb[0].mxu0
    %2070 = vdwg.mxu0
    %v2071 = vadd.f32 %v2023, %v2066
    %v2072 = vadd.f32 %v2071, %v747
    %v2073 = vxor.u32 %v2072, 2147483648
    %v2074 = vmul.f32 %v2073, 1.442695
    %v2075 = vpow.pop %v2074
    %v2076 = vadd.f32 %v2075, 1.0
    %v2077 = vrcp.pop %v2076
    %v2078 = vmul.f32 1.0, %v2077
    %v2079 = vmul.f32 %v2078, 2.0
    %v2080 = vsub.f32 %v2079, 1.0
    %v2081 = vmul.f32 %v2078, %v1845
    %2083 = vrot.lane.b32.xlu0 %v2080, 64
    %v2084 = vpop.permute.xlu0 %2083
    %v2086 = vmul.f32 %v2078, %v2084
    %2088 = vrot.lane.b32.xlu0 %v2086, 32
    %v2089 = vpop.permute.xlu0 %2088
    %v2091 = vadd.f32 %v2081, %v2089
    %v2092 = vtanh.pop %v2091
    %2094 = vrot.lane.b32.xlu0 %v2092, 64
    %v2095 = vpop.permute.xlu0 %2094
    %v2097 = vmul.f32 %v2078, %v2095
    %v2098 = vpack.c.bf16 %v2091, %v2091
    %2100 = vrot.lane.b32.xlu0 %v2098, 96
    %v2101 = vpop.permute.xlu0 %2100
    %v2103 = vsel %vm699, %v2101, 0
    %2105 = vmatprep.subr.bf16.mxu0 0
    %2106 = vmatpush1.bf16.msra.mxu0 %v794
    %2107 = vmatprep.subr.bf16.mxu0 0
    %2108 = vmatpush1.bf16.msra.mxu0 %v795
    %2109 = vmatprep.subr.bf16.mxu0 0
    %2110 = vmatpush1.bf16.msra.mxu0 0
    %2111 = vmatprep.subr.bf16.mxu0 0
    %2112 = vmatpush1.bf16.msra.mxu0 0
    %2113 = vmatprep.subr.bf16.mxu0 0
    %2114 = vmatpush1.bf16.msra.mxu0 0
    %2115 = vmatprep.subr.bf16.mxu0 0
    %2116 = vmatpush1.bf16.msra.mxu0 0
    %2117 = vmatprep.subr.bf16.mxu0 0
    %2118 = vmatpush1.bf16.msra.mxu0 0
    %2119 = vmatprep.subr.bf16.mxu0 0
    %2120 = vmatpush1.bf16.msra.mxu0 0
    %2121 = vmatprep.subr.bf16.mxu0 0
    %2122 = vmatpush1.bf16.msra.mxu0 0
    %2123 = vmatprep.subr.bf16.mxu0 0
    %2124 = vmatpush1.bf16.msra.mxu0 0
    %2125 = vmatprep.subr.bf16.mxu0 0
    %2126 = vmatpush1.bf16.msra.mxu0 0
    %2127 = vmatprep.subr.bf16.mxu0 0
    %2128 = vmatpush1.bf16.msra.mxu0 0
    %2129 = vmatprep.subr.bf16.mxu0 0
    %2130 = vmatpush1.bf16.msra.mxu0 0
    %2131 = vmatprep.subr.bf16.mxu0 0
    %2132 = vmatpush1.bf16.msra.mxu0 0
    %2133 = vmatprep.subr.bf16.mxu0 0
    %2134 = vmatpush1.bf16.msra.mxu0 0
    %2135 = vmatprep.subr.bf16.mxu0 0
    %2136 = vmatpush1.bf16.msra.mxu0 0
    %2137 = vmatprep.mubr.bf16.mxu0 0
    %2138 = vmatmul.mubr.bf16.gmra.mrb[0].mxu0 %v2103
    %v2139 = vpop.f32.mrb[0].mxu0
    %v2140 = vadd.f32 %v782, %v2139
    %v2141 = vpop.f32.mrb[0].mxu0
    %v2142 = vpop.f32.mrb[0].mxu0
    %v2143 = vpop.f32.mrb[0].mxu0
    %2144 = vdwg.mxu0
    %v2145 = vmax.f32 %v2140, 0.0
    %v2146 = vpack.c.bf16 %v2145, %v2145
    %v2148 = vsel %vm699, %v2146, 0
    %2150 = vmatprep.subr.bf16.mxu0 0
    %2151 = vmatpush1.bf16.msra.mxu0 %v848
    %2152 = vmatprep.subr.bf16.mxu0 0
    %2153 = vmatpush1.bf16.msra.mxu0 %v850
    %2154 = vmatprep.subr.bf16.mxu0 0
    %2155 = vmatpush1.bf16.msra.mxu0 0
    %2156 = vmatprep.subr.bf16.mxu0 0
    %2157 = vmatpush1.bf16.msra.mxu0 0
    %2158 = vmatprep.subr.bf16.mxu0 0
    %2159 = vmatpush1.bf16.msra.mxu0 0
    %2160 = vmatprep.subr.bf16.mxu0 0
    %2161 = vmatpush1.bf16.msra.mxu0 0
    %2162 = vmatprep.subr.bf16.mxu0 0
    %2163 = vmatpush1.bf16.msra.mxu0 0
    %2164 = vmatprep.subr.bf16.mxu0 0
    %2165 = vmatpush1.bf16.msra.mxu0 0
    %2166 = vmatprep.subr.bf16.mxu0 0
    %2167 = vmatpush1.bf16.msra.mxu0 0
    %2168 = vmatprep.subr.bf16.mxu0 0
    %2169 = vmatpush1.bf16.msra.mxu0 0
    %2170 = vmatprep.subr.bf16.mxu0 0
    %2171 = vmatpush1.bf16.msra.mxu0 0
    %2172 = vmatprep.subr.bf16.mxu0 0
    %2173 = vmatpush1.bf16.msra.mxu0 0
    %2174 = vmatprep.subr.bf16.mxu0 0
    %2175 = vmatpush1.bf16.msra.mxu0 0
    %2176 = vmatprep.subr.bf16.mxu0 0
    %2177 = vmatpush1.bf16.msra.mxu0 0
    %2178 = vmatprep.subr.bf16.mxu0 0
    %2179 = vmatpush1.bf16.msra.mxu0 0
    %2180 = vmatprep.subr.bf16.mxu0 0
    %2181 = vmatpush1.bf16.msra.mxu0 0
    %2182 = vmatprep.mubr.bf16.mxu0 0
    %2183 = vmatmul.mubr.bf16.gmra.mrb[0].mxu0 %v2148
    %v2184 = vpop.f32.mrb[0].mxu0
    %v2185 = vadd.f32 %v846, %v2184
    %v2186 = vpop.f32.mrb[0].mxu0
    %v2187 = vpop.f32.mrb[0].mxu0
    %v2188 = vpop.f32.mrb[0].mxu0
    %2189 = vdwg.mxu0
    %v2190 = vmax.f32 %v2185, 0.0
    %v2191 = vand.u32 2147483647, %v2185
    %v2192 = vsub.f32 0.0, %v2191
    %v2193 = vmul.f32 %v2192, 1.442695
    %v2194 = vpow.pop %v2193
    %v2195 = vadd.f32 %v2194, 1.0
    %v2196 = vlog2.pop %v2195
    %v2197 = vmul.f32 %v2196, 0.6931472
    %v2198 = vmul.f32 -0.5, %v2194
    %v2199 = vadd.f32 %v2198, 1.0
    %v2200 = vmul.f32 %v2199, %v2194
    %v2201 = vand.u32 2147483647, %v2194
    %vm2202 = vcmp.lt.f32.partialorder %v2201, 0.0004427343
    %v2203 = vsel %vm2202, %v2200, %v2197
    %v2204 = vadd.f32 %v2190, %v2203
    %2206 = vset.pattern.permute.xlu0 0
    %2207 = vperm.xlu0 %2206, %v2204
    %v2208 = vpop.permute.xlu0 %2207
    %v2210 = vmul.f32 %v2208, %v2017
    %v2211 = vsub.f32 %v1975, %v2210
    %2212 = vset.pattern.permute.xlu0 1
    %2213 = vperm.xlu0 %2212, %v2204
    %v2214 = vpop.permute.xlu0 %2213
    %v2216 = vsub.f32 %v2211, %v2214
    %v2217 = vmax.f32 %v2216, 0.0
    %v2218 = vsub.f32 0.0, %v2211
    %v2219 = vsub.f32 %v2218, %v2214
    %v2220 = vmax.f32 %v2219, 0.0
    %v2221 = vsub.f32 %v2217, %v2220
    %v2222 = vpack.c.bf16 %v2221, %v2221
    %2223 = vmatprep.subr.bf16.mxu0 0
    %2224 = vmatpush1.bf16.msra.mxu0 %v977
    %2225 = vmatprep.subr.bf16.mxu0 0
    %2226 = vmatpush1.bf16.msra.mxu0 %v978
    %2227 = vmatprep.subr.bf16.mxu0 0
    %2228 = vmatpush1.bf16.msra.mxu0 %v979
    %2229 = vmatprep.subr.bf16.mxu0 0
    %2230 = vmatpush1.bf16.msra.mxu0 %v980
    %2231 = vmatprep.subr.bf16.mxu0 0
    %2232 = vmatpush1.bf16.msra.mxu0 %v981
    %2233 = vmatprep.subr.bf16.mxu0 0
    %2234 = vmatpush1.bf16.msra.mxu0 %v982
    %2235 = vmatprep.subr.bf16.mxu0 0
    %2236 = vmatpush1.bf16.msra.mxu0 %v983
    %2237 = vmatprep.subr.bf16.mxu0 0
    %2238 = vmatpush1.bf16.msra.mxu0 %v984
    %2239 = vmatprep.subr.bf16.mxu0 0
    %2240 = vmatpush1.bf16.msra.mxu0 0
    %2241 = vmatprep.subr.bf16.mxu0 0
    %2242 = vmatpush1.bf16.msra.mxu0 0
    %2243 = vmatprep.subr.bf16.mxu0 0
    %2244 = vmatpush1.bf16.msra.mxu0 0
    %2245 = vmatprep.subr.bf16.mxu0 0
    %2246 = vmatpush1.bf16.msra.mxu0 0
    %2247 = vmatprep.subr.bf16.mxu0 0
    %2248 = vmatpush1.bf16.msra.mxu0 0
    %2249 = vmatprep.subr.bf16.mxu0 0
    %2250 = vmatpush1.bf16.msra.mxu0 0
    %2251 = vmatprep.subr.bf16.mxu0 0
    %2252 = vmatpush1.bf16.msra.mxu0 0
    %2253 = vmatprep.subr.bf16.mxu0 0
    %2254 = vmatpush1.bf16.msra.mxu0 0
    %2255 = vmatprep.mubr.bf16.mxu0 0
    %2256 = vmatmul.mubr.bf16.gmra.mrb[0].mxu0 %v2222
    %v2257 = vpop.f32.mrb[0].mxu0
    %v2258 = vadd.f32 0.0, %v2257
    %v2259 = vpop.f32.mrb[0].mxu0
    %v2260 = vpop.f32.mrb[0].mxu0
    %v2261 = vpop.f32.mrb[0].mxu0
    %2262 = vdwg.mxu0
    %v2263 = vsub.f32 %v2258, %v648
    %v2264 = vand.u32 2147483647, %v2263
    %2265 = vadd.xlane.f32.xlu0 %v2264
    %v2266 = vpop.xlane.xlu0 %2265
    %v2267 = vsub.f32 %v2266, %v661
    %v2268 = vmul.f32 %v2267, %v679
    %v2269 = vmul.f32 %v2268, %v684
    %v2270 = vpack.c.bf16 %v2097, %v2097
    %2272 = vrot.lane.b32.xlu0 %v2270, 32
    %v2273 = vpop.permute.xlu0 %2272
    %v2275 = vsel %vm699, %v2273, 0
    %2277 = vmatprep.subr.bf16.mxu0 0
    %2278 = vmatpush1.bf16.msra.mxu0 %v695
    %2279 = vmatprep.subr.bf16.mxu0 0
    %2280 = vmatpush1.bf16.msra.mxu0 %v696
    %2281 = vmatprep.subr.bf16.mxu0 0
    %2282 = vmatpush1.bf16.msra.mxu0 0
    %2283 = vmatprep.subr.bf16.mxu0 0
    %2284 = vmatpush1.bf16.msra.mxu0 0
    %2285 = vmatprep.subr.bf16.mxu0 0
    %2286 = vmatpush1.bf16.msra.mxu0 0
    %2287 = vmatprep.subr.bf16.mxu0 0
    %2288 = vmatpush1.bf16.msra.mxu0 0
    %2289 = vmatprep.subr.bf16.mxu0 0
    %2290 = vmatpush1.bf16.msra.mxu0 0
    %2291 = vmatprep.subr.bf16.mxu0 0
    %2292 = vmatpush1.bf16.msra.mxu0 0
    %2293 = vmatprep.subr.bf16.mxu0 0
    %2294 = vmatpush1.bf16.msra.mxu0 0
    %2295 = vmatprep.subr.bf16.mxu0 0
    %2296 = vmatpush1.bf16.msra.mxu0 0
    %2297 = vmatprep.subr.bf16.mxu0 0
    %2298 = vmatpush1.bf16.msra.mxu0 0
    %2299 = vmatprep.subr.bf16.mxu0 0
    %2300 = vmatpush1.bf16.msra.mxu0 0
    %2301 = vmatprep.subr.bf16.mxu0 0
    %2302 = vmatpush1.bf16.msra.mxu0 0
    %2303 = vmatprep.subr.bf16.mxu0 0
    %2304 = vmatpush1.bf16.msra.mxu0 0
    %2305 = vmatprep.subr.bf16.mxu0 0
    %2306 = vmatpush1.bf16.msra.mxu0 0
    %2307 = vmatprep.subr.bf16.mxu0 0
    %2308 = vmatpush1.bf16.msra.mxu0 0
    %2309 = vmatprep.mubr.bf16.mxu0 0
    %2310 = vmatmul.mubr.bf16.gmra.mrb[0].mxu0 %v2275
    %v2311 = vpop.f32.mrb[0].mxu0
    %v2312 = vadd.f32 0.0, %v2311
    %v2313 = vpop.f32.mrb[0].mxu0
    %v2314 = vpop.f32.mrb[0].mxu0
    %v2315 = vpop.f32.mrb[0].mxu0
    %2316 = vdwg.mxu0
    %v2317 = vadd.f32 %v2269, %v2312
    %v2318 = vadd.f32 %v2317, %v747
    %v2319 = vxor.u32 %v2318, 2147483648
    %v2320 = vmul.f32 %v2319, 1.442695
    %v2321 = vpow.pop %v2320
    %v2322 = vadd.f32 %v2321, 1.0
    %v2323 = vrcp.pop %v2322
    %v2324 = vmul.f32 1.0, %v2323
    %v2325 = vmul.f32 %v2324, 2.0
    %v2326 = vsub.f32 %v2325, 1.0
    %v2327 = vmul.f32 %v2324, %v2091
    %2329 = vrot.lane.b32.xlu0 %v2326, 64
    %v2330 = vpop.permute.xlu0 %2329
    %v2332 = vmul.f32 %v2324, %v2330
    %2334 = vrot.lane.b32.xlu0 %v2332, 32
    %v2335 = vpop.permute.xlu0 %2334
    %v2337 = vadd.f32 %v2327, %v2335
    %v2338 = vtanh.pop %v2337
    %2340 = vrot.lane.b32.xlu0 %v2338, 64
    %v2341 = vpop.permute.xlu0 %2340
    %v2343 = vmul.f32 %v2324, %v2341
    %v2344 = vpack.c.bf16 %v2337, %v2337
    %2346 = vrot.lane.b32.xlu0 %v2344, 96
    %v2347 = vpop.permute.xlu0 %2346
    %v2349 = vsel %vm699, %v2347, 0
    %2351 = vmatprep.subr.bf16.mxu0 0
    %2352 = vmatpush1.bf16.msra.mxu0 %v794
    %2353 = vmatprep.subr.bf16.mxu0 0
    %2354 = vmatpush1.bf16.msra.mxu0 %v795
    %2355 = vmatprep.subr.bf16.mxu0 0
    %2356 = vmatpush1.bf16.msra.mxu0 0
    %2357 = vmatprep.subr.bf16.mxu0 0
    %2358 = vmatpush1.bf16.msra.mxu0 0
    %2359 = vmatprep.subr.bf16.mxu0 0
    %2360 = vmatpush1.bf16.msra.mxu0 0
    %2361 = vmatprep.subr.bf16.mxu0 0
    %2362 = vmatpush1.bf16.msra.mxu0 0
    %2363 = vmatprep.subr.bf16.mxu0 0
    %2364 = vmatpush1.bf16.msra.mxu0 0
    %2365 = vmatprep.subr.bf16.mxu0 0
    %2366 = vmatpush1.bf16.msra.mxu0 0
    %2367 = vmatprep.subr.bf16.mxu0 0
    %2368 = vmatpush1.bf16.msra.mxu0 0
    %2369 = vmatprep.subr.bf16.mxu0 0
    %2370 = vmatpush1.bf16.msra.mxu0 0
    %2371 = vmatprep.subr.bf16.mxu0 0
    %2372 = vmatpush1.bf16.msra.mxu0 0
    %2373 = vmatprep.subr.bf16.mxu0 0
    %2374 = vmatpush1.bf16.msra.mxu0 0
    %2375 = vmatprep.subr.bf16.mxu0 0
    %2376 = vmatpush1.bf16.msra.mxu0 0
    %2377 = vmatprep.subr.bf16.mxu0 0
    %2378 = vmatpush1.bf16.msra.mxu0 0
    %2379 = vmatprep.subr.bf16.mxu0 0
    %2380 = vmatpush1.bf16.msra.mxu0 0
    %2381 = vmatprep.subr.bf16.mxu0 0
    %2382 = vmatpush1.bf16.msra.mxu0 0
    %2383 = vmatprep.mubr.bf16.mxu0 0
    %2384 = vmatmul.mubr.bf16.gmra.mrb[0].mxu0 %v2349
    %v2385 = vpop.f32.mrb[0].mxu0
    %v2386 = vadd.f32 %v782, %v2385
    %v2387 = vpop.f32.mrb[0].mxu0
    %v2388 = vpop.f32.mrb[0].mxu0
    %v2389 = vpop.f32.mrb[0].mxu0
    %2390 = vdwg.mxu0
    %v2391 = vmax.f32 %v2386, 0.0
    %v2392 = vpack.c.bf16 %v2391, %v2391
    %v2394 = vsel %vm699, %v2392, 0
    %2396 = vmatprep.subr.bf16.mxu0 0
    %2397 = vmatpush1.bf16.msra.mxu0 %v848
    %2398 = vmatprep.subr.bf16.mxu0 0
    %2399 = vmatpush1.bf16.msra.mxu0 %v850
    %2400 = vmatprep.subr.bf16.mxu0 0
    %2401 = vmatpush1.bf16.msra.mxu0 0
    %2402 = vmatprep.subr.bf16.mxu0 0
    %2403 = vmatpush1.bf16.msra.mxu0 0
    %2404 = vmatprep.subr.bf16.mxu0 0
    %2405 = vmatpush1.bf16.msra.mxu0 0
    %2406 = vmatprep.subr.bf16.mxu0 0
    %2407 = vmatpush1.bf16.msra.mxu0 0
    %2408 = vmatprep.subr.bf16.mxu0 0
    %2409 = vmatpush1.bf16.msra.mxu0 0
    %2410 = vmatprep.subr.bf16.mxu0 0
    %2411 = vmatpush1.bf16.msra.mxu0 0
    %2412 = vmatprep.subr.bf16.mxu0 0
    %2413 = vmatpush1.bf16.msra.mxu0 0
    %2414 = vmatprep.subr.bf16.mxu0 0
    %2415 = vmatpush1.bf16.msra.mxu0 0
    %2416 = vmatprep.subr.bf16.mxu0 0
    %2417 = vmatpush1.bf16.msra.mxu0 0
    %2418 = vmatprep.subr.bf16.mxu0 0
    %2419 = vmatpush1.bf16.msra.mxu0 0
    %2420 = vmatprep.subr.bf16.mxu0 0
    %2421 = vmatpush1.bf16.msra.mxu0 0
    %2422 = vmatprep.subr.bf16.mxu0 0
    %2423 = vmatpush1.bf16.msra.mxu0 0
    %2424 = vmatprep.subr.bf16.mxu0 0
    %2425 = vmatpush1.bf16.msra.mxu0 0
    %2426 = vmatprep.subr.bf16.mxu0 0
    %2427 = vmatpush1.bf16.msra.mxu0 0
    %2428 = vmatprep.mubr.bf16.mxu0 0
    %2429 = vmatmul.mubr.bf16.gmra.mrb[0].mxu0 %v2394
    %v2430 = vpop.f32.mrb[0].mxu0
    %v2431 = vadd.f32 %v846, %v2430
    %v2432 = vpop.f32.mrb[0].mxu0
    %v2433 = vpop.f32.mrb[0].mxu0
    %v2434 = vpop.f32.mrb[0].mxu0
    %2435 = vdwg.mxu0
    %v2436 = vmax.f32 %v2431, 0.0
    %v2437 = vand.u32 2147483647, %v2431
    %v2438 = vsub.f32 0.0, %v2437
    %v2439 = vmul.f32 %v2438, 1.442695
    %v2440 = vpow.pop %v2439
    %v2441 = vadd.f32 %v2440, 1.0
    %v2442 = vlog2.pop %v2441
    %v2443 = vmul.f32 %v2442, 0.6931472
    %v2444 = vmul.f32 -0.5, %v2440
    %v2445 = vadd.f32 %v2444, 1.0
    %v2446 = vmul.f32 %v2445, %v2440
    %v2447 = vand.u32 2147483647, %v2440
    %vm2448 = vcmp.lt.f32.partialorder %v2447, 0.0004427343
    %v2449 = vsel %vm2448, %v2446, %v2443
    %v2450 = vadd.f32 %v2436, %v2449
    %2452 = vset.pattern.permute.xlu0 0
    %2453 = vperm.xlu0 %2452, %v2450
    %v2454 = vpop.permute.xlu0 %2453
    %v2456 = vmul.f32 %v2454, %v2263
    %v2457 = vsub.f32 %v2221, %v2456
    %2458 = vset.pattern.permute.xlu0 1
    %2459 = vperm.xlu0 %2458, %v2450
    %v2460 = vpop.permute.xlu0 %2459
    %v2462 = vsub.f32 %v2457, %v2460
    %v2463 = vmax.f32 %v2462, 0.0
    %v2464 = vsub.f32 0.0, %v2457
    %v2465 = vsub.f32 %v2464, %v2460
    %v2466 = vmax.f32 %v2465, 0.0
    %v2467 = vsub.f32 %v2463, %v2466
    %v2468 = vpack.c.bf16 %v2467, %v2467
    %2469 = vmatprep.subr.bf16.mxu0 0
    %2470 = vmatpush1.bf16.msra.mxu0 %v977
    %2471 = vmatprep.subr.bf16.mxu0 0
    %2472 = vmatpush1.bf16.msra.mxu0 %v978
    %2473 = vmatprep.subr.bf16.mxu0 0
    %2474 = vmatpush1.bf16.msra.mxu0 %v979
    %2475 = vmatprep.subr.bf16.mxu0 0
    %2476 = vmatpush1.bf16.msra.mxu0 %v980
    %2477 = vmatprep.subr.bf16.mxu0 0
    %2478 = vmatpush1.bf16.msra.mxu0 %v981
    %2479 = vmatprep.subr.bf16.mxu0 0
    %2480 = vmatpush1.bf16.msra.mxu0 %v982
    %2481 = vmatprep.subr.bf16.mxu0 0
    %2482 = vmatpush1.bf16.msra.mxu0 %v983
    %2483 = vmatprep.subr.bf16.mxu0 0
    %2484 = vmatpush1.bf16.msra.mxu0 %v984
    %2485 = vmatprep.subr.bf16.mxu0 0
    %2486 = vmatpush1.bf16.msra.mxu0 0
    %2487 = vmatprep.subr.bf16.mxu0 0
    %2488 = vmatpush1.bf16.msra.mxu0 0
    %2489 = vmatprep.subr.bf16.mxu0 0
    %2490 = vmatpush1.bf16.msra.mxu0 0
    %2491 = vmatprep.subr.bf16.mxu0 0
    %2492 = vmatpush1.bf16.msra.mxu0 0
    %2493 = vmatprep.subr.bf16.mxu0 0
    %2494 = vmatpush1.bf16.msra.mxu0 0
    %2495 = vmatprep.subr.bf16.mxu0 0
    %2496 = vmatpush1.bf16.msra.mxu0 0
    %2497 = vmatprep.subr.bf16.mxu0 0
    %2498 = vmatpush1.bf16.msra.mxu0 0
    %2499 = vmatprep.subr.bf16.mxu0 0
    %2500 = vmatpush1.bf16.msra.mxu0 0
    %2501 = vmatprep.mubr.bf16.mxu0 0
    %2502 = vmatmul.mubr.bf16.gmra.mrb[0].mxu0 %v2468
    %v2503 = vpop.f32.mrb[0].mxu0
    %v2504 = vadd.f32 0.0, %v2503
    %v2505 = vpop.f32.mrb[0].mxu0
    %v2506 = vpop.f32.mrb[0].mxu0
    %v2507 = vpop.f32.mrb[0].mxu0
    %2508 = vdwg.mxu0
    %v2509 = vsub.f32 %v2504, %v648
    %v2510 = vand.u32 2147483647, %v2509
    %2511 = vadd.xlane.f32.xlu0 %v2510
    %v2512 = vpop.xlane.xlu0 %2511
    %v2513 = vsub.f32 %v2512, %v661
    %v2514 = vmul.f32 %v2513, %v679
    %v2515 = vmul.f32 %v2514, %v684
    %v2516 = vpack.c.bf16 %v2343, %v2343
    %2518 = vrot.lane.b32.xlu0 %v2516, 32
    %v2519 = vpop.permute.xlu0 %2518
    %v2521 = vsel %vm699, %v2519, 0
    %2523 = vmatprep.subr.bf16.mxu0 0
    %2524 = vmatpush1.bf16.msra.mxu0 %v695
    %2525 = vmatprep.subr.bf16.mxu0 0
    %2526 = vmatpush1.bf16.msra.mxu0 %v696
    %2527 = vmatprep.subr.bf16.mxu0 0
    %2528 = vmatpush1.bf16.msra.mxu0 0
    %2529 = vmatprep.subr.bf16.mxu0 0
    %2530 = vmatpush1.bf16.msra.mxu0 0
    %2531 = vmatprep.subr.bf16.mxu0 0
    %2532 = vmatpush1.bf16.msra.mxu0 0
    %2533 = vmatprep.subr.bf16.mxu0 0
    %2534 = vmatpush1.bf16.msra.mxu0 0
    %2535 = vmatprep.subr.bf16.mxu0 0
    %2536 = vmatpush1.bf16.msra.mxu0 0
    %2537 = vmatprep.subr.bf16.mxu0 0
    %2538 = vmatpush1.bf16.msra.mxu0 0
    %2539 = vmatprep.subr.bf16.mxu0 0
    %2540 = vmatpush1.bf16.msra.mxu0 0
    %2541 = vmatprep.subr.bf16.mxu0 0
    %2542 = vmatpush1.bf16.msra.mxu0 0
    %2543 = vmatprep.subr.bf16.mxu0 0
    %2544 = vmatpush1.bf16.msra.mxu0 0
    %2545 = vmatprep.subr.bf16.mxu0 0
    %2546 = vmatpush1.bf16.msra.mxu0 0
    %2547 = vmatprep.subr.bf16.mxu0 0
    %2548 = vmatpush1.bf16.msra.mxu0 0
    %2549 = vmatprep.subr.bf16.mxu0 0
    %2550 = vmatpush1.bf16.msra.mxu0 0
    %2551 = vmatprep.subr.bf16.mxu0 0
    %2552 = vmatpush1.bf16.msra.mxu0 0
    %2553 = vmatprep.subr.bf16.mxu0 0
    %2554 = vmatpush1.bf16.msra.mxu0 0
    %2555 = vmatprep.mubr.bf16.mxu0 0
    %2556 = vmatmul.mubr.bf16.gmra.mrb[0].mxu0 %v2521
    %v2557 = vpop.f32.mrb[0].mxu0
    %v2558 = vadd.f32 0.0, %v2557
    %v2559 = vpop.f32.mrb[0].mxu0
    %v2560 = vpop.f32.mrb[0].mxu0
    %v2561 = vpop.f32.mrb[0].mxu0
    %2562 = vdwg.mxu0
    %v2563 = vadd.f32 %v2515, %v2558
    %v2564 = vadd.f32 %v2563, %v747
    %v2565 = vxor.u32 %v2564, 2147483648
    %v2566 = vmul.f32 %v2565, 1.442695
    %v2567 = vpow.pop %v2566
    %v2568 = vadd.f32 %v2567, 1.0
    %v2569 = vrcp.pop %v2568
    %v2570 = vmul.f32 1.0, %v2569
    %v2571 = vmul.f32 %v2570, 2.0
    %v2572 = vsub.f32 %v2571, 1.0
    %v2573 = vmul.f32 %v2570, %v2337
    %2575 = vrot.lane.b32.xlu0 %v2572, 64
    %v2576 = vpop.permute.xlu0 %2575
    %v2578 = vmul.f32 %v2570, %v2576
    %2580 = vrot.lane.b32.xlu0 %v2578, 32
    %v2581 = vpop.permute.xlu0 %2580
    %v2583 = vadd.f32 %v2573, %v2581
    %v2584 = vpack.c.bf16 %v2583, %v2583
    %2586 = vrot.lane.b32.xlu0 %v2584, 96
    %v2587 = vpop.permute.xlu0 %2586
    %v2589 = vsel %vm699, %v2587, 0
    %2591 = vmatprep.subr.bf16.mxu0 0
    %2592 = vmatpush1.bf16.msra.mxu0 %v794
    %2593 = vmatprep.subr.bf16.mxu0 0
    %2594 = vmatpush1.bf16.msra.mxu0 %v795
    %2595 = vmatprep.subr.bf16.mxu0 0
    %2596 = vmatpush1.bf16.msra.mxu0 0
    %2597 = vmatprep.subr.bf16.mxu0 0
    %2598 = vmatpush1.bf16.msra.mxu0 0
    %2599 = vmatprep.subr.bf16.mxu0 0
    %2600 = vmatpush1.bf16.msra.mxu0 0
    %2601 = vmatprep.subr.bf16.mxu0 0
    %2602 = vmatpush1.bf16.msra.mxu0 0
    %2603 = vmatprep.subr.bf16.mxu0 0
    %2604 = vmatpush1.bf16.msra.mxu0 0
    %2605 = vmatprep.subr.bf16.mxu0 0
    %2606 = vmatpush1.bf16.msra.mxu0 0
    %2607 = vmatprep.subr.bf16.mxu0 0
    %2608 = vmatpush1.bf16.msra.mxu0 0
    %2609 = vmatprep.subr.bf16.mxu0 0
    %2610 = vmatpush1.bf16.msra.mxu0 0
    %2611 = vmatprep.subr.bf16.mxu0 0
    %2612 = vmatpush1.bf16.msra.mxu0 0
    %2613 = vmatprep.subr.bf16.mxu0 0
    %2614 = vmatpush1.bf16.msra.mxu0 0
    %2615 = vmatprep.subr.bf16.mxu0 0
    %2616 = vmatpush1.bf16.msra.mxu0 0
    %2617 = vmatprep.subr.bf16.mxu0 0
    %2618 = vmatpush1.bf16.msra.mxu0 0
    %2619 = vmatprep.subr.bf16.mxu0 0
    %2620 = vmatpush1.bf16.msra.mxu0 0
    %2621 = vmatprep.subr.bf16.mxu0 0
    %2622 = vmatpush1.bf16.msra.mxu0 0
    %2623 = vmatprep.mubr.bf16.mxu0 0
    %2624 = vmatmul.mubr.bf16.gmra.mrb[0].mxu0 %v2589
    %v2625 = vpop.f32.mrb[0].mxu0
    %v2626 = vadd.f32 %v782, %v2625
    %v2627 = vpop.f32.mrb[0].mxu0
    %v2628 = vpop.f32.mrb[0].mxu0
    %v2629 = vpop.f32.mrb[0].mxu0
    %2630 = vdwg.mxu0
    %v2631 = vmax.f32 %v2626, 0.0
    %v2632 = vpack.c.bf16 %v2631, %v2631
    %v2634 = vsel %vm699, %v2632, 0
    %2636 = vmatprep.subr.bf16.mxu0 0
    %2637 = vmatpush1.bf16.msra.mxu0 %v848
    %2638 = vmatprep.subr.bf16.mxu0 0
    %2639 = vmatpush1.bf16.msra.mxu0 %v850
    %2640 = vmatprep.subr.bf16.mxu0 0
    %2641 = vmatpush1.bf16.msra.mxu0 0
    %2642 = vmatprep.subr.bf16.mxu0 0
    %2643 = vmatpush1.bf16.msra.mxu0 0
    %2644 = vmatprep.subr.bf16.mxu0 0
    %2645 = vmatpush1.bf16.msra.mxu0 0
    %2646 = vmatprep.subr.bf16.mxu0 0
    %2647 = vmatpush1.bf16.msra.mxu0 0
    %2648 = vmatprep.subr.bf16.mxu0 0
    %2649 = vmatpush1.bf16.msra.mxu0 0
    %2650 = vmatprep.subr.bf16.mxu0 0
    %2651 = vmatpush1.bf16.msra.mxu0 0
    %2652 = vmatprep.subr.bf16.mxu0 0
    %2653 = vmatpush1.bf16.msra.mxu0 0
    %2654 = vmatprep.subr.bf16.mxu0 0
    %2655 = vmatpush1.bf16.msra.mxu0 0
    %2656 = vmatprep.subr.bf16.mxu0 0
    %2657 = vmatpush1.bf16.msra.mxu0 0
    %2658 = vmatprep.subr.bf16.mxu0 0
    %2659 = vmatpush1.bf16.msra.mxu0 0
    %2660 = vmatprep.subr.bf16.mxu0 0
    %2661 = vmatpush1.bf16.msra.mxu0 0
    %2662 = vmatprep.subr.bf16.mxu0 0
    %2663 = vmatpush1.bf16.msra.mxu0 0
    %2664 = vmatprep.subr.bf16.mxu0 0
    %2665 = vmatpush1.bf16.msra.mxu0 0
    %2666 = vmatprep.subr.bf16.mxu0 0
    %2667 = vmatpush1.bf16.msra.mxu0 0
    %2668 = vmatprep.mubr.bf16.mxu0 0
    %2669 = vmatmul.mubr.bf16.gmra.mrb[0].mxu0 %v2634
    %v2670 = vpop.f32.mrb[0].mxu0
    %v2671 = vadd.f32 %v846, %v2670
    %v2672 = vpop.f32.mrb[0].mxu0
    %v2673 = vpop.f32.mrb[0].mxu0
    %v2674 = vpop.f32.mrb[0].mxu0
    %2675 = vdwg.mxu0
    %v2676 = vmax.f32 %v2671, 0.0
    %v2677 = vand.u32 2147483647, %v2671
    %v2678 = vsub.f32 0.0, %v2677
    %v2679 = vmul.f32 %v2678, 1.442695
    %v2680 = vpow.pop %v2679
    %v2681 = vadd.f32 %v2680, 1.0
    %v2682 = vlog2.pop %v2681
    %v2683 = vmul.f32 %v2682, 0.6931472
    %v2684 = vmul.f32 -0.5, %v2680
    %v2685 = vadd.f32 %v2684, 1.0
    %v2686 = vmul.f32 %v2685, %v2680
    %v2687 = vand.u32 2147483647, %v2680
    %vm2688 = vcmp.lt.f32.partialorder %v2687, 0.0004427343
    %v2689 = vsel %vm2688, %v2686, %v2683
    %v2690 = vadd.f32 %v2676, %v2689
    %2692 = vset.pattern.permute.xlu0 0
    %2693 = vperm.xlu0 %2692, %v2690
    %v2694 = vpop.permute.xlu0 %2693
    %v2696 = vmul.f32 %v2694, %v2509
    %v2697 = vsub.f32 %v2467, %v2696
    %2698 = vset.pattern.permute.xlu0 1
    %2699 = vperm.xlu0 %2698, %v2690
    %v2700 = vpop.permute.xlu0 %2699
    %v2702 = vsub.f32 %v2697, %v2700
    %v2703 = vmax.f32 %v2702, 0.0
    %v2704 = vsub.f32 0.0, %v2697
    %v2705 = vsub.f32 %v2704, %v2700
    %v2706 = vmax.f32 %v2705, 0.0
    %v2707 = vsub.f32 %v2703, %v2706
    %2708 = vst [vmem:[#allocation10] sm:$0xff] %v2707
    %2709 = vrot.lane.b32.xlu0 %v1220, 1
    %v2710 = vpop.permute.xlu0 %2709
    %2712 = vrot.lane.b32.xlu0 %v1466, 2
    %v2713 = vpop.permute.xlu0 %2712
    %2715 = vrot.lane.b32.xlu0 %v1712, 3
    %v2716 = vpop.permute.xlu0 %2715
    %2718 = vrot.lane.b32.xlu0 %v1958, 4
    %v2719 = vpop.permute.xlu0 %2718
    %2721 = vrot.lane.b32.xlu0 %v2204, 5
    %v2722 = vpop.permute.xlu0 %2721
    %2724 = vrot.lane.b32.xlu0 %v2450, 6
    %v2725 = vpop.permute.xlu0 %2724
    %2727 = vrot.lane.b32.xlu0 %v2690, 7
    %v2728 = vpop.permute.xlu0 %2727
    %vm2730 = vcmask 7168
    %v2731 = vsel %vm2730, %v910, %v2710
    %vm2732 = vcmask 15360
    %v2733 = vsel %vm2732, %v2731, %v2713
    %vm2734 = vcmask 23552
    %v2735 = vsel %vm2734, %v2733, %v2716
    %vm2736 = vcmask 31744
    %v2737 = vsel %vm2736, %v2735, %v2719
    %vm2738 = vcmask 39936
    %v2739 = vsel %vm2738, %v2737, %v2722
    %vm2740 = vcmask 48128
    %v2741 = vsel %vm2740, %v2739, %v2725
    %vm2742 = vcmask 56320
    %v2743 = vsel %vm2742, %v2741, %v2728
    %vm2744 = vcmask 64512
    %2745 = vst.msk [vmem:[#allocation11] sm:$0xff] %vm2744, %v2743
    %2746 = vrot.lane.b32.xlu0 %v910, 127
    %v2747 = vpop.permute.xlu0 %2746
    %2749 = vrot.lane.b32.xlu0 %v1466, 1
    %v2750 = vpop.permute.xlu0 %2749
    %2752 = vrot.lane.b32.xlu0 %v1712, 2
    %v2753 = vpop.permute.xlu0 %2752
    %2755 = vrot.lane.b32.xlu0 %v1958, 3
    %v2756 = vpop.permute.xlu0 %2755
    %2758 = vrot.lane.b32.xlu0 %v2204, 4
    %v2759 = vpop.permute.xlu0 %2758
    %2761 = vrot.lane.b32.xlu0 %v2450, 5
    %v2762 = vpop.permute.xlu0 %2761
    %2764 = vrot.lane.b32.xlu0 %v2690, 6
    %v2765 = vpop.permute.xlu0 %2764
    %v2767 = vsel %vm2730, %v2747, %v1220
    %v2768 = vsel %vm2732, %v2767, %v2750
    %v2769 = vsel %vm2734, %v2768, %v2753
    %v2770 = vsel %vm2736, %v2769, %v2756
    %v2771 = vsel %vm2738, %v2770, %v2759
    %v2772 = vsel %vm2740, %v2771, %v2762
    %v2773 = vsel %vm2742, %v2772, %v2765
    %2774 = vst.msk [vmem:[#allocation13] sm:$0xff] %vm2744, %v2773
    // Predicated region
    $region38: #{na_alista_forward.1} parent=1 // pred_check
      _
    $region39: #{na_alista_forward.1} parent=1 // pred_check_branch
      %2776 = sbr.rel (0) target = $region41
    $region40: #{na_alista_forward.1} parent=1 // pred_region
      %s2778 = ssub.s32 128, 128
      %2779 = vsyncadd [#allocation4], %s2778
      %s2781 = sshll.u32 [#allocation10], 4
      %s2782 = int_to_ptr.vmem [resolvable:$true] %s2781
      %2784 = dma.vmem_to_hbm [thread:$0]  %s2782, 128, %s5, [#allocation4]
    $region41: #{na_alista_forward.1} parent=1 // pred_fallthru
      _
    // Predicated region
    $region42: #{na_alista_forward.1} parent=1 // pred_check
      _
    $region43: #{na_alista_forward.1} parent=1 // pred_check_branch
      %2786 = sbr.rel (0) target = $region45
    $region44: #{na_alista_forward.1} parent=1 // pred_region
      %s2788 = ssub.s32 128, 128
      %2789 = vsyncadd [#allocation12], %s2788
      %s2791 = sshll.u32 [#allocation11], 4
      %s2792 = int_to_ptr.vmem [resolvable:$true] %s2791
      %2794 = dma.vmem_to_hbm [thread:$0]  %s2792, 128, %s6, [#allocation12]
    $region45: #{na_alista_forward.1} parent=1 // pred_fallthru
      _
    // Predicated region
    $region46: #{na_alista_forward.1} parent=1 // pred_check
      _
    $region47: #{na_alista_forward.1} parent=1 // pred_check_branch
      %2796 = sbr.rel (0) target = $region49
    $region48: #{na_alista_forward.1} parent=1 // pred_region
      %s2798 = ssub.s32 128, 128
      %2799 = vsyncadd [#allocation12], %s2798
      %s2801 = sshll.u32 [#allocation13], 4
      %s2802 = int_to_ptr.vmem [resolvable:$true] %s2801
      %2804 = dma.vmem_to_hbm [thread:$0]  %s2802, 128, %s7, [#allocation12]
    $region49: #{na_alista_forward.1} parent=1 // pred_fallthru
      _
    // Predicated region
    $region50: #{na_alista_forward.1} parent=1 // pred_check
      _
    $region51: #{na_alista_forward.1} parent=1 // pred_check_branch
      %2806 = sbr.rel (0) target = $region53
    $region52: #{na_alista_forward.1} parent=1 // pred_region
      %2807 = dma.done [#allocation4], 128
    $region53: #{na_alista_forward.1} parent=1 // pred_fallthru
      _
    // Predicated region
    $region54: #{na_alista_forward.1} parent=1 // pred_check
      _
    $region55: #{na_alista_forward.1} parent=1 // pred_check_branch
      %2809 = sbr.rel (0) target = $region57
    $region56: #{na_alista_forward.1} parent=1 // pred_region
      %2810 = dma.done [#allocation12], 128
    $region57: #{na_alista_forward.1} parent=1 // pred_fallthru
      _
    // Predicated region
    $region58: #{na_alista_forward.1} parent=1 // pred_check
      _
    $region59: #{na_alista_forward.1} parent=1 // pred_check_branch
      %2812 = sbr.rel (0) target = $region61
    $region60: #{na_alista_forward.1} parent=1 // pred_region
      %2813 = dma.done [#allocation12], 128
    $region61: #{na_alista_forward.1} parent=1 // pred_fallthru
      _
    %2814 = vsyncpa [#allocation3], 1
    %2815 = vsyncpa [#allocation6], 1
    %2816 = vsyncpa [#allocation9], 1
    %2817 = vsyncpa [#allocation4], 1
    %2818 = vsyncpa [#allocation12], 1

</llo_original>
